<compile_context>
chip_gen: v7x
topology: tpu7x:2x2x1
jax: 0.10.0
libtpu: 0.0.40
codegen_flags: <defaults>
</compile_context>

<pallas_src>
import jax
import jax.numpy as jnp
from jax.experimental import pallas as pl
from jax.experimental.pallas import tpu as pltpu

KS = 5     # kernel size
PAD = 2    # "same" padding
EPS = 1e-5


# ----------------------------- Pallas kernel ------------------------------- #

def _make_fused_kernel(H, W, CIN, C2, Hb):
    """Fused conv1(CIN->1) -> conv2(1->C2) -> conv3(C2->1) + residual."""
    Hp, Wp = H + 2 * PAD, W + 2 * PAD
    n_bands = H // Hb
    n_taps = KS * KS
    n_w1 = KS * KS * CIN
    B1_IDX, B3_IDX = n_w1, n_w1 + 1

    def kernel(xp_ref, sp_ref, w2_ref, b2_ref, w3_ref, o_ref,
               y1s_ref, y1b_ref, y2b_ref):
        # xp_ref : (1, CIN, Hp, Wp) padded NCHW input block          (VMEM)
        # sp_ref : (n_w1 + 2,) conv1 folded weights + bias1 + bias3  (SMEM)
        # w2_ref : (25, C2)  conv2 tap table (BN scale folded)       (VMEM)
        # b2_ref : (1, C2)   conv2 folded bias                       (VMEM)
        # w3_ref : (25, C2)  conv3 tap table (BN scale folded)       (VMEM)
        # o_ref  : (1, H, W) output block
        # y1s_ref: (H, W)        compact conv1 activation     (VMEM scratch)
        # y1b_ref: (Hp, Wp, C2)  padded, lane-broadcast y1     (VMEM scratch)
        # y2b_ref: (Hp, Wp, C2)  padded conv2 activation       (VMEM scratch)

        # ---- halo-only zeroing (unconditional: scratch is per-core) ----
        zrow = jnp.zeros((PAD, Wp, C2), jnp.float32)
        zcol = jnp.zeros((H, PAD, C2), jnp.float32)
        for ref in (y1b_ref, y2b_ref):
            ref[0:PAD, :, :] = zrow
            ref[PAD + H:Hp, :, :] = zrow
            ref[PAD:PAD + H, 0:PAD, :] = zcol
            ref[PAD:PAD + H, PAD + W:Wp, :] = zcol

        # ---- conv1: CIN -> 1, direct 5x5 VPU stencil, SMEM scalar weights ----
        slabs = [xp_ref[0, ci] for ci in range(CIN)]      # each (Hp, Wp), few vregs
        y1 = jnp.zeros((H, W), jnp.float32)
        for kh in range(KS):
            for kw in range(KS):
                for ci in range(CIN):
                    w = sp_ref[kh * (KS * CIN) + kw * CIN + ci]
                    y1 = y1 + w * slabs[ci][kh:kh + H, kw:kw + W]
        y1 = jnp.maximum(y1 + sp_ref[B1_IDX], 0.0)         # (H, W)
        y1s_ref[...] = y1                                  # kept for the residual

        # ---- broadcast y1 across the 128 channel lanes ONCE ----
        y1b_ref[PAD:PAD + H, PAD:PAD + W, :] = jnp.broadcast_to(
            y1[:, :, None], (H, W, C2))

        # ---- conv2: 1 -> C2, row-banded; taps are plain (Hb, W, C2) loads ----
        def conv2_band(b, carry):
            r0 = pl.multiple_of(b * Hb, Hb)
            acc = jnp.zeros((Hb, W, C2), jnp.float32)
            for t in range(n_taps):                        # unrolled inner taps
                kh, kw = divmod(t, KS)
                tap = y1b_ref[pl.ds(r0 + kh, Hb), kw:kw + W, :]
                acc = acc + tap * w2_ref[t]                # (Hb,W,C2) * (C2,)
            acc = jnp.maximum(acc + b2_ref[...], 0.0)
            y2b_ref[pl.ds(PAD + r0, Hb), PAD:PAD + W, :] = acc
            return carry

        jax.lax.fori_loop(0, n_bands, conv2_band, 0)

        # ---- conv3: C2 -> 1 (+ residual y1), row-banded ----
        def conv3_band(b, carry):
            r0 = pl.multiple_of(b * Hb, Hb)
            acc = jnp.zeros((Hb, W, C2), jnp.float32)
            for t in range(n_taps):
                kh, kw = divmod(t, KS)
                tap = y2b_ref[pl.ds(r0 + kh, Hb), kw:kw + W, :]
                acc = acc + tap * w3_ref[t]
            y3 = jnp.sum(acc, axis=2)                      # lane reduce -> (Hb, W)
            y3 = jnp.maximum(y3 + sp_ref[B3_IDX], 0.0)
            o_ref[0, pl.ds(r0, Hb), :] = y3 + y1s_ref[pl.ds(r0, Hb), :]
            return carry

        jax.lax.fori_loop(0, n_bands, conv3_band, 0)

    return kernel


def conv_filter_forward(x_nchw, params):
    N, CIN, H, W = x_nchw.shape
    C2 = params["w2"].shape[-1]
    Hp, Wp = H + 2 * PAD, W + 2 * PAD
    Hb = 8 if H % 8 == 0 else H                   # row-band height

    # Pad spatially once (cheap: 2-channel input), lane-dense layout (W in lanes).
    xp = jnp.pad(x_nchw.astype(jnp.float32),
                 ((0, 0), (0, 0), (PAD, PAD), (PAD, PAD)))   # (N, CIN, Hp, Wp)

    kernel = _make_fused_kernel(H, W, CIN, C2, Hb)

    out = pl.pallas_call(
        kernel,
        out_shape=jax.ShapeDtypeStruct((N, H, W), jnp.float32),
        grid_spec=pltpu.PrefetchScalarGridSpec(
            num_scalar_prefetch=0,
            grid=(N,),
            in_specs=[
                pl.BlockSpec((1, CIN, Hp, Wp), lambda n: (n, 0, 0, 0)),
                pl.BlockSpec(memory_space=pltpu.MemorySpace.SMEM),
                pl.BlockSpec((KS * KS, C2), lambda n: (0, 0)),
                pl.BlockSpec((1, C2), lambda n: (0, 0)),
                pl.BlockSpec((KS * KS, C2), lambda n: (0, 0)),
            ],
            out_specs=pl.BlockSpec((1, H, W), lambda n: (n, 0, 0)),
            scratch_shapes=[
                pltpu.VMEM((H, W), jnp.float32),         # compact y1 (residual)
                pltpu.VMEM((Hp, Wp, C2), jnp.float32),   # padded lane-broadcast y1
                pltpu.VMEM((Hp, Wp, C2), jnp.float32),   # padded conv2 activation
            ],
        ),
        compiler_params=pltpu.CompilerParams(dimension_semantics=("parallel",)),
    )(xp, params["sp"], params["w2"], params["b2"], params["w3"])

    # flatten: (N, H, W) -> (N, H*W)  (same ordering as NCHW flatten, C=1)
    return out.reshape(N, H * W)


# --------------------- parameter folding (JAX glue) ------------------------ #

def fold_params(raw):
    """Fold conv bias + eval-mode BatchNorm into weights / per-channel bias."""
    w1, cb1, g1, be1, m1, v1 = raw["l1"]
    w2, cb2, g2, be2, m2, v2 = raw["l2"]
    w3, cb3, g3, be3, m3, v3 = raw["l3"]

    s1 = g1 / jnp.sqrt(v1 + EPS)            # (1,)
    s2 = g2 / jnp.sqrt(v2 + EPS)            # (C2,)
    s3 = g3 / jnp.sqrt(v3 + EPS)            # (1,)
    b1 = (cb1 - m1) * s1 + be1              # (1,)
    b2 = (cb2 - m2) * s2 + be2              # (C2,)
    b3 = (cb3 - m3) * s3 + be3              # (1,)

    C2 = w2.shape[0]
    CIN = w1.shape[1]

    # conv1 (1,CIN,5,5): fold BN scale, flatten as [kh*KS*CIN + kw*CIN + ci]
    w1f = (w1 * s1[:, None, None, None])[0]                     # (CIN,5,5)
    w1f = jnp.transpose(w1f, (1, 2, 0)).reshape(-1)             # (25*CIN,)
    sp = jnp.concatenate([w1f, b1, b3]).astype(jnp.float32)     # SMEM vector

    # conv2 (C2,1,5,5): fold BN scale, layout (tap, cout)
    w2f = (w2 * s2[:, None, None, None])[:, 0]                  # (C2,5,5)
    w2f = jnp.transpose(w2f, (1, 2, 0)).reshape(KS * KS, C2)

    # conv3 (1,C2,5,5): fold BN scale, layout (tap, cin)
    w3f = (w3 * s3[:, None, None, None])[0]                     # (C2,5,5)
    w3f = jnp.transpose(w3f, (1, 2, 0)).reshape(KS * KS, C2)

    return {"sp": sp,
            "w2": w2f.astype(jnp.float32),
            "b2": b2.reshape(1, C2).astype(jnp.float32),
            "w3": w3f.astype(jnp.float32)}


# --------------------------- pure-JAX reference ----------------------------- #

def _layer_ref(x_nchw, w, b, gamma, beta, mean, var):
    y = jax.lax.conv_general_dilated(
        x_nchw, w, window_strides=(1, 1), padding=((PAD, PAD), (PAD, PAD)),
        dimension_numbers=("NCHW", "OIHW", "NCHW"))
    y = y + b[None, :, None, None]
    y = (y - mean[None, :, None, None]) / jnp.sqrt(var + EPS)[None, :, None, None]
    y = y * gamma[None, :, None, None] + beta[None, :, None, None]
    return jnp.maximum(y, 0.0)


def conv_filter_ref(x, raw):
    x1 = _layer_ref(x, *raw["l1"])
    x2 = _layer_ref(x1, *raw["l2"])
    x3 = _layer_ref(x2, *raw["l3"])
    out = x3 + x1
    return out.reshape(out.shape[0], -1)


# --------------------------------- main ------------------------------------- #

def make_layer_params(key, cin, cout):
    kw_, kb, kg, kbe, km, kv = jax.random.split(key, 6)
    w = 0.1 * jax.random.normal(kw_, (cout, cin, KS, KS), jnp.float32)
    b = 0.1 * jax.random.normal(kb, (cout,), jnp.float32)
    gamma = 1.0 + 0.1 * jax.random.normal(kg, (cout,), jnp.float32)
    beta = 0.1 * jax.random.normal(kbe, (cout,), jnp.float32)
    mean = 0.1 * jax.random.normal(km, (cout,), jnp.float32)
    var = 1.0 + 0.1 * jax.random.uniform(kv, (cout,), jnp.float32)
    return (w, b, gamma, beta, mean, var)


if __name__ == "__main__":
    key = jax.random.PRNGKey(0)
    kx, k1, k2, k3 = jax.random.split(key, 4)

    N, H, W = 2, 16, 16
    C2 = 128
    x = jax.random.normal(kx, (N, 2, H, W), jnp.float32)   # NCHW, 2 input channels

    raw = {
        "l1": make_layer_params(k1, 2, 1),
        "l2": make_layer_params(k2, 1, C2),
        "l3": make_layer_params(k3, C2, 1),
    }
    params = fold_params(raw)

    out = jax.jit(conv_filter_forward)(x, params)
    out = jax.block_until_ready(out)

    ref = conv_filter_ref(x, raw)
    assert out.shape == (N, H * W), out.shape
    if not jnp.allclose(out, ref, rtol=1e-3, atol=1e-4):
        max_err = jnp.max(jnp.abs(out - ref))
        raise AssertionError(f"mismatch vs reference, max abs err = {max_err}")

    print("KERNEL_OK")
</pallas_src>

<mosaic_0001>
module attributes {stable_mosaic.version = 11 : i64} {
  func.func @kernel(%arg0: i32, %arg1: memref<1x2x20x20xf32, #tpu.memory_space<vmem>>, %arg2: memref<52xf32, #tpu.memory_space<smem>>, %arg3: memref<25x128xf32, #tpu.memory_space<vmem>>, %arg4: memref<1x128xf32, #tpu.memory_space<vmem>>, %arg5: memref<25x128xf32, #tpu.memory_space<vmem>>, %arg6: memref<1x16x16xf32, #tpu.memory_space<vmem>>, %arg7: memref<16x16xf32, #tpu.memory_space<vmem>>, %arg8: memref<20x20x128xf32, #tpu.memory_space<vmem>>, %arg9: memref<20x20x128xf32, #tpu.memory_space<vmem>>) attributes {dimension_semantics = [#tpu.dimension_semantics<parallel>], iteration_bounds = array<i64: 2>, scalar_prefetch = 0 : i64, scratch_operands = 3 : i64, tpu.core_type = #tpu.core_type<tc>, window_params = [{transform_indices = @transform_0, window_bounds = array<i64: 1, 2, 20, 20>}, {transform_indices = @transform_1, window_bounds = array<i64: 52>}, {pipeline_mode = #tpu.pipeline_mode<synchronous>, transform_indices = @transform_2, window_bounds = array<i64: 25, 128>}, {pipeline_mode = #tpu.pipeline_mode<synchronous>, transform_indices = @transform_3, window_bounds = array<i64: 1, 128>}, {pipeline_mode = #tpu.pipeline_mode<synchronous>, transform_indices = @transform_4, window_bounds = array<i64: 25, 128>}, {transform_indices = @transform_5, window_bounds = array<i64: 1, 16, 16>}]} {
    %cst = arith.constant 0.000000e+00 : f32
    %0 = vector.broadcast %cst : f32 to vector<2x20x128xf32>
    %cst_0 = arith.constant 0.000000e+00 : f32
    %1 = vector.broadcast %cst_0 : f32 to vector<16x2x128xf32>
    %c0 = arith.constant 0 : index
    %c0_1 = arith.constant 0 : index
    %c0_2 = arith.constant 0 : index
    %2 = vector.load %arg8[%c0, %c0_1, %c0_2] : memref<20x20x128xf32, #tpu.memory_space<vmem>>, vector<2x20x128xf32>
    tpu.vector_store %arg8[%c0, %c0_1, %c0_2], %0 {strides = array<i32>} : memref<20x20x128xf32, #tpu.memory_space<vmem>>, vector<2x20x128xf32>,
    %c18 = arith.constant 18 : index
    %c0_3 = arith.constant 0 : index
    %c0_4 = arith.constant 0 : index
    %3 = vector.load %arg8[%c18, %c0_3, %c0_4] : memref<20x20x128xf32, #tpu.memory_space<vmem>>, vector<2x20x128xf32>
    tpu.vector_store %arg8[%c18, %c0_3, %c0_4], %0 {strides = array<i32>} : memref<20x20x128xf32, #tpu.memory_space<vmem>>, vector<2x20x128xf32>,
    %c2 = arith.constant 2 : index
    %c0_5 = arith.constant 0 : index
    %c0_6 = arith.constant 0 : index
    %4 = vector.load %arg8[%c2, %c0_5, %c0_6] : memref<20x20x128xf32, #tpu.memory_space<vmem>>, vector<16x2x128xf32>
    tpu.vector_store %arg8[%c2, %c0_5, %c0_6], %1 {strides = array<i32>} : memref<20x20x128xf32, #tpu.memory_space<vmem>>, vector<16x2x128xf32>,
    %c2_7 = arith.constant 2 : index
    %c18_8 = arith.constant 18 : index
    %c0_9 = arith.constant 0 : index
    %5 = vector.load %arg8[%c2_7, %c18_8, %c0_9] : memref<20x20x128xf32, #tpu.memory_space<vmem>>, vector<16x2x128xf32>
    tpu.vector_store %arg8[%c2_7, %c18_8, %c0_9], %1 {strides = array<i32>} : memref<20x20x128xf32, #tpu.memory_space<vmem>>, vector<16x2x128xf32>,
    %c0_10 = arith.constant 0 : index
    %c0_11 = arith.constant 0 : index
    %c0_12 = arith.constant 0 : index
    %6 = vector.load %arg9[%c0_10, %c0_11, %c0_12] : memref<20x20x128xf32, #tpu.memory_space<vmem>>, vector<2x20x128xf32>
    tpu.vector_store %arg9[%c0_10, %c0_11, %c0_12], %0 {strides = array<i32>} : memref<20x20x128xf32, #tpu.memory_space<vmem>>, vector<2x20x128xf32>,
    %c18_13 = arith.constant 18 : index
    %c0_14 = arith.constant 0 : index
    %c0_15 = arith.constant 0 : index
    %7 = vector.load %arg9[%c18_13, %c0_14, %c0_15] : memref<20x20x128xf32, #tpu.memory_space<vmem>>, vector<2x20x128xf32>
    tpu.vector_store %arg9[%c18_13, %c0_14, %c0_15], %0 {strides = array<i32>} : memref<20x20x128xf32, #tpu.memory_space<vmem>>, vector<2x20x128xf32>,
    %c2_16 = arith.constant 2 : index
    %c0_17 = arith.constant 0 : index
    %c0_18 = arith.constant 0 : index
    %8 = vector.load %arg9[%c2_16, %c0_17, %c0_18] : memref<20x20x128xf32, #tpu.memory_space<vmem>>, vector<16x2x128xf32>
    tpu.vector_store %arg9[%c2_16, %c0_17, %c0_18], %1 {strides = array<i32>} : memref<20x20x128xf32, #tpu.memory_space<vmem>>, vector<16x2x128xf32>,
    %c2_19 = arith.constant 2 : index
    %c18_20 = arith.constant 18 : index
    %c0_21 = arith.constant 0 : index
    %9 = vector.load %arg9[%c2_19, %c18_20, %c0_21] : memref<20x20x128xf32, #tpu.memory_space<vmem>>, vector<16x2x128xf32>
    tpu.vector_store %arg9[%c2_19, %c18_20, %c0_21], %1 {strides = array<i32>} : memref<20x20x128xf32, #tpu.memory_space<vmem>>, vector<16x2x128xf32>,
    %c0_22 = arith.constant 0 : index
    %c0_23 = arith.constant 0 : index
    %c0_24 = arith.constant 0 : index
    %c0_25 = arith.constant 0 : index
    %10 = vector.load %arg1[%c0_22, %c0_23, %c0_24, %c0_25] : memref<1x2x20x20xf32, #tpu.memory_space<vmem>>, vector<1x1x20x20xf32>
    %11 = vector.shape_cast %10 : vector<1x1x20x20xf32> to vector<20x20xf32>
    %c0_26 = arith.constant 0 : index
    %c1 = arith.constant 1 : index
    %c0_27 = arith.constant 0 : index
    %c0_28 = arith.constant 0 : index
    %12 = vector.load %arg1[%c0_26, %c1, %c0_27, %c0_28] : memref<1x2x20x20xf32, #tpu.memory_space<vmem>>, vector<1x1x20x20xf32>
    %13 = vector.shape_cast %12 : vector<1x1x20x20xf32> to vector<20x20xf32>
    %cst_29 = arith.constant 0.000000e+00 : f32
    %14 = vector.broadcast %cst_29 : f32 to vector<16x16xf32>
    %c0_30 = arith.constant 0 : index
    %15 = memref.load %arg2[%c0_30] : memref<52xf32, #tpu.memory_space<smem>>
    %16 = vector.extract_strided_slice %11 {offsets = [0, 0], sizes = [16, 16], strides = [1, 1]} : vector<20x20xf32> to vector<16x16xf32>
    %17 = vector.broadcast %15 : f32 to vector<16x16xf32>
    %18 = arith.mulf %17, %16 : vector<16x16xf32>
    %19 = arith.addf %14, %18 : vector<16x16xf32>
    %c1_31 = arith.constant 1 : index
    %20 = memref.load %arg2[%c1_31] : memref<52xf32, #tpu.memory_space<smem>>
    %21 = vector.extract_strided_slice %13 {offsets = [0, 0], sizes = [16, 16], strides = [1, 1]} : vector<20x20xf32> to vector<16x16xf32>
    %22 = vector.broadcast %20 : f32 to vector<16x16xf32>
    %23 = arith.mulf %22, %21 : vector<16x16xf32>
    %24 = arith.addf %19, %23 : vector<16x16xf32>
    %c2_32 = arith.constant 2 : index
    %25 = memref.load %arg2[%c2_32] : memref<52xf32, #tpu.memory_space<smem>>
    %26 = vector.extract_strided_slice %11 {offsets = [0, 1], sizes = [16, 16], strides = [1, 1]} : vector<20x20xf32> to vector<16x16xf32>
    %27 = vector.broadcast %25 : f32 to vector<16x16xf32>
    %28 = arith.mulf %27, %26 : vector<16x16xf32>
    %29 = arith.addf %24, %28 : vector<16x16xf32>
    %c3 = arith.constant 3 : index
    %30 = memref.load %arg2[%c3] : memref<52xf32, #tpu.memory_space<smem>>
    %31 = vector.extract_strided_slice %13 {offsets = [0, 1], sizes = [16, 16], strides = [1, 1]} : vector<20x20xf32> to vector<16x16xf32>
    %32 = vector.broadcast %30 : f32 to vector<16x16xf32>
    %33 = arith.mulf %32, %31 : vector<16x16xf32>
    %34 = arith.addf %29, %33 : vector<16x16xf32>
    %c4 = arith.constant 4 : index
    %35 = memref.load %arg2[%c4] : memref<52xf32, #tpu.memory_space<smem>>
    %36 = vector.extract_strided_slice %11 {offsets = [0, 2], sizes = [16, 16], strides = [1, 1]} : vector<20x20xf32> to vector<16x16xf32>
    %37 = vector.broadcast %35 : f32 to vector<16x16xf32>
    %38 = arith.mulf %37, %36 : vector<16x16xf32>
    %39 = arith.addf %34, %38 : vector<16x16xf32>
    %c5 = arith.constant 5 : index
    %40 = memref.load %arg2[%c5] : memref<52xf32, #tpu.memory_space<smem>>
    %41 = vector.extract_strided_slice %13 {offsets = [0, 2], sizes = [16, 16], strides = [1, 1]} : vector<20x20xf32> to vector<16x16xf32>
    %42 = vector.broadcast %40 : f32 to vector<16x16xf32>
    %43 = arith.mulf %42, %41 : vector<16x16xf32>
    %44 = arith.addf %39, %43 : vector<16x16xf32>
    %c6 = arith.constant 6 : index
    %45 = memref.load %arg2[%c6] : memref<52xf32, #tpu.memory_space<smem>>
    %46 = vector.extract_strided_slice %11 {offsets = [0, 3], sizes = [16, 16], strides = [1, 1]} : vector<20x20xf32> to vector<16x16xf32>
    %47 = vector.broadcast %45 : f32 to vector<16x16xf32>
    %48 = arith.mulf %47, %46 : vector<16x16xf32>
    %49 = arith.addf %44, %48 : vector<16x16xf32>
    %c7 = arith.constant 7 : index
    %50 = memref.load %arg2[%c7] : memref<52xf32, #tpu.memory_space<smem>>
    %51 = vector.extract_strided_slice %13 {offsets = [0, 3], sizes = [16, 16], strides = [1, 1]} : vector<20x20xf32> to vector<16x16xf32>
    %52 = vector.broadcast %50 : f32 to vector<16x16xf32>
    %53 = arith.mulf %52, %51 : vector<16x16xf32>
    %54 = arith.addf %49, %53 : vector<16x16xf32>
    %c8 = arith.constant 8 : index
    %55 = memref.load %arg2[%c8] : memref<52xf32, #tpu.memory_space<smem>>
    %56 = vector.extract_strided_slice %11 {offsets = [0, 4], sizes = [16, 16], strides = [1, 1]} : vector<20x20xf32> to vector<16x16xf32>
    %57 = vector.broadcast %55 : f32 to vector<16x16xf32>
    %58 = arith.mulf %57, %56 : vector<16x16xf32>
    %59 = arith.addf %54, %58 : vector<16x16xf32>
    %c9 = arith.constant 9 : index
    %60 = memref.load %arg2[%c9] : memref<52xf32, #tpu.memory_space<smem>>
    %61 = vector.extract_strided_slice %13 {offsets = [0, 4], sizes = [16, 16], strides = [1, 1]} : vector<20x20xf32> to vector<16x16xf32>
    %62 = vector.broadcast %60 : f32 to vector<16x16xf32>
    %63 = arith.mulf %62, %61 : vector<16x16xf32>
    %64 = arith.addf %59, %63 : vector<16x16xf32>
    %c10 = arith.constant 10 : index
    %65 = memref.load %arg2[%c10] : memref<52xf32, #tpu.memory_space<smem>>
    %66 = vector.extract_strided_slice %11 {offsets = [1, 0], sizes = [16, 16], strides = [1, 1]} : vector<20x20xf32> to vector<16x16xf32>
    %67 = vector.broadcast %65 : f32 to vector<16x16xf32>
    %68 = arith.mulf %67, %66 : vector<16x16xf32>
    %69 = arith.addf %64, %68 : vector<16x16xf32>
    %c11 = arith.constant 11 : index
    %70 = memref.load %arg2[%c11] : memref<52xf32, #tpu.memory_space<smem>>
    %71 = vector.extract_strided_slice %13 {offsets = [1, 0], sizes = [16, 16], strides = [1, 1]} : vector<20x20xf32> to vector<16x16xf32>
    %72 = vector.broadcast %70 : f32 to vector<16x16xf32>
    %73 = arith.mulf %72, %71 : vector<16x16xf32>
    %74 = arith.addf %69, %73 : vector<16x16xf32>
    %c12 = arith.constant 12 : index
    %75 = memref.load %arg2[%c12] : memref<52xf32, #tpu.memory_space<smem>>
    %76 = vector.extract_strided_slice %11 {offsets = [1, 1], sizes = [16, 16], strides = [1, 1]} : vector<20x20xf32> to vector<16x16xf32>
    %77 = vector.broadcast %75 : f32 to vector<16x16xf32>
    %78 = arith.mulf %77, %76 : vector<16x16xf32>
    %79 = arith.addf %74, %78 : vector<16x16xf32>
    %c13 = arith.constant 13 : index
    %80 = memref.load %arg2[%c13] : memref<52xf32, #tpu.memory_space<smem>>
    %81 = vector.extract_strided_slice %13 {offsets = [1, 1], sizes = [16, 16], strides = [1, 1]} : vector<20x20xf32> to vector<16x16xf32>
    %82 = vector.broadcast %80 : f32 to vector<16x16xf32>
    %83 = arith.mulf %82, %81 : vector<16x16xf32>
    %84 = arith.addf %79, %83 : vector<16x16xf32>
    %c14 = arith.constant 14 : index
    %85 = memref.load %arg2[%c14] : memref<52xf32, #tpu.memory_space<smem>>
    %86 = vector.extract_strided_slice %11 {offsets = [1, 2], sizes = [16, 16], strides = [1, 1]} : vector<20x20xf32> to vector<16x16xf32>
    %87 = vector.broadcast %85 : f32 to vector<16x16xf32>
    %88 = arith.mulf %87, %86 : vector<16x16xf32>
    %89 = arith.addf %84, %88 : vector<16x16xf32>
    %c15 = arith.constant 15 : index
    %90 = memref.load %arg2[%c15] : memref<52xf32, #tpu.memory_space<smem>>
    %91 = vector.extract_strided_slice %13 {offsets = [1, 2], sizes = [16, 16], strides = [1, 1]} : vector<20x20xf32> to vector<16x16xf32>
    %92 = vector.broadcast %90 : f32 to vector<16x16xf32>
    %93 = arith.mulf %92, %91 : vector<16x16xf32>
    %94 = arith.addf %89, %93 : vector<16x16xf32>
    %c16 = arith.constant 16 : index
    %95 = memref.load %arg2[%c16] : memref<52xf32, #tpu.memory_space<smem>>
    %96 = vector.extract_strided_slice %11 {offsets = [1, 3], sizes = [16, 16], strides = [1, 1]} : vector<20x20xf32> to vector<16x16xf32>
    %97 = vector.broadcast %95 : f32 to vector<16x16xf32>
    %98 = arith.mulf %97, %96 : vector<16x16xf32>
    %99 = arith.addf %94, %98 : vector<16x16xf32>
    %c17 = arith.constant 17 : index
    %100 = memref.load %arg2[%c17] : memref<52xf32, #tpu.memory_space<smem>>
    %101 = vector.extract_strided_slice %13 {offsets = [1, 3], sizes = [16, 16], strides = [1, 1]} : vector<20x20xf32> to vector<16x16xf32>
    %102 = vector.broadcast %100 : f32 to vector<16x16xf32>
    %103 = arith.mulf %102, %101 : vector<16x16xf32>
    %104 = arith.addf %99, %103 : vector<16x16xf32>
    %c18_33 = arith.constant 18 : index
    %105 = memref.load %arg2[%c18_33] : memref<52xf32, #tpu.memory_space<smem>>
    %106 = vector.extract_strided_slice %11 {offsets = [1, 4], sizes = [16, 16], strides = [1, 1]} : vector<20x20xf32> to vector<16x16xf32>
    %107 = vector.broadcast %105 : f32 to vector<16x16xf32>
    %108 = arith.mulf %107, %106 : vector<16x16xf32>
    %109 = arith.addf %104, %108 : vector<16x16xf32>
    %c19 = arith.constant 19 : index
    %110 = memref.load %arg2[%c19] : memref<52xf32, #tpu.memory_space<smem>>
    %111 = vector.extract_strided_slice %13 {offsets = [1, 4], sizes = [16, 16], strides = [1, 1]} : vector<20x20xf32> to vector<16x16xf32>
    %112 = vector.broadcast %110 : f32 to vector<16x16xf32>
    %113 = arith.mulf %112, %111 : vector<16x16xf32>
    %114 = arith.addf %109, %113 : vector<16x16xf32>
    %c20 = arith.constant 20 : index
    %115 = memref.load %arg2[%c20] : memref<52xf32, #tpu.memory_space<smem>>
    %116 = vector.extract_strided_slice %11 {offsets = [2, 0], sizes = [16, 16], strides = [1, 1]} : vector<20x20xf32> to vector<16x16xf32>
    %117 = vector.broadcast %115 : f32 to vector<16x16xf32>
    %118 = arith.mulf %117, %116 : vector<16x16xf32>
    %119 = arith.addf %114, %118 : vector<16x16xf32>
    %c21 = arith.constant 21 : index
    %120 = memref.load %arg2[%c21] : memref<52xf32, #tpu.memory_space<smem>>
    %121 = vector.extract_strided_slice %13 {offsets = [2, 0], sizes = [16, 16], strides = [1, 1]} : vector<20x20xf32> to vector<16x16xf32>
    %122 = vector.broadcast %120 : f32 to vector<16x16xf32>
    %123 = arith.mulf %122, %121 : vector<16x16xf32>
    %124 = arith.addf %119, %123 : vector<16x16xf32>
    %c22 = arith.constant 22 : index
    %125 = memref.load %arg2[%c22] : memref<52xf32, #tpu.memory_space<smem>>
    %126 = vector.extract_strided_slice %11 {offsets = [2, 1], sizes = [16, 16], strides = [1, 1]} : vector<20x20xf32> to vector<16x16xf32>
    %127 = vector.broadcast %125 : f32 to vector<16x16xf32>
    %128 = arith.mulf %127, %126 : vector<16x16xf32>
    %129 = arith.addf %124, %128 : vector<16x16xf32>
    %c23 = arith.constant 23 : index
    %130 = memref.load %arg2[%c23] : memref<52xf32, #tpu.memory_space<smem>>
    %131 = vector.extract_strided_slice %13 {offsets = [2, 1], sizes = [16, 16], strides = [1, 1]} : vector<20x20xf32> to vector<16x16xf32>
    %132 = vector.broadcast %130 : f32 to vector<16x16xf32>
    %133 = arith.mulf %132, %131 : vector<16x16xf32>
    %134 = arith.addf %129, %133 : vector<16x16xf32>
    %c24 = arith.constant 24 : index
    %135 = memref.load %arg2[%c24] : memref<52xf32, #tpu.memory_space<smem>>
    %136 = vector.extract_strided_slice %11 {offsets = [2, 2], sizes = [16, 16], strides = [1, 1]} : vector<20x20xf32> to vector<16x16xf32>
    %137 = vector.broadcast %135 : f32 to vector<16x16xf32>
    %138 = arith.mulf %137, %136 : vector<16x16xf32>
    %139 = arith.addf %134, %138 : vector<16x16xf32>
    %c25 = arith.constant 25 : index
    %140 = memref.load %arg2[%c25] : memref<52xf32, #tpu.memory_space<smem>>
    %141 = vector.extract_strided_slice %13 {offsets = [2, 2], sizes = [16, 16], strides = [1, 1]} : vector<20x20xf32> to vector<16x16xf32>
    %142 = vector.broadcast %140 : f32 to vector<16x16xf32>
    %143 = arith.mulf %142, %141 : vector<16x16xf32>
    %144 = arith.addf %139, %143 : vector<16x16xf32>
    %c26 = arith.constant 26 : index
    %145 = memref.load %arg2[%c26] : memref<52xf32, #tpu.memory_space<smem>>
    %146 = vector.extract_strided_slice %11 {offsets = [2, 3], sizes = [16, 16], strides = [1, 1]} : vector<20x20xf32> to vector<16x16xf32>
    %147 = vector.broadcast %145 : f32 to vector<16x16xf32>
    %148 = arith.mulf %147, %146 : vector<16x16xf32>
    %149 = arith.addf %144, %148 : vector<16x16xf32>
    %c27 = arith.constant 27 : index
    %150 = memref.load %arg2[%c27] : memref<52xf32, #tpu.memory_space<smem>>
    %151 = vector.extract_strided_slice %13 {offsets = [2, 3], sizes = [16, 16], strides = [1, 1]} : vector<20x20xf32> to vector<16x16xf32>
    %152 = vector.broadcast %150 : f32 to vector<16x16xf32>
    %153 = arith.mulf %152, %151 : vector<16x16xf32>
    %154 = arith.addf %149, %153 : vector<16x16xf32>
    %c28 = arith.constant 28 : index
    %155 = memref.load %arg2[%c28] : memref<52xf32, #tpu.memory_space<smem>>
    %156 = vector.extract_strided_slice %11 {offsets = [2, 4], sizes = [16, 16], strides = [1, 1]} : vector<20x20xf32> to vector<16x16xf32>
    %157 = vector.broadcast %155 : f32 to vector<16x16xf32>
    %158 = arith.mulf %157, %156 : vector<16x16xf32>
    %159 = arith.addf %154, %158 : vector<16x16xf32>
    %c29 = arith.constant 29 : index
    %160 = memref.load %arg2[%c29] : memref<52xf32, #tpu.memory_space<smem>>
    %161 = vector.extract_strided_slice %13 {offsets = [2, 4], sizes = [16, 16], strides = [1, 1]} : vector<20x20xf32> to vector<16x16xf32>
    %162 = vector.broadcast %160 : f32 to vector<16x16xf32>
    %163 = arith.mulf %162, %161 : vector<16x16xf32>
    %164 = arith.addf %159, %163 : vector<16x16xf32>
    %c30 = arith.constant 30 : index
    %165 = memref.load %arg2[%c30] : memref<52xf32, #tpu.memory_space<smem>>
    %166 = vector.extract_strided_slice %11 {offsets = [3, 0], sizes = [16, 16], strides = [1, 1]} : vector<20x20xf32> to vector<16x16xf32>
    %167 = vector.broadcast %165 : f32 to vector<16x16xf32>
    %168 = arith.mulf %167, %166 : vector<16x16xf32>
    %169 = arith.addf %164, %168 : vector<16x16xf32>
    %c31 = arith.constant 31 : index
    %170 = memref.load %arg2[%c31] : memref<52xf32, #tpu.memory_space<smem>>
    %171 = vector.extract_strided_slice %13 {offsets = [3, 0], sizes = [16, 16], strides = [1, 1]} : vector<20x20xf32> to vector<16x16xf32>
    %172 = vector.broadcast %170 : f32 to vector<16x16xf32>
    %173 = arith.mulf %172, %171 : vector<16x16xf32>
    %174 = arith.addf %169, %173 : vector<16x16xf32>
    %c32 = arith.constant 32 : index
    %175 = memref.load %arg2[%c32] : memref<52xf32, #tpu.memory_space<smem>>
    %176 = vector.extract_strided_slice %11 {offsets = [3, 1], sizes = [16, 16], strides = [1, 1]} : vector<20x20xf32> to vector<16x16xf32>
    %177 = vector.broadcast %175 : f32 to vector<16x16xf32>
    %178 = arith.mulf %177, %176 : vector<16x16xf32>
    %179 = arith.addf %174, %178 : vector<16x16xf32>
    %c33 = arith.constant 33 : index
    %180 = memref.load %arg2[%c33] : memref<52xf32, #tpu.memory_space<smem>>
    %181 = vector.extract_strided_slice %13 {offsets = [3, 1], sizes = [16, 16], strides = [1, 1]} : vector<20x20xf32> to vector<16x16xf32>
    %182 = vector.broadcast %180 : f32 to vector<16x16xf32>
    %183 = arith.mulf %182, %181 : vector<16x16xf32>
    %184 = arith.addf %179, %183 : vector<16x16xf32>
    %c34 = arith.constant 34 : index
    %185 = memref.load %arg2[%c34] : memref<52xf32, #tpu.memory_space<smem>>
    %186 = vector.extract_strided_slice %11 {offsets = [3, 2], sizes = [16, 16], strides = [1, 1]} : vector<20x20xf32> to vector<16x16xf32>
    %187 = vector.broadcast %185 : f32 to vector<16x16xf32>
    %188 = arith.mulf %187, %186 : vector<16x16xf32>
    %189 = arith.addf %184, %188 : vector<16x16xf32>
    %c35 = arith.constant 35 : index
    %190 = memref.load %arg2[%c35] : memref<52xf32, #tpu.memory_space<smem>>
    %191 = vector.extract_strided_slice %13 {offsets = [3, 2], sizes = [16, 16], strides = [1, 1]} : vector<20x20xf32> to vector<16x16xf32>
    %192 = vector.broadcast %190 : f32 to vector<16x16xf32>
    %193 = arith.mulf %192, %191 : vector<16x16xf32>
    %194 = arith.addf %189, %193 : vector<16x16xf32>
    %c36 = arith.constant 36 : index
    %195 = memref.load %arg2[%c36] : memref<52xf32, #tpu.memory_space<smem>>
    %196 = vector.extract_strided_slice %11 {offsets = [3, 3], sizes = [16, 16], strides = [1, 1]} : vector<20x20xf32> to vector<16x16xf32>
    %197 = vector.broadcast %195 : f32 to vector<16x16xf32>
    %198 = arith.mulf %197, %196 : vector<16x16xf32>
    %199 = arith.addf %194, %198 : vector<16x16xf32>
    %c37 = arith.constant 37 : index
    %200 = memref.load %arg2[%c37] : memref<52xf32, #tpu.memory_space<smem>>
    %201 = vector.extract_strided_slice %13 {offsets = [3, 3], sizes = [16, 16], strides = [1, 1]} : vector<20x20xf32> to vector<16x16xf32>
    %202 = vector.broadcast %200 : f32 to vector<16x16xf32>
    %203 = arith.mulf %202, %201 : vector<16x16xf32>
    %204 = arith.addf %199, %203 : vector<16x16xf32>
    %c38 = arith.constant 38 : index
    %205 = memref.load %arg2[%c38] : memref<52xf32, #tpu.memory_space<smem>>
    %206 = vector.extract_strided_slice %11 {offsets = [3, 4], sizes = [16, 16], strides = [1, 1]} : vector<20x20xf32> to vector<16x16xf32>
    %207 = vector.broadcast %205 : f32 to vector<16x16xf32>
    %208 = arith.mulf %207, %206 : vector<16x16xf32>
    %209 = arith.addf %204, %208 : vector<16x16xf32>
    %c39 = arith.constant 39 : index
    %210 = memref.load %arg2[%c39] : memref<52xf32, #tpu.memory_space<smem>>
    %211 = vector.extract_strided_slice %13 {offsets = [3, 4], sizes = [16, 16], strides = [1, 1]} : vector<20x20xf32> to vector<16x16xf32>
    %212 = vector.broadcast %210 : f32 to vector<16x16xf32>
    %213 = arith.mulf %212, %211 : vector<16x16xf32>
    %214 = arith.addf %209, %213 : vector<16x16xf32>
    %c40 = arith.constant 40 : index
    %215 = memref.load %arg2[%c40] : memref<52xf32, #tpu.memory_space<smem>>
    %216 = vector.extract_strided_slice %11 {offsets = [4, 0], sizes = [16, 16], strides = [1, 1]} : vector<20x20xf32> to vector<16x16xf32>
    %217 = vector.broadcast %215 : f32 to vector<16x16xf32>
    %218 = arith.mulf %217, %216 : vector<16x16xf32>
    %219 = arith.addf %214, %218 : vector<16x16xf32>
    %c41 = arith.constant 41 : index
    %220 = memref.load %arg2[%c41] : memref<52xf32, #tpu.memory_space<smem>>
    %221 = vector.extract_strided_slice %13 {offsets = [4, 0], sizes = [16, 16], strides = [1, 1]} : vector<20x20xf32> to vector<16x16xf32>
    %222 = vector.broadcast %220 : f32 to vector<16x16xf32>
    %223 = arith.mulf %222, %221 : vector<16x16xf32>
    %224 = arith.addf %219, %223 : vector<16x16xf32>
    %c42 = arith.constant 42 : index
    %225 = memref.load %arg2[%c42] : memref<52xf32, #tpu.memory_space<smem>>
    %226 = vector.extract_strided_slice %11 {offsets = [4, 1], sizes = [16, 16], strides = [1, 1]} : vector<20x20xf32> to vector<16x16xf32>
    %227 = vector.broadcast %225 : f32 to vector<16x16xf32>
    %228 = arith.mulf %227, %226 : vector<16x16xf32>
    %229 = arith.addf %224, %228 : vector<16x16xf32>
    %c43 = arith.constant 43 : index
    %230 = memref.load %arg2[%c43] : memref<52xf32, #tpu.memory_space<smem>>
    %231 = vector.extract_strided_slice %13 {offsets = [4, 1], sizes = [16, 16], strides = [1, 1]} : vector<20x20xf32> to vector<16x16xf32>
    %232 = vector.broadcast %230 : f32 to vector<16x16xf32>
    %233 = arith.mulf %232, %231 : vector<16x16xf32>
    %234 = arith.addf %229, %233 : vector<16x16xf32>
    %c44 = arith.constant 44 : index
    %235 = memref.load %arg2[%c44] : memref<52xf32, #tpu.memory_space<smem>>
    %236 = vector.extract_strided_slice %11 {offsets = [4, 2], sizes = [16, 16], strides = [1, 1]} : vector<20x20xf32> to vector<16x16xf32>
    %237 = vector.broadcast %235 : f32 to vector<16x16xf32>
    %238 = arith.mulf %237, %236 : vector<16x16xf32>
    %239 = arith.addf %234, %238 : vector<16x16xf32>
    %c45 = arith.constant 45 : index
    %240 = memref.load %arg2[%c45] : memref<52xf32, #tpu.memory_space<smem>>
    %241 = vector.extract_strided_slice %13 {offsets = [4, 2], sizes = [16, 16], strides = [1, 1]} : vector<20x20xf32> to vector<16x16xf32>
    %242 = vector.broadcast %240 : f32 to vector<16x16xf32>
    %243 = arith.mulf %242, %241 : vector<16x16xf32>
    %244 = arith.addf %239, %243 : vector<16x16xf32>
    %c46 = arith.constant 46 : index
    %245 = memref.load %arg2[%c46] : memref<52xf32, #tpu.memory_space<smem>>
    %246 = vector.extract_strided_slice %11 {offsets = [4, 3], sizes = [16, 16], strides = [1, 1]} : vector<20x20xf32> to vector<16x16xf32>
    %247 = vector.broadcast %245 : f32 to vector<16x16xf32>
    %248 = arith.mulf %247, %246 : vector<16x16xf32>
    %249 = arith.addf %244, %248 : vector<16x16xf32>
    %c47 = arith.constant 47 : index
    %250 = memref.load %arg2[%c47] : memref<52xf32, #tpu.memory_space<smem>>
    %251 = vector.extract_strided_slice %13 {offsets = [4, 3], sizes = [16, 16], strides = [1, 1]} : vector<20x20xf32> to vector<16x16xf32>
    %252 = vector.broadcast %250 : f32 to vector<16x16xf32>
    %253 = arith.mulf %252, %251 : vector<16x16xf32>
    %254 = arith.addf %249, %253 : vector<16x16xf32>
    %c48 = arith.constant 48 : index
    %255 = memref.load %arg2[%c48] : memref<52xf32, #tpu.memory_space<smem>>
    %256 = vector.extract_strided_slice %11 {offsets = [4, 4], sizes = [16, 16], strides = [1, 1]} : vector<20x20xf32> to vector<16x16xf32>
    %257 = vector.broadcast %255 : f32 to vector<16x16xf32>
    %258 = arith.mulf %257, %256 : vector<16x16xf32>
    %259 = arith.addf %254, %258 : vector<16x16xf32>
    %c49 = arith.constant 49 : index
    %260 = memref.load %arg2[%c49] : memref<52xf32, #tpu.memory_space<smem>>
    %261 = vector.extract_strided_slice %13 {offsets = [4, 4], sizes = [16, 16], strides = [1, 1]} : vector<20x20xf32> to vector<16x16xf32>
    %262 = vector.broadcast %260 : f32 to vector<16x16xf32>
    %263 = arith.mulf %262, %261 : vector<16x16xf32>
    %264 = arith.addf %259, %263 : vector<16x16xf32>
    %c50 = arith.constant 50 : index
    %265 = memref.load %arg2[%c50] : memref<52xf32, #tpu.memory_space<smem>>
    %266 = vector.broadcast %265 : f32 to vector<16x16xf32>
    %267 = arith.addf %264, %266 : vector<16x16xf32>
    %cst_34 = arith.constant 0.000000e+00 : f32
    %268 = vector.broadcast %cst_34 : f32 to vector<16x16xf32>
    %269 = arith.maximumf %267, %268 : vector<16x16xf32>
    %c0_35 = arith.constant 0 : index
    %c0_36 = arith.constant 0 : index
    %270 = vector.load %arg7[%c0_35, %c0_36] : memref<16x16xf32, #tpu.memory_space<vmem>>, vector<16x16xf32>
    tpu.vector_store %arg7[%c0_35, %c0_36], %269 {strides = array<i32>} : memref<16x16xf32, #tpu.memory_space<vmem>>, vector<16x16xf32>,
    %271 = vector.shape_cast %269 : vector<16x16xf32> to vector<16x16x1xf32>
    %272 = vector.shape_cast %271 : vector<16x16x1xf32> to vector<16x16x1xf32>
    %273 = vector.broadcast %272 : vector<16x16x1xf32> to vector<16x16x128xf32>
    %c2_37 = arith.constant 2 : index
    %c2_38 = arith.constant 2 : index
    %c0_39 = arith.constant 0 : index
    %274 = vector.load %arg8[%c2_37, %c2_38, %c0_39] : memref<20x20x128xf32, #tpu.memory_space<vmem>>, vector<16x16x128xf32>
    tpu.vector_store %arg8[%c2_37, %c2_38, %c0_39], %273 {strides = array<i32>} : memref<20x20x128xf32, #tpu.memory_space<vmem>>, vector<16x16x128xf32>,
    %c0_i32 = arith.constant 0 : i32
    %c2_i32 = arith.constant 2 : i32
    %275 = arith.addi %c0_i32, %c2_i32 : i32
    %c1_i32 = arith.constant 1 : i32
    scf.for %arg10 = %c0_i32 to %275 step %c1_i32  : i32 {
      %c8_i32 = arith.constant 8 : i32
      %277 = arith.muli %arg10, %c8_i32 : i32
      %278 = tpu.assume_multiple %277, 8 : i32
      %cst_45 = arith.constant 0.000000e+00 : f32
      %279 = vector.broadcast %cst_45 : f32 to vector<8x16x128xf32>
      %c0_i32_46 = arith.constant 0 : i32
      %280 = arith.addi %278, %c0_i32_46 : i32
      %281 = arith.index_cast %280 : i32 to index
      %c0_47 = arith.constant 0 : index
      %c0_48 = arith.constant 0 : index
      %282 = vector.load %arg8[%281, %c0_47, %c0_48] : memref<20x20x128xf32, #tpu.memory_space<vmem>>, vector<8x16x128xf32>
      %c0_49 = arith.constant 0 : index
      %c0_50 = arith.constant 0 : index
      %283 = vector.load %arg3[%c0_49, %c0_50] : memref<25x128xf32, #tpu.memory_space<vmem>>, vector<1x128xf32>
      %284 = vector.shape_cast %283 : vector<1x128xf32> to vector<128xf32>
      %285 = vector.shape_cast %284 : vector<128xf32> to vector<1x1x128xf32>
      %286 = vector.broadcast %285 : vector<1x1x128xf32> to vector<8x16x128xf32>
      %287 = arith.mulf %282, %286 : vector<8x16x128xf32>
      %288 = arith.addf %279, %287 : vector<8x16x128xf32>
      %c0_i32_51 = arith.constant 0 : i32
      %289 = arith.addi %278, %c0_i32_51 : i32
      %290 = arith.index_cast %289 : i32 to index
      %c1_52 = arith.constant 1 : index
      %c0_53 = arith.constant 0 : index
      %291 = vector.load %arg8[%290, %c1_52, %c0_53] : memref<20x20x128xf32, #tpu.memory_space<vmem>>, vector<8x16x128xf32>
      %c1_54 = arith.constant 1 : index
      %c0_55 = arith.constant 0 : index
      %292 = vector.load %arg3[%c1_54, %c0_55] : memref<25x128xf32, #tpu.memory_space<vmem>>, vector<1x128xf32>
      %293 = vector.shape_cast %292 : vector<1x128xf32> to vector<128xf32>
      %294 = vector.shape_cast %293 : vector<128xf32> to vector<1x1x128xf32>
      %295 = vector.broadcast %294 : vector<1x1x128xf32> to vector<8x16x128xf32>
      %296 = arith.mulf %291, %295 : vector<8x16x128xf32>
      %297 = arith.addf %288, %296 : vector<8x16x128xf32>
      %c0_i32_56 = arith.constant 0 : i32
      %298 = arith.addi %278, %c0_i32_56 : i32
      %299 = arith.index_cast %298 : i32 to index
      %c2_57 = arith.constant 2 : index
      %c0_58 = arith.constant 0 : index
      %300 = vector.load %arg8[%299, %c2_57, %c0_58] : memref<20x20x128xf32, #tpu.memory_space<vmem>>, vector<8x16x128xf32>
      %c2_59 = arith.constant 2 : index
      %c0_60 = arith.constant 0 : index
      %301 = vector.load %arg3[%c2_59, %c0_60] : memref<25x128xf32, #tpu.memory_space<vmem>>, vector<1x128xf32>
      %302 = vector.shape_cast %301 : vector<1x128xf32> to vector<128xf32>
      %303 = vector.shape_cast %302 : vector<128xf32> to vector<1x1x128xf32>
      %304 = vector.broadcast %303 : vector<1x1x128xf32> to vector<8x16x128xf32>
      %305 = arith.mulf %300, %304 : vector<8x16x128xf32>
      %306 = arith.addf %297, %305 : vector<8x16x128xf32>
      %c0_i32_61 = arith.constant 0 : i32
      %307 = arith.addi %278, %c0_i32_61 : i32
      %308 = arith.index_cast %307 : i32 to index
      %c3_62 = arith.constant 3 : index
      %c0_63 = arith.constant 0 : index
      %309 = vector.load %arg8[%308, %c3_62, %c0_63] : memref<20x20x128xf32, #tpu.memory_space<vmem>>, vector<8x16x128xf32>
      %c3_64 = arith.constant 3 : index
      %c0_65 = arith.constant 0 : index
      %310 = vector.load %arg3[%c3_64, %c0_65] : memref<25x128xf32, #tpu.memory_space<vmem>>, vector<1x128xf32>
      %311 = vector.shape_cast %310 : vector<1x128xf32> to vector<128xf32>
      %312 = vector.shape_cast %311 : vector<128xf32> to vector<1x1x128xf32>
      %313 = vector.broadcast %312 : vector<1x1x128xf32> to vector<8x16x128xf32>
      %314 = arith.mulf %309, %313 : vector<8x16x128xf32>
      %315 = arith.addf %306, %314 : vector<8x16x128xf32>
      %c0_i32_66 = arith.constant 0 : i32
      %316 = arith.addi %278, %c0_i32_66 : i32
      %317 = arith.index_cast %316 : i32 to index
      %c4_67 = arith.constant 4 : index
      %c0_68 = arith.constant 0 : index
      %318 = vector.load %arg8[%317, %c4_67, %c0_68] : memref<20x20x128xf32, #tpu.memory_space<vmem>>, vector<8x16x128xf32>
      %c4_69 = arith.constant 4 : index
      %c0_70 = arith.constant 0 : index
      %319 = vector.load %arg3[%c4_69, %c0_70] : memref<25x128xf32, #tpu.memory_space<vmem>>, vector<1x128xf32>
      %320 = vector.shape_cast %319 : vector<1x128xf32> to vector<128xf32>
      %321 = vector.shape_cast %320 : vector<128xf32> to vector<1x1x128xf32>
      %322 = vector.broadcast %321 : vector<1x1x128xf32> to vector<8x16x128xf32>
      %323 = arith.mulf %318, %322 : vector<8x16x128xf32>
      %324 = arith.addf %315, %323 : vector<8x16x128xf32>
      %c1_i32_71 = arith.constant 1 : i32
      %325 = arith.addi %278, %c1_i32_71 : i32
      %326 = arith.index_cast %325 : i32 to index
      %c0_72 = arith.constant 0 : index
      %c0_73 = arith.constant 0 : index
      %327 = vector.load %arg8[%326, %c0_72, %c0_73] : memref<20x20x128xf32, #tpu.memory_space<vmem>>, vector<8x16x128xf32>
      %c5_74 = arith.constant 5 : index
      %c0_75 = arith.constant 0 : index
      %328 = vector.load %arg3[%c5_74, %c0_75] : memref<25x128xf32, #tpu.memory_space<vmem>>, vector<1x128xf32>
      %329 = vector.shape_cast %328 : vector<1x128xf32> to vector<128xf32>
      %330 = vector.shape_cast %329 : vector<128xf32> to vector<1x1x128xf32>
      %331 = vector.broadcast %330 : vector<1x1x128xf32> to vector<8x16x128xf32>
      %332 = arith.mulf %327, %331 : vector<8x16x128xf32>
      %333 = arith.addf %324, %332 : vector<8x16x128xf32>
      %c1_i32_76 = arith.constant 1 : i32
      %334 = arith.addi %278, %c1_i32_76 : i32
      %335 = arith.index_cast %334 : i32 to index
      %c1_77 = arith.constant 1 : index
      %c0_78 = arith.constant 0 : index
      %336 = vector.load %arg8[%335, %c1_77, %c0_78] : memref<20x20x128xf32, #tpu.memory_space<vmem>>, vector<8x16x128xf32>
      %c6_79 = arith.constant 6 : index
      %c0_80 = arith.constant 0 : index
      %337 = vector.load %arg3[%c6_79, %c0_80] : memref<25x128xf32, #tpu.memory_space<vmem>>, vector<1x128xf32>
      %338 = vector.shape_cast %337 : vector<1x128xf32> to vector<128xf32>
      %339 = vector.shape_cast %338 : vector<128xf32> to vector<1x1x128xf32>
      %340 = vector.broadcast %339 : vector<1x1x128xf32> to vector<8x16x128xf32>
      %341 = arith.mulf %336, %340 : vector<8x16x128xf32>
      %342 = arith.addf %333, %341 : vector<8x16x128xf32>
      %c1_i32_81 = arith.constant 1 : i32
      %343 = arith.addi %278, %c1_i32_81 : i32
      %344 = arith.index_cast %343 : i32 to index
      %c2_82 = arith.constant 2 : index
      %c0_83 = arith.constant 0 : index
      %345 = vector.load %arg8[%344, %c2_82, %c0_83] : memref<20x20x128xf32, #tpu.memory_space<vmem>>, vector<8x16x128xf32>
      %c7_84 = arith.constant 7 : index
      %c0_85 = arith.constant 0 : index
      %346 = vector.load %arg3[%c7_84, %c0_85] : memref<25x128xf32, #tpu.memory_space<vmem>>, vector<1x128xf32>
      %347 = vector.shape_cast %346 : vector<1x128xf32> to vector<128xf32>
      %348 = vector.shape_cast %347 : vector<128xf32> to vector<1x1x128xf32>
      %349 = vector.broadcast %348 : vector<1x1x128xf32> to vector<8x16x128xf32>
      %350 = arith.mulf %345, %349 : vector<8x16x128xf32>
      %351 = arith.addf %342, %350 : vector<8x16x128xf32>
      %c1_i32_86 = arith.constant 1 : i32
      %352 = arith.addi %278, %c1_i32_86 : i32
      %353 = arith.index_cast %352 : i32 to index
      %c3_87 = arith.constant 3 : index
      %c0_88 = arith.constant 0 : index
      %354 = vector.load %arg8[%353, %c3_87, %c0_88] : memref<20x20x128xf32, #tpu.memory_space<vmem>>, vector<8x16x128xf32>
      %c8_89 = arith.constant 8 : index
      %c0_90 = arith.constant 0 : index
      %355 = vector.load %arg3[%c8_89, %c0_90] : memref<25x128xf32, #tpu.memory_space<vmem>>, vector<1x128xf32>
      %356 = vector.shape_cast %355 : vector<1x128xf32> to vector<128xf32>
      %357 = vector.shape_cast %356 : vector<128xf32> to vector<1x1x128xf32>
      %358 = vector.broadcast %357 : vector<1x1x128xf32> to vector<8x16x128xf32>
      %359 = arith.mulf %354, %358 : vector<8x16x128xf32>
      %360 = arith.addf %351, %359 : vector<8x16x128xf32>
      %c1_i32_91 = arith.constant 1 : i32
      %361 = arith.addi %278, %c1_i32_91 : i32
      %362 = arith.index_cast %361 : i32 to index
      %c4_92 = arith.constant 4 : index
      %c0_93 = arith.constant 0 : index
      %363 = vector.load %arg8[%362, %c4_92, %c0_93] : memref<20x20x128xf32, #tpu.memory_space<vmem>>, vector<8x16x128xf32>
      %c9_94 = arith.constant 9 : index
      %c0_95 = arith.constant 0 : index
      %364 = vector.load %arg3[%c9_94, %c0_95] : memref<25x128xf32, #tpu.memory_space<vmem>>, vector<1x128xf32>
      %365 = vector.shape_cast %364 : vector<1x128xf32> to vector<128xf32>
      %366 = vector.shape_cast %365 : vector<128xf32> to vector<1x1x128xf32>
      %367 = vector.broadcast %366 : vector<1x1x128xf32> to vector<8x16x128xf32>
      %368 = arith.mulf %363, %367 : vector<8x16x128xf32>
      %369 = arith.addf %360, %368 : vector<8x16x128xf32>
      %c2_i32_96 = arith.constant 2 : i32
      %370 = arith.addi %278, %c2_i32_96 : i32
      %371 = arith.index_cast %370 : i32 to index
      %c0_97 = arith.constant 0 : index
      %c0_98 = arith.constant 0 : index
      %372 = vector.load %arg8[%371, %c0_97, %c0_98] : memref<20x20x128xf32, #tpu.memory_space<vmem>>, vector<8x16x128xf32>
      %c10_99 = arith.constant 10 : index
      %c0_100 = arith.constant 0 : index
      %373 = vector.load %arg3[%c10_99, %c0_100] : memref<25x128xf32, #tpu.memory_space<vmem>>, vector<1x128xf32>
      %374 = vector.shape_cast %373 : vector<1x128xf32> to vector<128xf32>
      %375 = vector.shape_cast %374 : vector<128xf32> to vector<1x1x128xf32>
      %376 = vector.broadcast %375 : vector<1x1x128xf32> to vector<8x16x128xf32>
      %377 = arith.mulf %372, %376 : vector<8x16x128xf32>
      %378 = arith.addf %369, %377 : vector<8x16x128xf32>
      %c2_i32_101 = arith.constant 2 : i32
      %379 = arith.addi %278, %c2_i32_101 : i32
      %380 = arith.index_cast %379 : i32 to index
      %c1_102 = arith.constant 1 : index
      %c0_103 = arith.constant 0 : index
      %381 = vector.load %arg8[%380, %c1_102, %c0_103] : memref<20x20x128xf32, #tpu.memory_space<vmem>>, vector<8x16x128xf32>
      %c11_104 = arith.constant 11 : index
      %c0_105 = arith.constant 0 : index
      %382 = vector.load %arg3[%c11_104, %c0_105] : memref<25x128xf32, #tpu.memory_space<vmem>>, vector<1x128xf32>
      %383 = vector.shape_cast %382 : vector<1x128xf32> to vector<128xf32>
      %384 = vector.shape_cast %383 : vector<128xf32> to vector<1x1x128xf32>
      %385 = vector.broadcast %384 : vector<1x1x128xf32> to vector<8x16x128xf32>
      %386 = arith.mulf %381, %385 : vector<8x16x128xf32>
      %387 = arith.addf %378, %386 : vector<8x16x128xf32>
      %c2_i32_106 = arith.constant 2 : i32
      %388 = arith.addi %278, %c2_i32_106 : i32
      %389 = arith.index_cast %388 : i32 to index
      %c2_107 = arith.constant 2 : index
      %c0_108 = arith.constant 0 : index
      %390 = vector.load %arg8[%389, %c2_107, %c0_108] : memref<20x20x128xf32, #tpu.memory_space<vmem>>, vector<8x16x128xf32>
      %c12_109 = arith.constant 12 : index
      %c0_110 = arith.constant 0 : index
      %391 = vector.load %arg3[%c12_109, %c0_110] : memref<25x128xf32, #tpu.memory_space<vmem>>, vector<1x128xf32>
      %392 = vector.shape_cast %391 : vector<1x128xf32> to vector<128xf32>
      %393 = vector.shape_cast %392 : vector<128xf32> to vector<1x1x128xf32>
      %394 = vector.broadcast %393 : vector<1x1x128xf32> to vector<8x16x128xf32>
      %395 = arith.mulf %390, %394 : vector<8x16x128xf32>
      %396 = arith.addf %387, %395 : vector<8x16x128xf32>
      %c2_i32_111 = arith.constant 2 : i32
      %397 = arith.addi %278, %c2_i32_111 : i32
      %398 = arith.index_cast %397 : i32 to index
      %c3_112 = arith.constant 3 : index
      %c0_113 = arith.constant 0 : index
      %399 = vector.load %arg8[%398, %c3_112, %c0_113] : memref<20x20x128xf32, #tpu.memory_space<vmem>>, vector<8x16x128xf32>
      %c13_114 = arith.constant 13 : index
      %c0_115 = arith.constant 0 : index
      %400 = vector.load %arg3[%c13_114, %c0_115] : memref<25x128xf32, #tpu.memory_space<vmem>>, vector<1x128xf32>
      %401 = vector.shape_cast %400 : vector<1x128xf32> to vector<128xf32>
      %402 = vector.shape_cast %401 : vector<128xf32> to vector<1x1x128xf32>
      %403 = vector.broadcast %402 : vector<1x1x128xf32> to vector<8x16x128xf32>
      %404 = arith.mulf %399, %403 : vector<8x16x128xf32>
      %405 = arith.addf %396, %404 : vector<8x16x128xf32>
      %c2_i32_116 = arith.constant 2 : i32
      %406 = arith.addi %278, %c2_i32_116 : i32
      %407 = arith.index_cast %406 : i32 to index
      %c4_117 = arith.constant 4 : index
      %c0_118 = arith.constant 0 : index
      %408 = vector.load %arg8[%407, %c4_117, %c0_118] : memref<20x20x128xf32, #tpu.memory_space<vmem>>, vector<8x16x128xf32>
      %c14_119 = arith.constant 14 : index
      %c0_120 = arith.constant 0 : index
      %409 = vector.load %arg3[%c14_119, %c0_120] : memref<25x128xf32, #tpu.memory_space<vmem>>, vector<1x128xf32>
      %410 = vector.shape_cast %409 : vector<1x128xf32> to vector<128xf32>
      %411 = vector.shape_cast %410 : vector<128xf32> to vector<1x1x128xf32>
      %412 = vector.broadcast %411 : vector<1x1x128xf32> to vector<8x16x128xf32>
      %413 = arith.mulf %408, %412 : vector<8x16x128xf32>
      %414 = arith.addf %405, %413 : vector<8x16x128xf32>
      %c3_i32 = arith.constant 3 : i32
      %415 = arith.addi %278, %c3_i32 : i32
      %416 = arith.index_cast %415 : i32 to index
      %c0_121 = arith.constant 0 : index
      %c0_122 = arith.constant 0 : index
      %417 = vector.load %arg8[%416, %c0_121, %c0_122] : memref<20x20x128xf32, #tpu.memory_space<vmem>>, vector<8x16x128xf32>
      %c15_123 = arith.constant 15 : index
      %c0_124 = arith.constant 0 : index
      %418 = vector.load %arg3[%c15_123, %c0_124] : memref<25x128xf32, #tpu.memory_space<vmem>>, vector<1x128xf32>
      %419 = vector.shape_cast %418 : vector<1x128xf32> to vector<128xf32>
      %420 = vector.shape_cast %419 : vector<128xf32> to vector<1x1x128xf32>
      %421 = vector.broadcast %420 : vector<1x1x128xf32> to vector<8x16x128xf32>
      %422 = arith.mulf %417, %421 : vector<8x16x128xf32>
      %423 = arith.addf %414, %422 : vector<8x16x128xf32>
      %c3_i32_125 = arith.constant 3 : i32
      %424 = arith.addi %278, %c3_i32_125 : i32
      %425 = arith.index_cast %424 : i32 to index
      %c1_126 = arith.constant 1 : index
      %c0_127 = arith.constant 0 : index
      %426 = vector.load %arg8[%425, %c1_126, %c0_127] : memref<20x20x128xf32, #tpu.memory_space<vmem>>, vector<8x16x128xf32>
      %c16_128 = arith.constant 16 : index
      %c0_129 = arith.constant 0 : index
      %427 = vector.load %arg3[%c16_128, %c0_129] : memref<25x128xf32, #tpu.memory_space<vmem>>, vector<1x128xf32>
      %428 = vector.shape_cast %427 : vector<1x128xf32> to vector<128xf32>
      %429 = vector.shape_cast %428 : vector<128xf32> to vector<1x1x128xf32>
      %430 = vector.broadcast %429 : vector<1x1x128xf32> to vector<8x16x128xf32>
      %431 = arith.mulf %426, %430 : vector<8x16x128xf32>
      %432 = arith.addf %423, %431 : vector<8x16x128xf32>
      %c3_i32_130 = arith.constant 3 : i32
      %433 = arith.addi %278, %c3_i32_130 : i32
      %434 = arith.index_cast %433 : i32 to index
      %c2_131 = arith.constant 2 : index
      %c0_132 = arith.constant 0 : index
      %435 = vector.load %arg8[%434, %c2_131, %c0_132] : memref<20x20x128xf32, #tpu.memory_space<vmem>>, vector<8x16x128xf32>
      %c17_133 = arith.constant 17 : index
      %c0_134 = arith.constant 0 : index
      %436 = vector.load %arg3[%c17_133, %c0_134] : memref<25x128xf32, #tpu.memory_space<vmem>>, vector<1x128xf32>
      %437 = vector.shape_cast %436 : vector<1x128xf32> to vector<128xf32>
      %438 = vector.shape_cast %437 : vector<128xf32> to vector<1x1x128xf32>
      %439 = vector.broadcast %438 : vector<1x1x128xf32> to vector<8x16x128xf32>
      %440 = arith.mulf %435, %439 : vector<8x16x128xf32>
      %441 = arith.addf %432, %440 : vector<8x16x128xf32>
      %c3_i32_135 = arith.constant 3 : i32
      %442 = arith.addi %278, %c3_i32_135 : i32
      %443 = arith.index_cast %442 : i32 to index
      %c3_136 = arith.constant 3 : index
      %c0_137 = arith.constant 0 : index
      %444 = vector.load %arg8[%443, %c3_136, %c0_137] : memref<20x20x128xf32, #tpu.memory_space<vmem>>, vector<8x16x128xf32>
      %c18_138 = arith.constant 18 : index
      %c0_139 = arith.constant 0 : index
      %445 = vector.load %arg3[%c18_138, %c0_139] : memref<25x128xf32, #tpu.memory_space<vmem>>, vector<1x128xf32>
      %446 = vector.shape_cast %445 : vector<1x128xf32> to vector<128xf32>
      %447 = vector.shape_cast %446 : vector<128xf32> to vector<1x1x128xf32>
      %448 = vector.broadcast %447 : vector<1x1x128xf32> to vector<8x16x128xf32>
      %449 = arith.mulf %444, %448 : vector<8x16x128xf32>
      %450 = arith.addf %441, %449 : vector<8x16x128xf32>
      %c3_i32_140 = arith.constant 3 : i32
      %451 = arith.addi %278, %c3_i32_140 : i32
      %452 = arith.index_cast %451 : i32 to index
      %c4_141 = arith.constant 4 : index
      %c0_142 = arith.constant 0 : index
      %453 = vector.load %arg8[%452, %c4_141, %c0_142] : memref<20x20x128xf32, #tpu.memory_space<vmem>>, vector<8x16x128xf32>
      %c19_143 = arith.constant 19 : index
      %c0_144 = arith.constant 0 : index
      %454 = vector.load %arg3[%c19_143, %c0_144] : memref<25x128xf32, #tpu.memory_space<vmem>>, vector<1x128xf32>
      %455 = vector.shape_cast %454 : vector<1x128xf32> to vector<128xf32>
      %456 = vector.shape_cast %455 : vector<128xf32> to vector<1x1x128xf32>
      %457 = vector.broadcast %456 : vector<1x1x128xf32> to vector<8x16x128xf32>
      %458 = arith.mulf %453, %457 : vector<8x16x128xf32>
      %459 = arith.addf %450, %458 : vector<8x16x128xf32>
      %c4_i32 = arith.constant 4 : i32
      %460 = arith.addi %278, %c4_i32 : i32
      %461 = arith.index_cast %460 : i32 to index
      %c0_145 = arith.constant 0 : index
      %c0_146 = arith.constant 0 : index
      %462 = vector.load %arg8[%461, %c0_145, %c0_146] : memref<20x20x128xf32, #tpu.memory_space<vmem>>, vector<8x16x128xf32>
      %c20_147 = arith.constant 20 : index
      %c0_148 = arith.constant 0 : index
      %463 = vector.load %arg3[%c20_147, %c0_148] : memref<25x128xf32, #tpu.memory_space<vmem>>, vector<1x128xf32>
      %464 = vector.shape_cast %463 : vector<1x128xf32> to vector<128xf32>
      %465 = vector.shape_cast %464 : vector<128xf32> to vector<1x1x128xf32>
      %466 = vector.broadcast %465 : vector<1x1x128xf32> to vector<8x16x128xf32>
      %467 = arith.mulf %462, %466 : vector<8x16x128xf32>
      %468 = arith.addf %459, %467 : vector<8x16x128xf32>
      %c4_i32_149 = arith.constant 4 : i32
      %469 = arith.addi %278, %c4_i32_149 : i32
      %470 = arith.index_cast %469 : i32 to index
      %c1_150 = arith.constant 1 : index
      %c0_151 = arith.constant 0 : index
      %471 = vector.load %arg8[%470, %c1_150, %c0_151] : memref<20x20x128xf32, #tpu.memory_space<vmem>>, vector<8x16x128xf32>
      %c21_152 = arith.constant 21 : index
      %c0_153 = arith.constant 0 : index
      %472 = vector.load %arg3[%c21_152, %c0_153] : memref<25x128xf32, #tpu.memory_space<vmem>>, vector<1x128xf32>
      %473 = vector.shape_cast %472 : vector<1x128xf32> to vector<128xf32>
      %474 = vector.shape_cast %473 : vector<128xf32> to vector<1x1x128xf32>
      %475 = vector.broadcast %474 : vector<1x1x128xf32> to vector<8x16x128xf32>
      %476 = arith.mulf %471, %475 : vector<8x16x128xf32>
      %477 = arith.addf %468, %476 : vector<8x16x128xf32>
      %c4_i32_154 = arith.constant 4 : i32
      %478 = arith.addi %278, %c4_i32_154 : i32
      %479 = arith.index_cast %478 : i32 to index
      %c2_155 = arith.constant 2 : index
      %c0_156 = arith.constant 0 : index
      %480 = vector.load %arg8[%479, %c2_155, %c0_156] : memref<20x20x128xf32, #tpu.memory_space<vmem>>, vector<8x16x128xf32>
      %c22_157 = arith.constant 22 : index
      %c0_158 = arith.constant 0 : index
      %481 = vector.load %arg3[%c22_157, %c0_158] : memref<25x128xf32, #tpu.memory_space<vmem>>, vector<1x128xf32>
      %482 = vector.shape_cast %481 : vector<1x128xf32> to vector<128xf32>
      %483 = vector.shape_cast %482 : vector<128xf32> to vector<1x1x128xf32>
      %484 = vector.broadcast %483 : vector<1x1x128xf32> to vector<8x16x128xf32>
      %485 = arith.mulf %480, %484 : vector<8x16x128xf32>
      %486 = arith.addf %477, %485 : vector<8x16x128xf32>
      %c4_i32_159 = arith.constant 4 : i32
      %487 = arith.addi %278, %c4_i32_159 : i32
      %488 = arith.index_cast %487 : i32 to index
      %c3_160 = arith.constant 3 : index
      %c0_161 = arith.constant 0 : index
      %489 = vector.load %arg8[%488, %c3_160, %c0_161] : memref<20x20x128xf32, #tpu.memory_space<vmem>>, vector<8x16x128xf32>
      %c23_162 = arith.constant 23 : index
      %c0_163 = arith.constant 0 : index
      %490 = vector.load %arg3[%c23_162, %c0_163] : memref<25x128xf32, #tpu.memory_space<vmem>>, vector<1x128xf32>
      %491 = vector.shape_cast %490 : vector<1x128xf32> to vector<128xf32>
      %492 = vector.shape_cast %491 : vector<128xf32> to vector<1x1x128xf32>
      %493 = vector.broadcast %492 : vector<1x1x128xf32> to vector<8x16x128xf32>
      %494 = arith.mulf %489, %493 : vector<8x16x128xf32>
      %495 = arith.addf %486, %494 : vector<8x16x128xf32>
      %c4_i32_164 = arith.constant 4 : i32
      %496 = arith.addi %278, %c4_i32_164 : i32
      %497 = arith.index_cast %496 : i32 to index
      %c4_165 = arith.constant 4 : index
      %c0_166 = arith.constant 0 : index
      %498 = vector.load %arg8[%497, %c4_165, %c0_166] : memref<20x20x128xf32, #tpu.memory_space<vmem>>, vector<8x16x128xf32>
      %c24_167 = arith.constant 24 : index
      %c0_168 = arith.constant 0 : index
      %499 = vector.load %arg3[%c24_167, %c0_168] : memref<25x128xf32, #tpu.memory_space<vmem>>, vector<1x128xf32>
      %500 = vector.shape_cast %499 : vector<1x128xf32> to vector<128xf32>
      %501 = vector.shape_cast %500 : vector<128xf32> to vector<1x1x128xf32>
      %502 = vector.broadcast %501 : vector<1x1x128xf32> to vector<8x16x128xf32>
      %503 = arith.mulf %498, %502 : vector<8x16x128xf32>
      %504 = arith.addf %495, %503 : vector<8x16x128xf32>
      %c0_169 = arith.constant 0 : index
      %c0_170 = arith.constant 0 : index
      %505 = vector.load %arg4[%c0_169, %c0_170] : memref<1x128xf32, #tpu.memory_space<vmem>>, vector<1x128xf32>
      %506 = vector.shape_cast %505 : vector<1x128xf32> to vector<1x1x128xf32>
      %507 = vector.broadcast %506 : vector<1x1x128xf32> to vector<8x16x128xf32>
      %508 = arith.addf %504, %507 : vector<8x16x128xf32>
      %cst_171 = arith.constant 0.000000e+00 : f32
      %509 = vector.broadcast %cst_171 : f32 to vector<8x16x128xf32>
      %510 = arith.maximumf %508, %509 : vector<8x16x128xf32>
      %c2_i32_172 = arith.constant 2 : i32
      %511 = arith.addi %c2_i32_172, %278 : i32
      %512 = arith.index_cast %511 : i32 to index
      %c2_173 = arith.constant 2 : index
      %c0_174 = arith.constant 0 : index
      %513 = vector.load %arg9[%512, %c2_173, %c0_174] : memref<20x20x128xf32, #tpu.memory_space<vmem>>, vector<8x16x128xf32>
      tpu.vector_store %arg9[%512, %c2_173, %c0_174], %510 {strides = array<i32>} : memref<20x20x128xf32, #tpu.memory_space<vmem>>, vector<8x16x128xf32>,
    }
    %c2_i32_40 = arith.constant 2 : i32
    %c0_i32_41 = arith.constant 0 : i32
    %c2_i32_42 = arith.constant 2 : i32
    %276 = arith.addi %c0_i32_41, %c2_i32_42 : i32
    %c1_i32_43 = arith.constant 1 : i32
    scf.for %arg10 = %c0_i32_41 to %276 step %c1_i32_43  : i32 {
      %c8_i32 = arith.constant 8 : i32
      %277 = arith.muli %arg10, %c8_i32 : i32
      %278 = tpu.assume_multiple %277, 8 : i32
      %cst_45 = arith.constant 0.000000e+00 : f32
      %279 = vector.broadcast %cst_45 : f32 to vector<8x16x128xf32>
      %c0_i32_46 = arith.constant 0 : i32
      %280 = arith.addi %278, %c0_i32_46 : i32
      %281 = arith.index_cast %280 : i32 to index
      %c0_47 = arith.constant 0 : index
      %c0_48 = arith.constant 0 : index
      %282 = vector.load %arg9[%281, %c0_47, %c0_48] : memref<20x20x128xf32, #tpu.memory_space<vmem>>, vector<8x16x128xf32>
      %c0_49 = arith.constant 0 : index
      %c0_50 = arith.constant 0 : index
      %283 = vector.load %arg5[%c0_49, %c0_50] : memref<25x128xf32, #tpu.memory_space<vmem>>, vector<1x128xf32>
      %284 = vector.shape_cast %283 : vector<1x128xf32> to vector<128xf32>
      %285 = vector.shape_cast %284 : vector<128xf32> to vector<1x1x128xf32>
      %286 = vector.broadcast %285 : vector<1x1x128xf32> to vector<8x16x128xf32>
      %287 = arith.mulf %282, %286 : vector<8x16x128xf32>
      %288 = arith.addf %279, %287 : vector<8x16x128xf32>
      %c0_i32_51 = arith.constant 0 : i32
      %289 = arith.addi %278, %c0_i32_51 : i32
      %290 = arith.index_cast %289 : i32 to index
      %c1_52 = arith.constant 1 : index
      %c0_53 = arith.constant 0 : index
      %291 = vector.load %arg9[%290, %c1_52, %c0_53] : memref<20x20x128xf32, #tpu.memory_space<vmem>>, vector<8x16x128xf32>
      %c1_54 = arith.constant 1 : index
      %c0_55 = arith.constant 0 : index
      %292 = vector.load %arg5[%c1_54, %c0_55] : memref<25x128xf32, #tpu.memory_space<vmem>>, vector<1x128xf32>
      %293 = vector.shape_cast %292 : vector<1x128xf32> to vector<128xf32>
      %294 = vector.shape_cast %293 : vector<128xf32> to vector<1x1x128xf32>
      %295 = vector.broadcast %294 : vector<1x1x128xf32> to vector<8x16x128xf32>
      %296 = arith.mulf %291, %295 : vector<8x16x128xf32>
      %297 = arith.addf %288, %296 : vector<8x16x128xf32>
      %c0_i32_56 = arith.constant 0 : i32
      %298 = arith.addi %278, %c0_i32_56 : i32
      %299 = arith.index_cast %298 : i32 to index
      %c2_57 = arith.constant 2 : index
      %c0_58 = arith.constant 0 : index
      %300 = vector.load %arg9[%299, %c2_57, %c0_58] : memref<20x20x128xf32, #tpu.memory_space<vmem>>, vector<8x16x128xf32>
      %c2_59 = arith.constant 2 : index
      %c0_60 = arith.constant 0 : index
      %301 = vector.load %arg5[%c2_59, %c0_60] : memref<25x128xf32, #tpu.memory_space<vmem>>, vector<1x128xf32>
      %302 = vector.shape_cast %301 : vector<1x128xf32> to vector<128xf32>
      %303 = vector.shape_cast %302 : vector<128xf32> to vector<1x1x128xf32>
      %304 = vector.broadcast %303 : vector<1x1x128xf32> to vector<8x16x128xf32>
      %305 = arith.mulf %300, %304 : vector<8x16x128xf32>
      %306 = arith.addf %297, %305 : vector<8x16x128xf32>
      %c0_i32_61 = arith.constant 0 : i32
      %307 = arith.addi %278, %c0_i32_61 : i32
      %308 = arith.index_cast %307 : i32 to index
      %c3_62 = arith.constant 3 : index
      %c0_63 = arith.constant 0 : index
      %309 = vector.load %arg9[%308, %c3_62, %c0_63] : memref<20x20x128xf32, #tpu.memory_space<vmem>>, vector<8x16x128xf32>
      %c3_64 = arith.constant 3 : index
      %c0_65 = arith.constant 0 : index
      %310 = vector.load %arg5[%c3_64, %c0_65] : memref<25x128xf32, #tpu.memory_space<vmem>>, vector<1x128xf32>
      %311 = vector.shape_cast %310 : vector<1x128xf32> to vector<128xf32>
      %312 = vector.shape_cast %311 : vector<128xf32> to vector<1x1x128xf32>
      %313 = vector.broadcast %312 : vector<1x1x128xf32> to vector<8x16x128xf32>
      %314 = arith.mulf %309, %313 : vector<8x16x128xf32>
      %315 = arith.addf %306, %314 : vector<8x16x128xf32>
      %c0_i32_66 = arith.constant 0 : i32
      %316 = arith.addi %278, %c0_i32_66 : i32
      %317 = arith.index_cast %316 : i32 to index
      %c4_67 = arith.constant 4 : index
      %c0_68 = arith.constant 0 : index
      %318 = vector.load %arg9[%317, %c4_67, %c0_68] : memref<20x20x128xf32, #tpu.memory_space<vmem>>, vector<8x16x128xf32>
      %c4_69 = arith.constant 4 : index
      %c0_70 = arith.constant 0 : index
      %319 = vector.load %arg5[%c4_69, %c0_70] : memref<25x128xf32, #tpu.memory_space<vmem>>, vector<1x128xf32>
      %320 = vector.shape_cast %319 : vector<1x128xf32> to vector<128xf32>
      %321 = vector.shape_cast %320 : vector<128xf32> to vector<1x1x128xf32>
      %322 = vector.broadcast %321 : vector<1x1x128xf32> to vector<8x16x128xf32>
      %323 = arith.mulf %318, %322 : vector<8x16x128xf32>
      %324 = arith.addf %315, %323 : vector<8x16x128xf32>
      %c1_i32_71 = arith.constant 1 : i32
      %325 = arith.addi %278, %c1_i32_71 : i32
      %326 = arith.index_cast %325 : i32 to index
      %c0_72 = arith.constant 0 : index
      %c0_73 = arith.constant 0 : index
      %327 = vector.load %arg9[%326, %c0_72, %c0_73] : memref<20x20x128xf32, #tpu.memory_space<vmem>>, vector<8x16x128xf32>
      %c5_74 = arith.constant 5 : index
      %c0_75 = arith.constant 0 : index
      %328 = vector.load %arg5[%c5_74, %c0_75] : memref<25x128xf32, #tpu.memory_space<vmem>>, vector<1x128xf32>
      %329 = vector.shape_cast %328 : vector<1x128xf32> to vector<128xf32>
      %330 = vector.shape_cast %329 : vector<128xf32> to vector<1x1x128xf32>
      %331 = vector.broadcast %330 : vector<1x1x128xf32> to vector<8x16x128xf32>
      %332 = arith.mulf %327, %331 : vector<8x16x128xf32>
      %333 = arith.addf %324, %332 : vector<8x16x128xf32>
      %c1_i32_76 = arith.constant 1 : i32
      %334 = arith.addi %278, %c1_i32_76 : i32
      %335 = arith.index_cast %334 : i32 to index
      %c1_77 = arith.constant 1 : index
      %c0_78 = arith.constant 0 : index
      %336 = vector.load %arg9[%335, %c1_77, %c0_78] : memref<20x20x128xf32, #tpu.memory_space<vmem>>, vector<8x16x128xf32>
      %c6_79 = arith.constant 6 : index
      %c0_80 = arith.constant 0 : index
      %337 = vector.load %arg5[%c6_79, %c0_80] : memref<25x128xf32, #tpu.memory_space<vmem>>, vector<1x128xf32>
      %338 = vector.shape_cast %337 : vector<1x128xf32> to vector<128xf32>
      %339 = vector.shape_cast %338 : vector<128xf32> to vector<1x1x128xf32>
      %340 = vector.broadcast %339 : vector<1x1x128xf32> to vector<8x16x128xf32>
      %341 = arith.mulf %336, %340 : vector<8x16x128xf32>
      %342 = arith.addf %333, %341 : vector<8x16x128xf32>
      %c1_i32_81 = arith.constant 1 : i32
      %343 = arith.addi %278, %c1_i32_81 : i32
      %344 = arith.index_cast %343 : i32 to index
      %c2_82 = arith.constant 2 : index
      %c0_83 = arith.constant 0 : index
      %345 = vector.load %arg9[%344, %c2_82, %c0_83] : memref<20x20x128xf32, #tpu.memory_space<vmem>>, vector<8x16x128xf32>
      %c7_84 = arith.constant 7 : index
      %c0_85 = arith.constant 0 : index
      %346 = vector.load %arg5[%c7_84, %c0_85] : memref<25x128xf32, #tpu.memory_space<vmem>>, vector<1x128xf32>
      %347 = vector.shape_cast %346 : vector<1x128xf32> to vector<128xf32>
      %348 = vector.shape_cast %347 : vector<128xf32> to vector<1x1x128xf32>
      %349 = vector.broadcast %348 : vector<1x1x128xf32> to vector<8x16x128xf32>
      %350 = arith.mulf %345, %349 : vector<8x16x128xf32>
      %351 = arith.addf %342, %350 : vector<8x16x128xf32>
      %c1_i32_86 = arith.constant 1 : i32
      %352 = arith.addi %278, %c1_i32_86 : i32
      %353 = arith.index_cast %352 : i32 to index
      %c3_87 = arith.constant 3 : index
      %c0_88 = arith.constant 0 : index
      %354 = vector.load %arg9[%353, %c3_87, %c0_88] : memref<20x20x128xf32, #tpu.memory_space<vmem>>, vector<8x16x128xf32>
      %c8_89 = arith.constant 8 : index
      %c0_90 = arith.constant 0 : index
      %355 = vector.load %arg5[%c8_89, %c0_90] : memref<25x128xf32, #tpu.memory_space<vmem>>, vector<1x128xf32>
      %356 = vector.shape_cast %355 : vector<1x128xf32> to vector<128xf32>
      %357 = vector.shape_cast %356 : vector<128xf32> to vector<1x1x128xf32>
      %358 = vector.broadcast %357 : vector<1x1x128xf32> to vector<8x16x128xf32>
      %359 = arith.mulf %354, %358 : vector<8x16x128xf32>
      %360 = arith.addf %351, %359 : vector<8x16x128xf32>
      %c1_i32_91 = arith.constant 1 : i32
      %361 = arith.addi %278, %c1_i32_91 : i32
      %362 = arith.index_cast %361 : i32 to index
      %c4_92 = arith.constant 4 : index
      %c0_93 = arith.constant 0 : index
      %363 = vector.load %arg9[%362, %c4_92, %c0_93] : memref<20x20x128xf32, #tpu.memory_space<vmem>>, vector<8x16x128xf32>
      %c9_94 = arith.constant 9 : index
      %c0_95 = arith.constant 0 : index
      %364 = vector.load %arg5[%c9_94, %c0_95] : memref<25x128xf32, #tpu.memory_space<vmem>>, vector<1x128xf32>
      %365 = vector.shape_cast %364 : vector<1x128xf32> to vector<128xf32>
      %366 = vector.shape_cast %365 : vector<128xf32> to vector<1x1x128xf32>
      %367 = vector.broadcast %366 : vector<1x1x128xf32> to vector<8x16x128xf32>
      %368 = arith.mulf %363, %367 : vector<8x16x128xf32>
      %369 = arith.addf %360, %368 : vector<8x16x128xf32>
      %c2_i32_96 = arith.constant 2 : i32
      %370 = arith.addi %278, %c2_i32_96 : i32
      %371 = arith.index_cast %370 : i32 to index
      %c0_97 = arith.constant 0 : index
      %c0_98 = arith.constant 0 : index
      %372 = vector.load %arg9[%371, %c0_97, %c0_98] : memref<20x20x128xf32, #tpu.memory_space<vmem>>, vector<8x16x128xf32>
      %c10_99 = arith.constant 10 : index
      %c0_100 = arith.constant 0 : index
      %373 = vector.load %arg5[%c10_99, %c0_100] : memref<25x128xf32, #tpu.memory_space<vmem>>, vector<1x128xf32>
      %374 = vector.shape_cast %373 : vector<1x128xf32> to vector<128xf32>
      %375 = vector.shape_cast %374 : vector<128xf32> to vector<1x1x128xf32>
      %376 = vector.broadcast %375 : vector<1x1x128xf32> to vector<8x16x128xf32>
      %377 = arith.mulf %372, %376 : vector<8x16x128xf32>
      %378 = arith.addf %369, %377 : vector<8x16x128xf32>
      %c2_i32_101 = arith.constant 2 : i32
      %379 = arith.addi %278, %c2_i32_101 : i32
      %380 = arith.index_cast %379 : i32 to index
      %c1_102 = arith.constant 1 : index
      %c0_103 = arith.constant 0 : index
      %381 = vector.load %arg9[%380, %c1_102, %c0_103] : memref<20x20x128xf32, #tpu.memory_space<vmem>>, vector<8x16x128xf32>
      %c11_104 = arith.constant 11 : index
      %c0_105 = arith.constant 0 : index
      %382 = vector.load %arg5[%c11_104, %c0_105] : memref<25x128xf32, #tpu.memory_space<vmem>>, vector<1x128xf32>
      %383 = vector.shape_cast %382 : vector<1x128xf32> to vector<128xf32>
      %384 = vector.shape_cast %383 : vector<128xf32> to vector<1x1x128xf32>
      %385 = vector.broadcast %384 : vector<1x1x128xf32> to vector<8x16x128xf32>
      %386 = arith.mulf %381, %385 : vector<8x16x128xf32>
      %387 = arith.addf %378, %386 : vector<8x16x128xf32>
      %c2_i32_106 = arith.constant 2 : i32
      %388 = arith.addi %278, %c2_i32_106 : i32
      %389 = arith.index_cast %388 : i32 to index
      %c2_107 = arith.constant 2 : index
      %c0_108 = arith.constant 0 : index
      %390 = vector.load %arg9[%389, %c2_107, %c0_108] : memref<20x20x128xf32, #tpu.memory_space<vmem>>, vector<8x16x128xf32>
      %c12_109 = arith.constant 12 : index
      %c0_110 = arith.constant 0 : index
      %391 = vector.load %arg5[%c12_109, %c0_110] : memref<25x128xf32, #tpu.memory_space<vmem>>, vector<1x128xf32>
      %392 = vector.shape_cast %391 : vector<1x128xf32> to vector<128xf32>
      %393 = vector.shape_cast %392 : vector<128xf32> to vector<1x1x128xf32>
      %394 = vector.broadcast %393 : vector<1x1x128xf32> to vector<8x16x128xf32>
      %395 = arith.mulf %390, %394 : vector<8x16x128xf32>
      %396 = arith.addf %387, %395 : vector<8x16x128xf32>
      %c2_i32_111 = arith.constant 2 : i32
      %397 = arith.addi %278, %c2_i32_111 : i32
      %398 = arith.index_cast %397 : i32 to index
      %c3_112 = arith.constant 3 : index
      %c0_113 = arith.constant 0 : index
      %399 = vector.load %arg9[%398, %c3_112, %c0_113] : memref<20x20x128xf32, #tpu.memory_space<vmem>>, vector<8x16x128xf32>
      %c13_114 = arith.constant 13 : index
      %c0_115 = arith.constant 0 : index
      %400 = vector.load %arg5[%c13_114, %c0_115] : memref<25x128xf32, #tpu.memory_space<vmem>>, vector<1x128xf32>
      %401 = vector.shape_cast %400 : vector<1x128xf32> to vector<128xf32>
      %402 = vector.shape_cast %401 : vector<128xf32> to vector<1x1x128xf32>
      %403 = vector.broadcast %402 : vector<1x1x128xf32> to vector<8x16x128xf32>
      %404 = arith.mulf %399, %403 : vector<8x16x128xf32>
      %405 = arith.addf %396, %404 : vector<8x16x128xf32>
      %c2_i32_116 = arith.constant 2 : i32
      %406 = arith.addi %278, %c2_i32_116 : i32
      %407 = arith.index_cast %406 : i32 to index
      %c4_117 = arith.constant 4 : index
      %c0_118 = arith.constant 0 : index
      %408 = vector.load %arg9[%407, %c4_117, %c0_118] : memref<20x20x128xf32, #tpu.memory_space<vmem>>, vector<8x16x128xf32>
      %c14_119 = arith.constant 14 : index
      %c0_120 = arith.constant 0 : index
      %409 = vector.load %arg5[%c14_119, %c0_120] : memref<25x128xf32, #tpu.memory_space<vmem>>, vector<1x128xf32>
      %410 = vector.shape_cast %409 : vector<1x128xf32> to vector<128xf32>
      %411 = vector.shape_cast %410 : vector<128xf32> to vector<1x1x128xf32>
      %412 = vector.broadcast %411 : vector<1x1x128xf32> to vector<8x16x128xf32>
      %413 = arith.mulf %408, %412 : vector<8x16x128xf32>
      %414 = arith.addf %405, %413 : vector<8x16x128xf32>
      %c3_i32 = arith.constant 3 : i32
      %415 = arith.addi %278, %c3_i32 : i32
      %416 = arith.index_cast %415 : i32 to index
      %c0_121 = arith.constant 0 : index
      %c0_122 = arith.constant 0 : index
      %417 = vector.load %arg9[%416, %c0_121, %c0_122] : memref<20x20x128xf32, #tpu.memory_space<vmem>>, vector<8x16x128xf32>
      %c15_123 = arith.constant 15 : index
      %c0_124 = arith.constant 0 : index
      %418 = vector.load %arg5[%c15_123, %c0_124] : memref<25x128xf32, #tpu.memory_space<vmem>>, vector<1x128xf32>
      %419 = vector.shape_cast %418 : vector<1x128xf32> to vector<128xf32>
      %420 = vector.shape_cast %419 : vector<128xf32> to vector<1x1x128xf32>
      %421 = vector.broadcast %420 : vector<1x1x128xf32> to vector<8x16x128xf32>
      %422 = arith.mulf %417, %421 : vector<8x16x128xf32>
      %423 = arith.addf %414, %422 : vector<8x16x128xf32>
      %c3_i32_125 = arith.constant 3 : i32
      %424 = arith.addi %278, %c3_i32_125 : i32
      %425 = arith.index_cast %424 : i32 to index
      %c1_126 = arith.constant 1 : index
      %c0_127 = arith.constant 0 : index
      %426 = vector.load %arg9[%425, %c1_126, %c0_127] : memref<20x20x128xf32, #tpu.memory_space<vmem>>, vector<8x16x128xf32>
      %c16_128 = arith.constant 16 : index
      %c0_129 = arith.constant 0 : index
      %427 = vector.load %arg5[%c16_128, %c0_129] : memref<25x128xf32, #tpu.memory_space<vmem>>, vector<1x128xf32>
      %428 = vector.shape_cast %427 : vector<1x128xf32> to vector<128xf32>
      %429 = vector.shape_cast %428 : vector<128xf32> to vector<1x1x128xf32>
      %430 = vector.broadcast %429 : vector<1x1x128xf32> to vector<8x16x128xf32>
      %431 = arith.mulf %426, %430 : vector<8x16x128xf32>
      %432 = arith.addf %423, %431 : vector<8x16x128xf32>
      %c3_i32_130 = arith.constant 3 : i32
      %433 = arith.addi %278, %c3_i32_130 : i32
      %434 = arith.index_cast %433 : i32 to index
      %c2_131 = arith.constant 2 : index
      %c0_132 = arith.constant 0 : index
      %435 = vector.load %arg9[%434, %c2_131, %c0_132] : memref<20x20x128xf32, #tpu.memory_space<vmem>>, vector<8x16x128xf32>
      %c17_133 = arith.constant 17 : index
      %c0_134 = arith.constant 0 : index
      %436 = vector.load %arg5[%c17_133, %c0_134] : memref<25x128xf32, #tpu.memory_space<vmem>>, vector<1x128xf32>
      %437 = vector.shape_cast %436 : vector<1x128xf32> to vector<128xf32>
      %438 = vector.shape_cast %437 : vector<128xf32> to vector<1x1x128xf32>
      %439 = vector.broadcast %438 : vector<1x1x128xf32> to vector<8x16x128xf32>
      %440 = arith.mulf %435, %439 : vector<8x16x128xf32>
      %441 = arith.addf %432, %440 : vector<8x16x128xf32>
      %c3_i32_135 = arith.constant 3 : i32
      %442 = arith.addi %278, %c3_i32_135 : i32
      %443 = arith.index_cast %442 : i32 to index
      %c3_136 = arith.constant 3 : index
      %c0_137 = arith.constant 0 : index
      %444 = vector.load %arg9[%443, %c3_136, %c0_137] : memref<20x20x128xf32, #tpu.memory_space<vmem>>, vector<8x16x128xf32>
      %c18_138 = arith.constant 18 : index
      %c0_139 = arith.constant 0 : index
      %445 = vector.load %arg5[%c18_138, %c0_139] : memref<25x128xf32, #tpu.memory_space<vmem>>, vector<1x128xf32>
      %446 = vector.shape_cast %445 : vector<1x128xf32> to vector<128xf32>
      %447 = vector.shape_cast %446 : vector<128xf32> to vector<1x1x128xf32>
      %448 = vector.broadcast %447 : vector<1x1x128xf32> to vector<8x16x128xf32>
      %449 = arith.mulf %444, %448 : vector<8x16x128xf32>
      %450 = arith.addf %441, %449 : vector<8x16x128xf32>
      %c3_i32_140 = arith.constant 3 : i32
      %451 = arith.addi %278, %c3_i32_140 : i32
      %452 = arith.index_cast %451 : i32 to index
      %c4_141 = arith.constant 4 : index
      %c0_142 = arith.constant 0 : index
      %453 = vector.load %arg9[%452, %c4_141, %c0_142] : memref<20x20x128xf32, #tpu.memory_space<vmem>>, vector<8x16x128xf32>
      %c19_143 = arith.constant 19 : index
      %c0_144 = arith.constant 0 : index
      %454 = vector.load %arg5[%c19_143, %c0_144] : memref<25x128xf32, #tpu.memory_space<vmem>>, vector<1x128xf32>
      %455 = vector.shape_cast %454 : vector<1x128xf32> to vector<128xf32>
      %456 = vector.shape_cast %455 : vector<128xf32> to vector<1x1x128xf32>
      %457 = vector.broadcast %456 : vector<1x1x128xf32> to vector<8x16x128xf32>
      %458 = arith.mulf %453, %457 : vector<8x16x128xf32>
      %459 = arith.addf %450, %458 : vector<8x16x128xf32>
      %c4_i32 = arith.constant 4 : i32
      %460 = arith.addi %278, %c4_i32 : i32
      %461 = arith.index_cast %460 : i32 to index
      %c0_145 = arith.constant 0 : index
      %c0_146 = arith.constant 0 : index
      %462 = vector.load %arg9[%461, %c0_145, %c0_146] : memref<20x20x128xf32, #tpu.memory_space<vmem>>, vector<8x16x128xf32>
      %c20_147 = arith.constant 20 : index
      %c0_148 = arith.constant 0 : index
      %463 = vector.load %arg5[%c20_147, %c0_148] : memref<25x128xf32, #tpu.memory_space<vmem>>, vector<1x128xf32>
      %464 = vector.shape_cast %463 : vector<1x128xf32> to vector<128xf32>
      %465 = vector.shape_cast %464 : vector<128xf32> to vector<1x1x128xf32>
      %466 = vector.broadcast %465 : vector<1x1x128xf32> to vector<8x16x128xf32>
      %467 = arith.mulf %462, %466 : vector<8x16x128xf32>
      %468 = arith.addf %459, %467 : vector<8x16x128xf32>
      %c4_i32_149 = arith.constant 4 : i32
      %469 = arith.addi %278, %c4_i32_149 : i32
      %470 = arith.index_cast %469 : i32 to index
      %c1_150 = arith.constant 1 : index
      %c0_151 = arith.constant 0 : index
      %471 = vector.load %arg9[%470, %c1_150, %c0_151] : memref<20x20x128xf32, #tpu.memory_space<vmem>>, vector<8x16x128xf32>
      %c21_152 = arith.constant 21 : index
      %c0_153 = arith.constant 0 : index
      %472 = vector.load %arg5[%c21_152, %c0_153] : memref<25x128xf32, #tpu.memory_space<vmem>>, vector<1x128xf32>
      %473 = vector.shape_cast %472 : vector<1x128xf32> to vector<128xf32>
      %474 = vector.shape_cast %473 : vector<128xf32> to vector<1x1x128xf32>
      %475 = vector.broadcast %474 : vector<1x1x128xf32> to vector<8x16x128xf32>
      %476 = arith.mulf %471, %475 : vector<8x16x128xf32>
      %477 = arith.addf %468, %476 : vector<8x16x128xf32>
      %c4_i32_154 = arith.constant 4 : i32
      %478 = arith.addi %278, %c4_i32_154 : i32
      %479 = arith.index_cast %478 : i32 to index
      %c2_155 = arith.constant 2 : index
      %c0_156 = arith.constant 0 : index
      %480 = vector.load %arg9[%479, %c2_155, %c0_156] : memref<20x20x128xf32, #tpu.memory_space<vmem>>, vector<8x16x128xf32>
      %c22_157 = arith.constant 22 : index
      %c0_158 = arith.constant 0 : index
      %481 = vector.load %arg5[%c22_157, %c0_158] : memref<25x128xf32, #tpu.memory_space<vmem>>, vector<1x128xf32>
      %482 = vector.shape_cast %481 : vector<1x128xf32> to vector<128xf32>
      %483 = vector.shape_cast %482 : vector<128xf32> to vector<1x1x128xf32>
      %484 = vector.broadcast %483 : vector<1x1x128xf32> to vector<8x16x128xf32>
      %485 = arith.mulf %480, %484 : vector<8x16x128xf32>
      %486 = arith.addf %477, %485 : vector<8x16x128xf32>
      %c4_i32_159 = arith.constant 4 : i32
      %487 = arith.addi %278, %c4_i32_159 : i32
      %488 = arith.index_cast %487 : i32 to index
      %c3_160 = arith.constant 3 : index
      %c0_161 = arith.constant 0 : index
      %489 = vector.load %arg9[%488, %c3_160, %c0_161] : memref<20x20x128xf32, #tpu.memory_space<vmem>>, vector<8x16x128xf32>
      %c23_162 = arith.constant 23 : index
      %c0_163 = arith.constant 0 : index
      %490 = vector.load %arg5[%c23_162, %c0_163] : memref<25x128xf32, #tpu.memory_space<vmem>>, vector<1x128xf32>
      %491 = vector.shape_cast %490 : vector<1x128xf32> to vector<128xf32>
      %492 = vector.shape_cast %491 : vector<128xf32> to vector<1x1x128xf32>
      %493 = vector.broadcast %492 : vector<1x1x128xf32> to vector<8x16x128xf32>
      %494 = arith.mulf %489, %493 : vector<8x16x128xf32>
      %495 = arith.addf %486, %494 : vector<8x16x128xf32>
      %c4_i32_164 = arith.constant 4 : i32
      %496 = arith.addi %278, %c4_i32_164 : i32
      %497 = arith.index_cast %496 : i32 to index
      %c4_165 = arith.constant 4 : index
      %c0_166 = arith.constant 0 : index
      %498 = vector.load %arg9[%497, %c4_165, %c0_166] : memref<20x20x128xf32, #tpu.memory_space<vmem>>, vector<8x16x128xf32>
      %c24_167 = arith.constant 24 : index
      %c0_168 = arith.constant 0 : index
      %499 = vector.load %arg5[%c24_167, %c0_168] : memref<25x128xf32, #tpu.memory_space<vmem>>, vector<1x128xf32>
      %500 = vector.shape_cast %499 : vector<1x128xf32> to vector<128xf32>
      %501 = vector.shape_cast %500 : vector<128xf32> to vector<1x1x128xf32>
      %502 = vector.broadcast %501 : vector<1x1x128xf32> to vector<8x16x128xf32>
      %503 = arith.mulf %498, %502 : vector<8x16x128xf32>
      %504 = arith.addf %495, %503 : vector<8x16x128xf32>
      %cst_169 = arith.constant dense<0.000000e+00> : vector<8x16xf32>
      %505 = vector.multi_reduction <add>, %504, %cst_169 [2] : vector<8x16x128xf32> to vector<8x16xf32>
      %c51 = arith.constant 51 : index
      %506 = memref.load %arg2[%c51] : memref<52xf32, #tpu.memory_space<smem>>
      %507 = vector.broadcast %506 : f32 to vector<8x16xf32>
      %508 = arith.addf %505, %507 : vector<8x16xf32>
      %cst_170 = arith.constant 0.000000e+00 : f32
      %509 = vector.broadcast %cst_170 : f32 to vector<8x16xf32>
      %510 = arith.maximumf %508, %509 : vector<8x16xf32>
      %511 = arith.index_cast %278 : i32 to index
      %c0_171 = arith.constant 0 : index
      %512 = vector.load %arg7[%511, %c0_171] : memref<16x16xf32, #tpu.memory_space<vmem>>, vector<8x16xf32>
      %513 = arith.addf %510, %512 : vector<8x16xf32>
      %c0_172 = arith.constant 0 : index
      %514 = arith.index_cast %278 : i32 to index
      %c0_173 = arith.constant 0 : index
      %515 = vector.load %arg6[%c0_172, %514, %c0_173] : memref<1x16x16xf32, #tpu.memory_space<vmem>>, vector<1x8x16xf32>
      %516 = vector.shape_cast %515 : vector<1x8x16xf32> to vector<8x16xf32>
      %517 = vector.shape_cast %513 : vector<8x16xf32> to vector<1x8x16xf32>
      tpu.vector_store %arg6[%c0_172, %514, %c0_173], %517 {strides = array<i32>} : memref<1x16x16xf32, #tpu.memory_space<vmem>>, vector<1x8x16xf32>,
    }
    %c2_i32_44 = arith.constant 2 : i32
    return
  }
  func.func @transform_0(%arg0: i32) -> (i32, i32, i32, i32) {
    %c0_i32 = arith.constant 0 : i32
    %c0_i32_0 = arith.constant 0 : i32
    %c0_i32_1 = arith.constant 0 : i32
    %c0_i32_2 = arith.constant 0 : i32
    return %arg0, %c0_i32, %c0_i32_0, %c0_i32_1 : i32, i32, i32, i32
  }
  func.func @transform_1(%arg0: i32) -> i32 {
    %c0_i32 = arith.constant 0 : i32
    %c0_i32_0 = arith.constant 0 : i32
    return %c0_i32 : i32
  }
  func.func @transform_2(%arg0: i32) -> (i32, i32) {
    %c0_i32 = arith.constant 0 : i32
    %c0_i32_0 = arith.constant 0 : i32
    %c0_i32_1 = arith.constant 0 : i32
    return %c0_i32, %c0_i32_0 : i32, i32
  }
  func.func @transform_3(%arg0: i32) -> (i32, i32) {
    %c0_i32 = arith.constant 0 : i32
    %c0_i32_0 = arith.constant 0 : i32
    %c0_i32_1 = arith.constant 0 : i32
    return %c0_i32, %c0_i32_0 : i32, i32
  }
  func.func @transform_4(%arg0: i32) -> (i32, i32) {
    %c0_i32 = arith.constant 0 : i32
    %c0_i32_0 = arith.constant 0 : i32
    %c0_i32_1 = arith.constant 0 : i32
    return %c0_i32, %c0_i32_0 : i32, i32
  }
  func.func @transform_5(%arg0: i32) -> (i32, i32, i32) {
    %c0_i32 = arith.constant 0 : i32
    %c0_i32_0 = arith.constant 0 : i32
    %c0_i32_1 = arith.constant 0 : i32
    return %arg0, %c0_i32, %c0_i32_0 : i32, i32, i32
  }
}

</mosaic_0001>

<llo_original>
// kernel: conv_filter_forward.1
$region0: #{conv_filter_forward.1}
  #allocation0 [shape = 'u32[]', space=smem, size = 0x4, offset = 0x4, fixed_abs, tag = 'smem constant byte address 0x4 - core index']
  #allocation1 [shape = 'u32[144,128]{1,0:T(1,128)}', space=vmem, size = 0x12000, scoped, tag = 'internal scratch']
  #allocation2 [shape = 'f32[16,16]{1,0:T(8,128)}', space=vmem, size = 0x2000, scoped, tag = 'scratch operand']
  #allocation3 [shape = 'f32[20,20,128]{2,1,0:T(8,128)}', space=vmem, size = 0x3c000, scoped, tag = 'scratch operand']
  #allocation4 [shape = 'f32[20,20,128]{2,1,0:T(8,128)}', space=vmem, size = 0x3c000, scoped, tag = 'scratch operand']
  %s0 = inlined_call_operand.vmem [shape: f32[2,2,20,20], index: 0, kind: input, shape index: {}]
  %s1 = inlined_call_operand.vmem [shape: f32[52], index: 1, kind: input, shape index: {}]
  %s2 = inlined_call_operand.vmem [shape: f32[25,128], index: 2, kind: input, shape index: {}]
  %s3 = inlined_call_operand.vmem [shape: f32[1,128], index: 3, kind: input, shape index: {}]
  %s4 = inlined_call_operand.vmem [shape: f32[25,128], index: 4, kind: input, shape index: {}]
  %s5 = inlined_call_operand.vmem [shape: f32[2,16,16], index: 5, kind: output, shape index: {}]
  %s6 = sld [smem:[#allocation0]]
  $region71: #{conv_filter_forward.1} parent=0
    _
  %s8 = ssub.s32 1, %s6
  %s9 = scalar_select 0, %s8, %s6
  $region1: #{conv_filter_forward.1} parent=0
    #allocation5 [shape = 'u8[512]{0}', space=smem, size = 0x200, scoped, tag = 'input window, operand 1, single buffered']
    #allocation6 [shape = 's32[2]{0}', space=sflag, size = 0x8, scoped, tag = 'scoped memory for conv_filter_forward.1']
    %10 = vsyncpa [#allocation6], 0
    loop: start=0, step=1, limit=4
    $region2: #{conv_filter_forward.1} parent=1 // loop_pre_header
      _
    $region3: #{conv_filter_forward.1} parent=1 // loop_header
      %s12 = sphi 0, %s16
      %p13 = scmp.ge.s32.totalorder %s12, 4
      %s22 = sphi 0, %s24
      %s25 = sphi 0, %s22
      %s26 = sphi 0, %s25
      %s42 = sphi 0, %s26
      %s46 = sphi 0, %s46
      %s48 = sphi 0, %s46
      %s49 = sphi 0, %s48
      %s63 = sphi 0, %s49
      %s67 = sphi 0, %s67
      %s69 = sphi 0, %s67
      %s70 = sphi 0, %s69
      %s84 = sphi 0, %s70
      %s88 = sphi 0, %s88
      %s90 = sphi 0, %s88
      %s91 = sphi 0, %s90
      %s105 = sphi 0, %s91
      %s109 = sphi 0, %s109
      %s111 = sphi 0, %s109
      %s112 = sphi 0, %s111
      %s126 = sphi 0, %s112
      %s132 = sphi 0, %s134
      %s135 = sphi 0, %s132
      %s136 = sphi 0, %s135
      %s152 = sphi 0, %s136
    $region4: #{conv_filter_forward.1} parent=1 // loop_header_branch
      %15 = sbr.rel (%p13) target = $region8
    $region5: #{conv_filter_forward.1} parent=1 // loop_body
      %s17 = ssub.s32 %s12, 1
      %s18 = ssub.s32 %s12, 2
      %s19 = sadd.s32 %s12, 1
      %s20 = ssub.s32 %s12, %s19
      %p21 = scmp.eq.s32.totalorder %s20, 0
      %s23 = sadd.s32 %s22, 1
      %s24 = scalar_select %p21, %s22, %s23
      %p27 = pneg %p21
      %p28 = scmp.eq.s32.totalorder %s12, 1
      %p29 = por %p27, %p28
      %p30 = scmp.ne.s32.totalorder %s22, %s25
      %p31 = scmp.eq.s32.totalorder %s12, 0
      %p32 = por %p30, %p31
      %p33 = scmp.ne.s32.totalorder %s22, %s25
      %p34 = scmp.eq.s32.totalorder %s17, 1
      %p35 = por %p33, %p34
      %p36 = scmp.ne.s32.totalorder %s25, %s26
      %p37 = scmp.eq.s32.totalorder %s17, 0
      %p38 = por %p36, %p37
      %p39 = scmp.ne.s32.totalorder %s25, %s26
      %p40 = scmp.eq.s32.totalorder %s18, 1
      %p41 = por %p39, %p40
      %p43 = scmp.ne.s32.totalorder %s26, %s42
      %p44 = scmp.eq.s32.totalorder %s18, 0
      %p45 = por %p43, %p44
      %s47 = sadd.s32 %s46, 1
      %p50 = scmp.eq.s32.totalorder %s12, 1
      %p51 = scmp.ne.s32.totalorder %s46, %s48
      %p52 = scmp.eq.s32.totalorder %s12, 0
      %p53 = por %p51, %p52
      %p54 = scmp.ne.s32.totalorder %s46, %s48
      %p55 = scmp.eq.s32.totalorder %s17, 1
      %p56 = por %p54, %p55
      %p57 = scmp.ne.s32.totalorder %s48, %s49
      %p58 = scmp.eq.s32.totalorder %s17, 0
      %p59 = por %p57, %p58
      %p60 = scmp.ne.s32.totalorder %s48, %s49
      %p61 = scmp.eq.s32.totalorder %s18, 1
      %p62 = por %p60, %p61
      %p64 = scmp.ne.s32.totalorder %s49, %s63
      %p65 = scmp.eq.s32.totalorder %s18, 0
      %p66 = por %p64, %p65
      %s68 = sadd.s32 %s67, 1
      %p71 = scmp.eq.s32.totalorder %s12, 1
      %p72 = scmp.ne.s32.totalorder %s67, %s69
      %p73 = scmp.eq.s32.totalorder %s12, 0
      %p74 = por %p72, %p73
      %p75 = scmp.ne.s32.totalorder %s67, %s69
      %p76 = scmp.eq.s32.totalorder %s17, 1
      %p77 = por %p75, %p76
      %p78 = scmp.ne.s32.totalorder %s69, %s70
      %p79 = scmp.eq.s32.totalorder %s17, 0
      %p80 = por %p78, %p79
      %p81 = scmp.ne.s32.totalorder %s69, %s70
      %p82 = scmp.eq.s32.totalorder %s18, 1
      %p83 = por %p81, %p82
      %p85 = scmp.ne.s32.totalorder %s70, %s84
      %p86 = scmp.eq.s32.totalorder %s18, 0
      %p87 = por %p85, %p86
      %s89 = sadd.s32 %s88, 1
      %p92 = scmp.eq.s32.totalorder %s12, 1
      %p93 = scmp.ne.s32.totalorder %s88, %s90
      %p94 = scmp.eq.s32.totalorder %s12, 0
      %p95 = por %p93, %p94
      %p96 = scmp.ne.s32.totalorder %s88, %s90
      %p97 = scmp.eq.s32.totalorder %s17, 1
      %p98 = por %p96, %p97
      %p99 = scmp.ne.s32.totalorder %s90, %s91
      %p100 = scmp.eq.s32.totalorder %s17, 0
      %p101 = por %p99, %p100
      %p102 = scmp.ne.s32.totalorder %s90, %s91
      %p103 = scmp.eq.s32.totalorder %s18, 1
      %p104 = por %p102, %p103
      %p106 = scmp.ne.s32.totalorder %s91, %s105
      %p107 = scmp.eq.s32.totalorder %s18, 0
      %p108 = por %p106, %p107
      %s110 = sadd.s32 %s109, 1
      %p113 = scmp.eq.s32.totalorder %s12, 1
      %p114 = scmp.ne.s32.totalorder %s109, %s111
      %p115 = scmp.eq.s32.totalorder %s12, 0
      %p116 = por %p114, %p115
      %p117 = scmp.ne.s32.totalorder %s109, %s111
      %p118 = scmp.eq.s32.totalorder %s17, 1
      %p119 = por %p117, %p118
      %p120 = scmp.ne.s32.totalorder %s111, %s112
      %p121 = scmp.eq.s32.totalorder %s17, 0
      %p122 = por %p120, %p121
      %p123 = scmp.ne.s32.totalorder %s111, %s112
      %p124 = scmp.eq.s32.totalorder %s18, 1
      %p125 = por %p123, %p124
      %p127 = scmp.ne.s32.totalorder %s112, %s126
      %p128 = scmp.eq.s32.totalorder %s18, 0
      %p129 = por %p127, %p128
      %s130 = ssub.s32 %s12, %s19
      %p131 = scmp.eq.s32.totalorder %s130, 0
      %s133 = sadd.s32 %s132, 1
      %s134 = scalar_select %p131, %s132, %s133
      %p137 = pneg %p131
      %p138 = scmp.eq.s32.totalorder %s12, 1
      %p139 = por %p137, %p138
      %p140 = scmp.ne.s32.totalorder %s132, %s135
      %p141 = scmp.eq.s32.totalorder %s12, 0
      %p142 = por %p140, %p141
      %p143 = scmp.ne.s32.totalorder %s132, %s135
      %p144 = scmp.eq.s32.totalorder %s17, 1
      %p145 = por %p143, %p144
      %p146 = scmp.ne.s32.totalorder %s135, %s136
      %p147 = scmp.eq.s32.totalorder %s17, 0
      %p148 = por %p146, %p147
      %p149 = scmp.ne.s32.totalorder %s135, %s136
      %p150 = scmp.eq.s32.totalorder %s18, 1
      %p151 = por %p149, %p150
      %p153 = scmp.ne.s32.totalorder %s136, %s152
      %p154 = scmp.eq.s32.totalorder %s18, 0
      %p155 = por %p153, %p154
      %p156 = scmp.le.s32.totalorder 1, %s12
      %p157 = scmp.lt.s32.totalorder %s12, 3
      %p158 = pnand %p156, %p157
      %p159 = pneg %p158
      // Predicated region
      $region9: #{conv_filter_forward.1} parent=5 // pred_check
        _
      $region10: #{conv_filter_forward.1} parent=5 // pred_check_branch
        %161 = sbr.rel (%p158) target = $region12
      $region11: #{conv_filter_forward.1} parent=5 // pred_region
        %s162 = ssub.s32 %s12, 1
        // Predicated region
        $region13: #{conv_filter_forward.1} parent=11 // pred_check
          %p163 = pneg %p59
        $region14: #{conv_filter_forward.1} parent=11 // pred_check_branch
          %165 = sbr.rel (%p163) target = $region16
        $region15: #{conv_filter_forward.1} parent=11 // pred_region
          %s167 = ssub.s32 16, 16
          %168 = vsyncadd [#allocation6], %s167
          %s170 = sshll.u32 %s1, 4
          %s171 = int_to_ptr.vmem [resolvable:$true] %s170
          %173 = dma.vmem_to_smem %s171, 16, [#allocation5], [#allocation6]
        $region16: #{conv_filter_forward.1} parent=11 // pred_fallthru
          _
        // Predicated region
        $region17: #{conv_filter_forward.1} parent=11 // pred_check
          %p174 = pneg %p80
        $region18: #{conv_filter_forward.1} parent=11 // pred_check_branch
          %176 = sbr.rel (%p174) target = $region20
        $region19: #{conv_filter_forward.1} parent=11 // pred_region
          _
        $region20: #{conv_filter_forward.1} parent=11 // pred_fallthru
          _
        // Predicated region
        $region21: #{conv_filter_forward.1} parent=11 // pred_check
          %p177 = pneg %p101
        $region22: #{conv_filter_forward.1} parent=11 // pred_check_branch
          %179 = sbr.rel (%p177) target = $region24
        $region23: #{conv_filter_forward.1} parent=11 // pred_region
          _
        $region24: #{conv_filter_forward.1} parent=11 // pred_fallthru
          _
        // Predicated region
        $region25: #{conv_filter_forward.1} parent=11 // pred_check
          %p180 = pneg %p122
        $region26: #{conv_filter_forward.1} parent=11 // pred_check_branch
          %182 = sbr.rel (%p180) target = $region28
        $region27: #{conv_filter_forward.1} parent=11 // pred_region
          _
        $region28: #{conv_filter_forward.1} parent=11 // pred_fallthru
          _
      $region12: #{conv_filter_forward.1} parent=5 // pred_fallthru
        _
      %p183 = scmp.lt.s32.totalorder %s12, 2
      // Predicated region
      $region29: #{conv_filter_forward.1} parent=5 // pred_check
        %p184 = pneg %p183
      $region30: #{conv_filter_forward.1} parent=5 // pred_check_branch
        %186 = sbr.rel (%p184) target = $region32
      $region31: #{conv_filter_forward.1} parent=5 // pred_region
        // Predicated region
        $region33: #{conv_filter_forward.1} parent=31 // pred_check
          %p187 = pneg %p32
        $region34: #{conv_filter_forward.1} parent=31 // pred_check_branch
          %189 = sbr.rel (%p187) target = $region36
        $region35: #{conv_filter_forward.1} parent=31 // pred_region
          %p190 = scmp.lt.s32.totalorder %s12, 1
          %s191 = scalar_select %p190, %s12, 1
          %s192 = smul.addr %s191, 6
          %s193 = smul.addr %s192, 8
          %s194 = scalar_lea.vmem %s0, %s193
        $region36: #{conv_filter_forward.1} parent=31 // pred_fallthru
          _
      $region32: #{conv_filter_forward.1} parent=5 // pred_fallthru
        _
      %p195 = scmp.le.s32.totalorder 1, %s12
      %p196 = scmp.lt.s32.totalorder %s12, 3
      %p197 = pnand %p195, %p196
      %p198 = pneg %p197
      // Predicated region
      $region37: #{conv_filter_forward.1} parent=5 // pred_check
        _
      $region38: #{conv_filter_forward.1} parent=5 // pred_check_branch
        %200 = sbr.rel (%p197) target = $region40
      $region39: #{conv_filter_forward.1} parent=5 // pred_region
        %s201 = ssub.s32 %s12, 1
        // Predicated region
        $region41: #{conv_filter_forward.1} parent=39 // pred_check
          %p202 = pneg %p59
        $region42: #{conv_filter_forward.1} parent=39 // pred_check_branch
          %204 = sbr.rel (%p202) target = $region44
        $region43: #{conv_filter_forward.1} parent=39 // pred_region
          %205 = dma.done [#allocation6], 16
        $region44: #{conv_filter_forward.1} parent=39 // pred_fallthru
          _
        %206 = sfence
        %p207 = scmp.lt.s32.totalorder %s17, 1
        %s208 = scalar_select %p207, %s17, 1
        %s209 = smul.addr %s208, 6
        %s210 = smul.addr %s209, 8
        %s211 = scalar_lea.vmem %s0, %s210
        %p212 = pneg %p38
        %p213 = pneg %p35
        %p214 = pneg %p59
        %p215 = pneg %p56
        %p216 = pneg %p80
        %p217 = pneg %p77
        %p218 = pneg %p101
        %p219 = pneg %p98
        %p220 = pneg %p122
        %p221 = pneg %p119
        %p222 = pneg %p148
        %p223 = pneg %p145
        %p224 = scmp.lt.s32.totalorder %s17, 1
        %s225 = scalar_select %p224, %s17, 1
        %s226 = smul.addr %s225, 2
        %s227 = smul.addr %s226, 8
        %s228 = scalar_lea.vmem %s5, %s227
        %p229 = scmp.lt.s32.totalorder %s17, 1
        %s230 = scalar_select %p229, %s17, 1
        %s231 = smul.addr %s230, 6
        %s232 = smul.addr %s231, 8
        %s233 = scalar_lea.vmem %s0, %s232
        %p234 = scmp.lt.s32.totalorder %s17, 1
        %s235 = scalar_select %p234, %s17, 1
        %s236 = smul.addr %s235, 2
        %s237 = smul.addr %s236, 8
        %s238 = scalar_lea.vmem %s5, %s237
        %239 = vst [vmem:[#allocation3] sm:$0xff] 0.0
        %240 = vst [vmem:[#allocation3 + $0x8] sm:$0xff] 0.0
        %241 = vst [vmem:[#allocation3 + $0x10] sm:$0xf] 0.0
        %242 = vst [vmem:[#allocation3 + $0x18] sm:$0xff] 0.0
        %243 = vst [vmem:[#allocation3 + $0x20] sm:$0xff] 0.0
        %244 = vst [vmem:[#allocation3 + $0x28] sm:$0xf] 0.0
        %s245 = scalar_lea.vmem [#allocation3], 432
        %246 = vst [vmem:[%s245] sm:$0xff] 0.0
        %247 = vst [vmem:[%s245 + $0x8] sm:$0xff] 0.0
        %248 = vst [vmem:[%s245 + $0x10] sm:$0xf] 0.0
        %249 = vst [vmem:[%s245 + $0x18] sm:$0xff] 0.0
        %250 = vst [vmem:[%s245 + $0x20] sm:$0xff] 0.0
        %251 = vst [vmem:[%s245 + $0x28] sm:$0xf] 0.0
        %s252 = scalar_lea.vmem [#allocation3], 48
        %253 = vst [vmem:[%s252] sm:$0x3] 0.0
        %254 = vst [vmem:[%s252 + $0x18] sm:$0x3] 0.0
        %255 = vst [vmem:[%s252 + $0x30] sm:$0x3] 0.0
        %256 = vst [vmem:[%s252 + $0x48] sm:$0x3] 0.0
        %257 = vst [vmem:[%s252 + $0x60] sm:$0x3] 0.0
        %258 = vst [vmem:[%s252 + $0x78] sm:$0x3] 0.0
        %259 = vst [vmem:[%s252 + $0x90] sm:$0x3] 0.0
        %260 = vst [vmem:[%s252 + $0xa8] sm:$0x3] 0.0
        %261 = vst [vmem:[%s252 + $0xc0] sm:$0x3] 0.0
        %262 = vst [vmem:[%s252 + $0xd8] sm:$0x3] 0.0
        %263 = vst [vmem:[%s252 + $0xf0] sm:$0x3] 0.0
        %264 = vst [vmem:[%s252 + $0x108] sm:$0x3] 0.0
        %265 = vst [vmem:[%s252 + $0x120] sm:$0x3] 0.0
        %266 = vst [vmem:[%s252 + $0x138] sm:$0x3] 0.0
        %267 = vst [vmem:[%s252 + $0x150] sm:$0x3] 0.0
        %268 = vst [vmem:[%s252 + $0x168] sm:$0x3] 0.0
        %269 = vst [vmem:[%s252 + $0x12] sm:$0x3] 0.0
        %270 = vst [vmem:[%s252 + $0x2a] sm:$0x3] 0.0
        %271 = vst [vmem:[%s252 + $0x42] sm:$0x3] 0.0
        %272 = vst [vmem:[%s252 + $0x5a] sm:$0x3] 0.0
        %273 = vst [vmem:[%s252 + $0x72] sm:$0x3] 0.0
        %274 = vst [vmem:[%s252 + $0x8a] sm:$0x3] 0.0
        %275 = vst [vmem:[%s252 + $0xa2] sm:$0x3] 0.0
        %276 = vst [vmem:[%s252 + $0xba] sm:$0x3] 0.0
        %277 = vst [vmem:[%s252 + $0xd2] sm:$0x3] 0.0
        %278 = vst [vmem:[%s252 + $0xea] sm:$0x3] 0.0
        %279 = vst [vmem:[%s252 + $0x102] sm:$0x3] 0.0
        %280 = vst [vmem:[%s252 + $0x11a] sm:$0x3] 0.0
        %281 = vst [vmem:[%s252 + $0x132] sm:$0x3] 0.0
        %282 = vst [vmem:[%s252 + $0x14a] sm:$0x3] 0.0
        %283 = vst [vmem:[%s252 + $0x162] sm:$0x3] 0.0
        %284 = vst [vmem:[%s252 + $0x17a] sm:$0x3] 0.0
        %285 = vst [vmem:[#allocation4] sm:$0xff] 0.0
        %286 = vst [vmem:[#allocation4 + $0x8] sm:$0xff] 0.0
        %287 = vst [vmem:[#allocation4 + $0x10] sm:$0xf] 0.0
        %288 = vst [vmem:[#allocation4 + $0x18] sm:$0xff] 0.0
        %289 = vst [vmem:[#allocation4 + $0x20] sm:$0xff] 0.0
        %290 = vst [vmem:[#allocation4 + $0x28] sm:$0xf] 0.0
        %s291 = scalar_lea.vmem [#allocation4], 432
        %292 = vst [vmem:[%s291] sm:$0xff] 0.0
        %293 = vst [vmem:[%s291 + $0x8] sm:$0xff] 0.0
        %294 = vst [vmem:[%s291 + $0x10] sm:$0xf] 0.0
        %295 = vst [vmem:[%s291 + $0x18] sm:$0xff] 0.0
        %296 = vst [vmem:[%s291 + $0x20] sm:$0xff] 0.0
        %297 = vst [vmem:[%s291 + $0x28] sm:$0xf] 0.0
        %s298 = scalar_lea.vmem [#allocation4], 48
        %299 = vst [vmem:[%s298] sm:$0x3] 0.0
        %300 = vst [vmem:[%s298 + $0x18] sm:$0x3] 0.0
        %301 = vst [vmem:[%s298 + $0x30] sm:$0x3] 0.0
        %302 = vst [vmem:[%s298 + $0x48] sm:$0x3] 0.0
        %303 = vst [vmem:[%s298 + $0x60] sm:$0x3] 0.0
        %304 = vst [vmem:[%s298 + $0x78] sm:$0x3] 0.0
        %305 = vst [vmem:[%s298 + $0x90] sm:$0x3] 0.0
        %306 = vst [vmem:[%s298 + $0xa8] sm:$0x3] 0.0
        %307 = vst [vmem:[%s298 + $0xc0] sm:$0x3] 0.0
        %308 = vst [vmem:[%s298 + $0xd8] sm:$0x3] 0.0
        %309 = vst [vmem:[%s298 + $0xf0] sm:$0x3] 0.0
        %310 = vst [vmem:[%s298 + $0x108] sm:$0x3] 0.0
        %311 = vst [vmem:[%s298 + $0x120] sm:$0x3] 0.0
        %312 = vst [vmem:[%s298 + $0x138] sm:$0x3] 0.0
        %313 = vst [vmem:[%s298 + $0x150] sm:$0x3] 0.0
        %314 = vst [vmem:[%s298 + $0x168] sm:$0x3] 0.0
        %315 = vst [vmem:[%s298 + $0x12] sm:$0x3] 0.0
        %316 = vst [vmem:[%s298 + $0x2a] sm:$0x3] 0.0
        %317 = vst [vmem:[%s298 + $0x42] sm:$0x3] 0.0
        %318 = vst [vmem:[%s298 + $0x5a] sm:$0x3] 0.0
        %319 = vst [vmem:[%s298 + $0x72] sm:$0x3] 0.0
        %320 = vst [vmem:[%s298 + $0x8a] sm:$0x3] 0.0
        %321 = vst [vmem:[%s298 + $0xa2] sm:$0x3] 0.0
        %322 = vst [vmem:[%s298 + $0xba] sm:$0x3] 0.0
        %323 = vst [vmem:[%s298 + $0xd2] sm:$0x3] 0.0
        %324 = vst [vmem:[%s298 + $0xea] sm:$0x3] 0.0
        %325 = vst [vmem:[%s298 + $0x102] sm:$0x3] 0.0
        %326 = vst [vmem:[%s298 + $0x11a] sm:$0x3] 0.0
        %327 = vst [vmem:[%s298 + $0x132] sm:$0x3] 0.0
        %328 = vst [vmem:[%s298 + $0x14a] sm:$0x3] 0.0
        %329 = vst [vmem:[%s298 + $0x162] sm:$0x3] 0.0
        %330 = vst [vmem:[%s298 + $0x17a] sm:$0x3] 0.0
        %v331 = vld [vmem:[%s233] sm:$0xff]
        %v332 = vld [vmem:[%s233 + $0x8] sm:$0xff]
        %v333 = vld [vmem:[%s233 + $0x10] sm:$0xf]
        %s334 = scalar_lea.vmem %s233, 24
        %v335 = vld [vmem:[%s334] sm:$0xff]
        %v336 = vld [vmem:[%s334 + $0x8] sm:$0xff]
        %v337 = vld [vmem:[%s334 + $0x10] sm:$0xf]
        %s338 = sld [smem:[#allocation5]]
        %v339 = vstv %s338
        %v340 = vmul.f32 %v339, %v331
        %v341 = vmul.f32 %v339, %v332
        %v342 = vadd.f32 %v340, 0.0
        %v343 = vadd.f32 %v341, 0.0
        %s344 = sld [smem:[#allocation5 + $0x1]]
        %v345 = vstv %s344
        %v346 = vmul.f32 %v345, %v335
        %v347 = vmul.f32 %v345, %v336
        %v348 = vadd.f32 %v342, %v346
        %v349 = vadd.f32 %v343, %v347
        %s350 = sld [smem:[#allocation5 + $0x2]]
        %v351 = vstv %s350
        %v352 = vmul.f32 %v351, %v331
        %v353 = vmul.f32 %v351, %v332
        %356 = vrot.lane.b32.xlu0 %v352, 127
        %v357 = vpop.permute.xlu0 %356
        %358 = vrot.lane.b32.xlu0 %v353, 127
        %v359 = vpop.permute.xlu0 %358
        %v362 = vadd.f32 %v348, %v357
        %v363 = vadd.f32 %v349, %v359
        %s364 = sld [smem:[#allocation5 + $0x3]]
        %v365 = vstv %s364
        %v366 = vmul.f32 %v365, %v335
        %v367 = vmul.f32 %v365, %v336
        %370 = vrot.lane.b32.xlu0 %v366, 127
        %v371 = vpop.permute.xlu0 %370
        %372 = vrot.lane.b32.xlu0 %v367, 127
        %v373 = vpop.permute.xlu0 %372
        %v376 = vadd.f32 %v362, %v371
        %v377 = vadd.f32 %v363, %v373
        %s378 = sld [smem:[#allocation5 + $0x4]]
        %v379 = vstv %s378
        %v380 = vmul.f32 %v379, %v331
        %v381 = vmul.f32 %v379, %v332
        %384 = vrot.lane.b32.xlu0 %v380, 126
        %v385 = vpop.permute.xlu0 %384
        %386 = vrot.lane.b32.xlu0 %v381, 126
        %v387 = vpop.permute.xlu0 %386
        %v390 = vadd.f32 %v376, %v385
        %v391 = vadd.f32 %v377, %v387
        %s392 = sld [smem:[#allocation5 + $0x5]]
        %v393 = vstv %s392
        %v394 = vmul.f32 %v393, %v335
        %v395 = vmul.f32 %v393, %v336
        %398 = vrot.lane.b32.xlu0 %v394, 126
        %v399 = vpop.permute.xlu0 %398
        %400 = vrot.lane.b32.xlu0 %v395, 126
        %v401 = vpop.permute.xlu0 %400
        %v404 = vadd.f32 %v390, %v399
        %v405 = vadd.f32 %v391, %v401
        %s406 = sld [smem:[#allocation5 + $0x6]]
        %v407 = vstv %s406
        %v408 = vmul.f32 %v407, %v331
        %v409 = vmul.f32 %v407, %v332
        %412 = vrot.lane.b32.xlu0 %v408, 125
        %v413 = vpop.permute.xlu0 %412
        %414 = vrot.lane.b32.xlu0 %v409, 125
        %v415 = vpop.permute.xlu0 %414
        %v418 = vadd.f32 %v404, %v413
        %v419 = vadd.f32 %v405, %v415
        %s420 = sld [smem:[#allocation5 + $0x7]]
        %v421 = vstv %s420
        %v422 = vmul.f32 %v421, %v335
        %v423 = vmul.f32 %v421, %v336
        %426 = vrot.lane.b32.xlu0 %v422, 125
        %v427 = vpop.permute.xlu0 %426
        %428 = vrot.lane.b32.xlu0 %v423, 125
        %v429 = vpop.permute.xlu0 %428
        %v432 = vadd.f32 %v418, %v427
        %v433 = vadd.f32 %v419, %v429
        %s434 = sld [smem:[#allocation5 + $0x8]]
        %v435 = vstv %s434
        %v436 = vmul.f32 %v435, %v331
        %v437 = vmul.f32 %v435, %v332
        %440 = vrot.lane.b32.xlu0 %v436, 124
        %v441 = vpop.permute.xlu0 %440
        %442 = vrot.lane.b32.xlu0 %v437, 124
        %v443 = vpop.permute.xlu0 %442
        %v446 = vadd.f32 %v432, %v441
        %v447 = vadd.f32 %v433, %v443
        %s448 = sld [smem:[#allocation5 + $0x9]]
        %v449 = vstv %s448
        %v450 = vmul.f32 %v449, %v335
        %v451 = vmul.f32 %v449, %v336
        %454 = vrot.lane.b32.xlu0 %v450, 124
        %v455 = vpop.permute.xlu0 %454
        %456 = vrot.lane.b32.xlu0 %v451, 124
        %v457 = vpop.permute.xlu0 %456
        %v460 = vadd.f32 %v446, %v455
        %v461 = vadd.f32 %v447, %v457
        %s462 = sld [smem:[#allocation5 + $0xa]]
        %v463 = vstv %s462
        %v464 = vmul.f32 %v463, %v331
        %v465 = vmul.f32 %v463, %v332
        %v466 = vmul.f32 %v463, %v333
        %vm470 = vcmask 1046528
        %v471 = vrot.slane %v464, 1
        %v472 = vrot.slane %v465, 1
        %v473 = vsel %vm470, %v471, %v472
        %v474 = vrot.slane %v466, 1
        %v475 = vsel %vm470, %v472, %v474
        %v478 = vadd.f32 %v460, %v473
        %v479 = vadd.f32 %v461, %v475
        %s480 = sld [smem:[#allocation5 + $0xb]]
        %v481 = vstv %s480
        %v482 = vmul.f32 %v481, %v335
        %v483 = vmul.f32 %v481, %v336
        %v484 = vmul.f32 %v481, %v337
        %v488 = vrot.slane %v482, 1
        %v489 = vrot.slane %v483, 1
        %v490 = vsel %vm470, %v488, %v489
        %v491 = vrot.slane %v484, 1
        %v492 = vsel %vm470, %v489, %v491
        %v495 = vadd.f32 %v478, %v490
        %v496 = vadd.f32 %v479, %v492
        %s497 = sld [smem:[#allocation5 + $0xc]]
        %v498 = vstv %s497
        %v499 = vmul.f32 %v498, %v331
        %v500 = vmul.f32 %v498, %v332
        %v501 = vmul.f32 %v498, %v333
        %v505 = vrot.slane %v499, 1
        %v506 = vrot.slane %v500, 1
        %v507 = vsel %vm470, %v505, %v506
        %v508 = vrot.slane %v501, 1
        %v509 = vsel %vm470, %v506, %v508
        %510 = vrot.lane.b32.xlu0 %v507, 127
        %v511 = vpop.permute.xlu0 %510
        %512 = vrot.lane.b32.xlu0 %v509, 127
        %v513 = vpop.permute.xlu0 %512
        %v516 = vadd.f32 %v495, %v511
        %v517 = vadd.f32 %v496, %v513
        %s518 = sld [smem:[#allocation5 + $0xd]]
        %v519 = vstv %s518
        %v520 = vmul.f32 %v519, %v335
        %v521 = vmul.f32 %v519, %v336
        %v522 = vmul.f32 %v519, %v337
        %v526 = vrot.slane %v520, 1
        %v527 = vrot.slane %v521, 1
        %v528 = vsel %vm470, %v526, %v527
        %v529 = vrot.slane %v522, 1
        %v530 = vsel %vm470, %v527, %v529
        %531 = vrot.lane.b32.xlu0 %v528, 127
        %v532 = vpop.permute.xlu0 %531
        %533 = vrot.lane.b32.xlu0 %v530, 127
        %v534 = vpop.permute.xlu0 %533
        %v537 = vadd.f32 %v516, %v532
        %v538 = vadd.f32 %v517, %v534
        %s539 = sld [smem:[#allocation5 + $0xe]]
        %v540 = vstv %s539
        %v541 = vmul.f32 %v540, %v331
        %v542 = vmul.f32 %v540, %v332
        %v543 = vmul.f32 %v540, %v333
        %v547 = vrot.slane %v541, 1
        %v548 = vrot.slane %v542, 1
        %v549 = vsel %vm470, %v547, %v548
        %v550 = vrot.slane %v543, 1
        %v551 = vsel %vm470, %v548, %v550
        %552 = vrot.lane.b32.xlu0 %v549, 126
        %v553 = vpop.permute.xlu0 %552
        %554 = vrot.lane.b32.xlu0 %v551, 126
        %v555 = vpop.permute.xlu0 %554
        %v558 = vadd.f32 %v537, %v553
        %v559 = vadd.f32 %v538, %v555
        %s560 = sld [smem:[#allocation5 + $0xf]]
        %v561 = vstv %s560
        %v562 = vmul.f32 %v561, %v335
        %v563 = vmul.f32 %v561, %v336
        %v564 = vmul.f32 %v561, %v337
        %v568 = vrot.slane %v562, 1
        %v569 = vrot.slane %v563, 1
        %v570 = vsel %vm470, %v568, %v569
        %v571 = vrot.slane %v564, 1
        %v572 = vsel %vm470, %v569, %v571
        %573 = vrot.lane.b32.xlu0 %v570, 126
        %v574 = vpop.permute.xlu0 %573
        %575 = vrot.lane.b32.xlu0 %v572, 126
        %v576 = vpop.permute.xlu0 %575
        %v579 = vadd.f32 %v558, %v574
        %v580 = vadd.f32 %v559, %v576
        %s581 = sld [smem:[#allocation5 + $0x10]]
        %v582 = vstv %s581
        %v583 = vmul.f32 %v582, %v331
        %v584 = vmul.f32 %v582, %v332
        %v585 = vmul.f32 %v582, %v333
        %v589 = vrot.slane %v583, 1
        %v590 = vrot.slane %v584, 1
        %v591 = vsel %vm470, %v589, %v590
        %v592 = vrot.slane %v585, 1
        %v593 = vsel %vm470, %v590, %v592
        %594 = vrot.lane.b32.xlu0 %v591, 125
        %v595 = vpop.permute.xlu0 %594
        %596 = vrot.lane.b32.xlu0 %v593, 125
        %v597 = vpop.permute.xlu0 %596
        %v600 = vadd.f32 %v579, %v595
        %v601 = vadd.f32 %v580, %v597
        %s602 = sld [smem:[#allocation5 + $0x11]]
        %v603 = vstv %s602
        %v604 = vmul.f32 %v603, %v335
        %v605 = vmul.f32 %v603, %v336
        %v606 = vmul.f32 %v603, %v337
        %v610 = vrot.slane %v604, 1
        %v611 = vrot.slane %v605, 1
        %v612 = vsel %vm470, %v610, %v611
        %v613 = vrot.slane %v606, 1
        %v614 = vsel %vm470, %v611, %v613
        %615 = vrot.lane.b32.xlu0 %v612, 125
        %v616 = vpop.permute.xlu0 %615
        %617 = vrot.lane.b32.xlu0 %v614, 125
        %v618 = vpop.permute.xlu0 %617
        %v621 = vadd.f32 %v600, %v616
        %v622 = vadd.f32 %v601, %v618
        %s623 = sld [smem:[#allocation5 + $0x12]]
        %v624 = vstv %s623
        %v625 = vmul.f32 %v624, %v331
        %v626 = vmul.f32 %v624, %v332
        %v627 = vmul.f32 %v624, %v333
        %v631 = vrot.slane %v625, 1
        %v632 = vrot.slane %v626, 1
        %v633 = vsel %vm470, %v631, %v632
        %v634 = vrot.slane %v627, 1
        %v635 = vsel %vm470, %v632, %v634
        %636 = vrot.lane.b32.xlu0 %v633, 124
        %v637 = vpop.permute.xlu0 %636
        %638 = vrot.lane.b32.xlu0 %v635, 124
        %v639 = vpop.permute.xlu0 %638
        %v642 = vadd.f32 %v621, %v637
        %v643 = vadd.f32 %v622, %v639
        %s644 = sld [smem:[#allocation5 + $0x13]]
        %v645 = vstv %s644
        %v646 = vmul.f32 %v645, %v335
        %v647 = vmul.f32 %v645, %v336
        %v648 = vmul.f32 %v645, %v337
        %v652 = vrot.slane %v646, 1
        %v653 = vrot.slane %v647, 1
        %v654 = vsel %vm470, %v652, %v653
        %v655 = vrot.slane %v648, 1
        %v656 = vsel %vm470, %v653, %v655
        %657 = vrot.lane.b32.xlu0 %v654, 124
        %v658 = vpop.permute.xlu0 %657
        %659 = vrot.lane.b32.xlu0 %v656, 124
        %v660 = vpop.permute.xlu0 %659
        %v663 = vadd.f32 %v642, %v658
        %v664 = vadd.f32 %v643, %v660
        %s665 = sld [smem:[#allocation5 + $0x14]]
        %v666 = vstv %s665
        %v667 = vmul.f32 %v666, %v331
        %v668 = vmul.f32 %v666, %v332
        %v669 = vmul.f32 %v666, %v333
        %vm673 = vcmask 1045504
        %v674 = vrot.slane %v667, 2
        %v675 = vrot.slane %v668, 2
        %v676 = vsel %vm673, %v674, %v675
        %v677 = vrot.slane %v669, 2
        %v678 = vsel %vm673, %v675, %v677
        %v681 = vadd.f32 %v663, %v676
        %v682 = vadd.f32 %v664, %v678
        %s683 = sld [smem:[#allocation5 + $0x15]]
        %v684 = vstv %s683
        %v685 = vmul.f32 %v684, %v335
        %v686 = vmul.f32 %v684, %v336
        %v687 = vmul.f32 %v684, %v337
        %v691 = vrot.slane %v685, 2
        %v692 = vrot.slane %v686, 2
        %v693 = vsel %vm673, %v691, %v692
        %v694 = vrot.slane %v687, 2
        %v695 = vsel %vm673, %v692, %v694
        %v698 = vadd.f32 %v681, %v693
        %v699 = vadd.f32 %v682, %v695
        %s700 = sld [smem:[#allocation5 + $0x16]]
        %v701 = vstv %s700
        %v702 = vmul.f32 %v701, %v331
        %v703 = vmul.f32 %v701, %v332
        %v704 = vmul.f32 %v701, %v333
        %v708 = vrot.slane %v702, 2
        %v709 = vrot.slane %v703, 2
        %v710 = vsel %vm673, %v708, %v709
        %v711 = vrot.slane %v704, 2
        %v712 = vsel %vm673, %v709, %v711
        %713 = vrot.lane.b32.xlu0 %v710, 127
        %v714 = vpop.permute.xlu0 %713
        %715 = vrot.lane.b32.xlu0 %v712, 127
        %v716 = vpop.permute.xlu0 %715
        %v719 = vadd.f32 %v698, %v714
        %v720 = vadd.f32 %v699, %v716
        %s721 = sld [smem:[#allocation5 + $0x17]]
        %v722 = vstv %s721
        %v723 = vmul.f32 %v722, %v335
        %v724 = vmul.f32 %v722, %v336
        %v725 = vmul.f32 %v722, %v337
        %v729 = vrot.slane %v723, 2
        %v730 = vrot.slane %v724, 2
        %v731 = vsel %vm673, %v729, %v730
        %v732 = vrot.slane %v725, 2
        %v733 = vsel %vm673, %v730, %v732
        %734 = vrot.lane.b32.xlu0 %v731, 127
        %v735 = vpop.permute.xlu0 %734
        %736 = vrot.lane.b32.xlu0 %v733, 127
        %v737 = vpop.permute.xlu0 %736
        %v740 = vadd.f32 %v719, %v735
        %v741 = vadd.f32 %v720, %v737
        %s742 = sld [smem:[#allocation5 + $0x18]]
        %v743 = vstv %s742
        %v744 = vmul.f32 %v743, %v331
        %v745 = vmul.f32 %v743, %v332
        %v746 = vmul.f32 %v743, %v333
        %v750 = vrot.slane %v744, 2
        %v751 = vrot.slane %v745, 2
        %v752 = vsel %vm673, %v750, %v751
        %v753 = vrot.slane %v746, 2
        %v754 = vsel %vm673, %v751, %v753
        %755 = vrot.lane.b32.xlu0 %v752, 126
        %v756 = vpop.permute.xlu0 %755
        %757 = vrot.lane.b32.xlu0 %v754, 126
        %v758 = vpop.permute.xlu0 %757
        %v761 = vadd.f32 %v740, %v756
        %v762 = vadd.f32 %v741, %v758
        %s763 = sld [smem:[#allocation5 + $0x19]]
        %v764 = vstv %s763
        %v765 = vmul.f32 %v764, %v335
        %v766 = vmul.f32 %v764, %v336
        %v767 = vmul.f32 %v764, %v337
        %v771 = vrot.slane %v765, 2
        %v772 = vrot.slane %v766, 2
        %v773 = vsel %vm673, %v771, %v772
        %v774 = vrot.slane %v767, 2
        %v775 = vsel %vm673, %v772, %v774
        %776 = vrot.lane.b32.xlu0 %v773, 126
        %v777 = vpop.permute.xlu0 %776
        %778 = vrot.lane.b32.xlu0 %v775, 126
        %v779 = vpop.permute.xlu0 %778
        %v782 = vadd.f32 %v761, %v777
        %v783 = vadd.f32 %v762, %v779
        %s784 = sld [smem:[#allocation5 + $0x1a]]
        %v785 = vstv %s784
        %v786 = vmul.f32 %v785, %v331
        %v787 = vmul.f32 %v785, %v332
        %v788 = vmul.f32 %v785, %v333
        %v792 = vrot.slane %v786, 2
        %v793 = vrot.slane %v787, 2
        %v794 = vsel %vm673, %v792, %v793
        %v795 = vrot.slane %v788, 2
        %v796 = vsel %vm673, %v793, %v795
        %797 = vrot.lane.b32.xlu0 %v794, 125
        %v798 = vpop.permute.xlu0 %797
        %799 = vrot.lane.b32.xlu0 %v796, 125
        %v800 = vpop.permute.xlu0 %799
        %v803 = vadd.f32 %v782, %v798
        %v804 = vadd.f32 %v783, %v800
        %s805 = sld [smem:[#allocation5 + $0x1b]]
        %v806 = vstv %s805
        %v807 = vmul.f32 %v806, %v335
        %v808 = vmul.f32 %v806, %v336
        %v809 = vmul.f32 %v806, %v337
        %v813 = vrot.slane %v807, 2
        %v814 = vrot.slane %v808, 2
        %v815 = vsel %vm673, %v813, %v814
        %v816 = vrot.slane %v809, 2
        %v817 = vsel %vm673, %v814, %v816
        %818 = vrot.lane.b32.xlu0 %v815, 125
        %v819 = vpop.permute.xlu0 %818
        %820 = vrot.lane.b32.xlu0 %v817, 125
        %v821 = vpop.permute.xlu0 %820
        %v824 = vadd.f32 %v803, %v819
        %v825 = vadd.f32 %v804, %v821
        %s826 = sld [smem:[#allocation5 + $0x1c]]
        %v827 = vstv %s826
        %v828 = vmul.f32 %v827, %v331
        %v829 = vmul.f32 %v827, %v332
        %v830 = vmul.f32 %v827, %v333
        %v834 = vrot.slane %v828, 2
        %v835 = vrot.slane %v829, 2
        %v836 = vsel %vm673, %v834, %v835
        %v837 = vrot.slane %v830, 2
        %v838 = vsel %vm673, %v835, %v837
        %839 = vrot.lane.b32.xlu0 %v836, 124
        %v840 = vpop.permute.xlu0 %839
        %841 = vrot.lane.b32.xlu0 %v838, 124
        %v842 = vpop.permute.xlu0 %841
        %v845 = vadd.f32 %v824, %v840
        %v846 = vadd.f32 %v825, %v842
        %s847 = sld [smem:[#allocation5 + $0x1d]]
        %v848 = vstv %s847
        %v849 = vmul.f32 %v848, %v335
        %v850 = vmul.f32 %v848, %v336
        %v851 = vmul.f32 %v848, %v337
        %v855 = vrot.slane %v849, 2
        %v856 = vrot.slane %v850, 2
        %v857 = vsel %vm673, %v855, %v856
        %v858 = vrot.slane %v851, 2
        %v859 = vsel %vm673, %v856, %v858
        %860 = vrot.lane.b32.xlu0 %v857, 124
        %v861 = vpop.permute.xlu0 %860
        %862 = vrot.lane.b32.xlu0 %v859, 124
        %v863 = vpop.permute.xlu0 %862
        %v866 = vadd.f32 %v845, %v861
        %v867 = vadd.f32 %v846, %v863
        %s868 = sld [smem:[#allocation5 + $0x1e]]
        %v869 = vstv %s868
        %v870 = vmul.f32 %v869, %v331
        %v871 = vmul.f32 %v869, %v332
        %v872 = vmul.f32 %v869, %v333
        %vm876 = vcmask 1044480
        %v877 = vrot.slane %v870, 3
        %v878 = vrot.slane %v871, 3
        %v879 = vsel %vm876, %v877, %v878
        %v880 = vrot.slane %v872, 3
        %v881 = vsel %vm876, %v878, %v880
        %v884 = vadd.f32 %v866, %v879
        %v885 = vadd.f32 %v867, %v881
        %s886 = sld [smem:[#allocation5 + $0x1f]]
        %v887 = vstv %s886
        %v888 = vmul.f32 %v887, %v335
        %v889 = vmul.f32 %v887, %v336
        %v890 = vmul.f32 %v887, %v337
        %v894 = vrot.slane %v888, 3
        %v895 = vrot.slane %v889, 3
        %v896 = vsel %vm876, %v894, %v895
        %v897 = vrot.slane %v890, 3
        %v898 = vsel %vm876, %v895, %v897
        %v901 = vadd.f32 %v884, %v896
        %v902 = vadd.f32 %v885, %v898
        %s903 = sld [smem:[#allocation5 + $0x20]]
        %v904 = vstv %s903
        %v905 = vmul.f32 %v904, %v331
        %v906 = vmul.f32 %v904, %v332
        %v907 = vmul.f32 %v904, %v333
        %v911 = vrot.slane %v905, 3
        %v912 = vrot.slane %v906, 3
        %v913 = vsel %vm876, %v911, %v912
        %v914 = vrot.slane %v907, 3
        %v915 = vsel %vm876, %v912, %v914
        %916 = vrot.lane.b32.xlu0 %v913, 127
        %v917 = vpop.permute.xlu0 %916
        %918 = vrot.lane.b32.xlu0 %v915, 127
        %v919 = vpop.permute.xlu0 %918
        %v922 = vadd.f32 %v901, %v917
        %v923 = vadd.f32 %v902, %v919
        %s924 = sld [smem:[#allocation5 + $0x21]]
        %v925 = vstv %s924
        %v926 = vmul.f32 %v925, %v335
        %v927 = vmul.f32 %v925, %v336
        %v928 = vmul.f32 %v925, %v337
        %v932 = vrot.slane %v926, 3
        %v933 = vrot.slane %v927, 3
        %v934 = vsel %vm876, %v932, %v933
        %v935 = vrot.slane %v928, 3
        %v936 = vsel %vm876, %v933, %v935
        %937 = vrot.lane.b32.xlu0 %v934, 127
        %v938 = vpop.permute.xlu0 %937
        %939 = vrot.lane.b32.xlu0 %v936, 127
        %v940 = vpop.permute.xlu0 %939
        %v943 = vadd.f32 %v922, %v938
        %v944 = vadd.f32 %v923, %v940
        %s945 = sld [smem:[#allocation5 + $0x22]]
        %v946 = vstv %s945
        %v947 = vmul.f32 %v946, %v331
        %v948 = vmul.f32 %v946, %v332
        %v949 = vmul.f32 %v946, %v333
        %v953 = vrot.slane %v947, 3
        %v954 = vrot.slane %v948, 3
        %v955 = vsel %vm876, %v953, %v954
        %v956 = vrot.slane %v949, 3
        %v957 = vsel %vm876, %v954, %v956
        %958 = vrot.lane.b32.xlu0 %v955, 126
        %v959 = vpop.permute.xlu0 %958
        %960 = vrot.lane.b32.xlu0 %v957, 126
        %v961 = vpop.permute.xlu0 %960
        %v964 = vadd.f32 %v943, %v959
        %v965 = vadd.f32 %v944, %v961
        %s966 = sld [smem:[#allocation5 + $0x23]]
        %v967 = vstv %s966
        %v968 = vmul.f32 %v967, %v335
        %v969 = vmul.f32 %v967, %v336
        %v970 = vmul.f32 %v967, %v337
        %v974 = vrot.slane %v968, 3
        %v975 = vrot.slane %v969, 3
        %v976 = vsel %vm876, %v974, %v975
        %v977 = vrot.slane %v970, 3
        %v978 = vsel %vm876, %v975, %v977
        %979 = vrot.lane.b32.xlu0 %v976, 126
        %v980 = vpop.permute.xlu0 %979
        %981 = vrot.lane.b32.xlu0 %v978, 126
        %v982 = vpop.permute.xlu0 %981
        %v985 = vadd.f32 %v964, %v980
        %v986 = vadd.f32 %v965, %v982
        %s987 = sld [smem:[#allocation5 + $0x24]]
        %v988 = vstv %s987
        %v989 = vmul.f32 %v988, %v331
        %v990 = vmul.f32 %v988, %v332
        %v991 = vmul.f32 %v988, %v333
        %v995 = vrot.slane %v989, 3
        %v996 = vrot.slane %v990, 3
        %v997 = vsel %vm876, %v995, %v996
        %v998 = vrot.slane %v991, 3
        %v999 = vsel %vm876, %v996, %v998
        %1000 = vrot.lane.b32.xlu0 %v997, 125
        %v1001 = vpop.permute.xlu0 %1000
        %1002 = vrot.lane.b32.xlu0 %v999, 125
        %v1003 = vpop.permute.xlu0 %1002
        %v1006 = vadd.f32 %v985, %v1001
        %v1007 = vadd.f32 %v986, %v1003
        %s1008 = sld [smem:[#allocation5 + $0x25]]
        %v1009 = vstv %s1008
        %v1010 = vmul.f32 %v1009, %v335
        %v1011 = vmul.f32 %v1009, %v336
        %v1012 = vmul.f32 %v1009, %v337
        %v1016 = vrot.slane %v1010, 3
        %v1017 = vrot.slane %v1011, 3
        %v1018 = vsel %vm876, %v1016, %v1017
        %v1019 = vrot.slane %v1012, 3
        %v1020 = vsel %vm876, %v1017, %v1019
        %1021 = vrot.lane.b32.xlu0 %v1018, 125
        %v1022 = vpop.permute.xlu0 %1021
        %1023 = vrot.lane.b32.xlu0 %v1020, 125
        %v1024 = vpop.permute.xlu0 %1023
        %v1027 = vadd.f32 %v1006, %v1022
        %v1028 = vadd.f32 %v1007, %v1024
        %s1029 = sld [smem:[#allocation5 + $0x26]]
        %v1030 = vstv %s1029
        %v1031 = vmul.f32 %v1030, %v331
        %v1032 = vmul.f32 %v1030, %v332
        %v1033 = vmul.f32 %v1030, %v333
        %v1037 = vrot.slane %v1031, 3
        %v1038 = vrot.slane %v1032, 3
        %v1039 = vsel %vm876, %v1037, %v1038
        %v1040 = vrot.slane %v1033, 3
        %v1041 = vsel %vm876, %v1038, %v1040
        %1042 = vrot.lane.b32.xlu0 %v1039, 124
        %v1043 = vpop.permute.xlu0 %1042
        %1044 = vrot.lane.b32.xlu0 %v1041, 124
        %v1045 = vpop.permute.xlu0 %1044
        %v1048 = vadd.f32 %v1027, %v1043
        %v1049 = vadd.f32 %v1028, %v1045
        %s1050 = sld [smem:[#allocation5 + $0x27]]
        %v1051 = vstv %s1050
        %v1052 = vmul.f32 %v1051, %v335
        %v1053 = vmul.f32 %v1051, %v336
        %v1054 = vmul.f32 %v1051, %v337
        %v1058 = vrot.slane %v1052, 3
        %v1059 = vrot.slane %v1053, 3
        %v1060 = vsel %vm876, %v1058, %v1059
        %v1061 = vrot.slane %v1054, 3
        %v1062 = vsel %vm876, %v1059, %v1061
        %1063 = vrot.lane.b32.xlu0 %v1060, 124
        %v1064 = vpop.permute.xlu0 %1063
        %1065 = vrot.lane.b32.xlu0 %v1062, 124
        %v1066 = vpop.permute.xlu0 %1065
        %v1069 = vadd.f32 %v1048, %v1064
        %v1070 = vadd.f32 %v1049, %v1066
        %s1071 = sld [smem:[#allocation5 + $0x28]]
        %v1072 = vstv %s1071
        %v1073 = vmul.f32 %v1072, %v331
        %v1074 = vmul.f32 %v1072, %v332
        %v1075 = vmul.f32 %v1072, %v333
        %vm1079 = vcmask 1043456
        %v1080 = vrot.slane %v1073, 4
        %v1081 = vrot.slane %v1074, 4
        %v1082 = vsel %vm1079, %v1080, %v1081
        %v1083 = vrot.slane %v1075, 4
        %v1084 = vsel %vm1079, %v1081, %v1083
        %v1087 = vadd.f32 %v1069, %v1082
        %v1088 = vadd.f32 %v1070, %v1084
        %s1089 = sld [smem:[#allocation5 + $0x29]]
        %v1090 = vstv %s1089
        %v1091 = vmul.f32 %v1090, %v335
        %v1092 = vmul.f32 %v1090, %v336
        %v1093 = vmul.f32 %v1090, %v337
        %v1097 = vrot.slane %v1091, 4
        %v1098 = vrot.slane %v1092, 4
        %v1099 = vsel %vm1079, %v1097, %v1098
        %v1100 = vrot.slane %v1093, 4
        %v1101 = vsel %vm1079, %v1098, %v1100
        %v1104 = vadd.f32 %v1087, %v1099
        %v1105 = vadd.f32 %v1088, %v1101
        %s1106 = sld [smem:[#allocation5 + $0x2a]]
        %v1107 = vstv %s1106
        %v1108 = vmul.f32 %v1107, %v331
        %v1109 = vmul.f32 %v1107, %v332
        %v1110 = vmul.f32 %v1107, %v333
        %v1114 = vrot.slane %v1108, 4
        %v1115 = vrot.slane %v1109, 4
        %v1116 = vsel %vm1079, %v1114, %v1115
        %v1117 = vrot.slane %v1110, 4
        %v1118 = vsel %vm1079, %v1115, %v1117
        %1119 = vrot.lane.b32.xlu0 %v1116, 127
        %v1120 = vpop.permute.xlu0 %1119
        %1121 = vrot.lane.b32.xlu0 %v1118, 127
        %v1122 = vpop.permute.xlu0 %1121
        %v1125 = vadd.f32 %v1104, %v1120
        %v1126 = vadd.f32 %v1105, %v1122
        %s1127 = sld [smem:[#allocation5 + $0x2b]]
        %v1128 = vstv %s1127
        %v1129 = vmul.f32 %v1128, %v335
        %v1130 = vmul.f32 %v1128, %v336
        %v1131 = vmul.f32 %v1128, %v337
        %v1135 = vrot.slane %v1129, 4
        %v1136 = vrot.slane %v1130, 4
        %v1137 = vsel %vm1079, %v1135, %v1136
        %v1138 = vrot.slane %v1131, 4
        %v1139 = vsel %vm1079, %v1136, %v1138
        %1140 = vrot.lane.b32.xlu0 %v1137, 127
        %v1141 = vpop.permute.xlu0 %1140
        %1142 = vrot.lane.b32.xlu0 %v1139, 127
        %v1143 = vpop.permute.xlu0 %1142
        %v1146 = vadd.f32 %v1125, %v1141
        %v1147 = vadd.f32 %v1126, %v1143
        %s1148 = sld [smem:[#allocation5 + $0x2c]]
        %v1149 = vstv %s1148
        %v1150 = vmul.f32 %v1149, %v331
        %v1151 = vmul.f32 %v1149, %v332
        %v1152 = vmul.f32 %v1149, %v333
        %v1156 = vrot.slane %v1150, 4
        %v1157 = vrot.slane %v1151, 4
        %v1158 = vsel %vm1079, %v1156, %v1157
        %v1159 = vrot.slane %v1152, 4
        %v1160 = vsel %vm1079, %v1157, %v1159
        %1161 = vrot.lane.b32.xlu0 %v1158, 126
        %v1162 = vpop.permute.xlu0 %1161
        %1163 = vrot.lane.b32.xlu0 %v1160, 126
        %v1164 = vpop.permute.xlu0 %1163
        %v1167 = vadd.f32 %v1146, %v1162
        %v1168 = vadd.f32 %v1147, %v1164
        %s1169 = sld [smem:[#allocation5 + $0x2d]]
        %v1170 = vstv %s1169
        %v1171 = vmul.f32 %v1170, %v335
        %v1172 = vmul.f32 %v1170, %v336
        %v1173 = vmul.f32 %v1170, %v337
        %v1177 = vrot.slane %v1171, 4
        %v1178 = vrot.slane %v1172, 4
        %v1179 = vsel %vm1079, %v1177, %v1178
        %v1180 = vrot.slane %v1173, 4
        %v1181 = vsel %vm1079, %v1178, %v1180
        %1182 = vrot.lane.b32.xlu0 %v1179, 126
        %v1183 = vpop.permute.xlu0 %1182
        %1184 = vrot.lane.b32.xlu0 %v1181, 126
        %v1185 = vpop.permute.xlu0 %1184
        %v1188 = vadd.f32 %v1167, %v1183
        %v1189 = vadd.f32 %v1168, %v1185
        %s1190 = sld [smem:[#allocation5 + $0x2e]]
        %v1191 = vstv %s1190
        %v1192 = vmul.f32 %v1191, %v331
        %v1193 = vmul.f32 %v1191, %v332
        %v1194 = vmul.f32 %v1191, %v333
        %v1198 = vrot.slane %v1192, 4
        %v1199 = vrot.slane %v1193, 4
        %v1200 = vsel %vm1079, %v1198, %v1199
        %v1201 = vrot.slane %v1194, 4
        %v1202 = vsel %vm1079, %v1199, %v1201
        %1203 = vrot.lane.b32.xlu0 %v1200, 125
        %v1204 = vpop.permute.xlu0 %1203
        %1205 = vrot.lane.b32.xlu0 %v1202, 125
        %v1206 = vpop.permute.xlu0 %1205
        %v1209 = vadd.f32 %v1188, %v1204
        %v1210 = vadd.f32 %v1189, %v1206
        %s1211 = sld [smem:[#allocation5 + $0x2f]]
        %v1212 = vstv %s1211
        %v1213 = vmul.f32 %v1212, %v335
        %v1214 = vmul.f32 %v1212, %v336
        %v1215 = vmul.f32 %v1212, %v337
        %v1219 = vrot.slane %v1213, 4
        %v1220 = vrot.slane %v1214, 4
        %v1221 = vsel %vm1079, %v1219, %v1220
        %v1222 = vrot.slane %v1215, 4
        %v1223 = vsel %vm1079, %v1220, %v1222
        %1224 = vrot.lane.b32.xlu0 %v1221, 125
        %v1225 = vpop.permute.xlu0 %1224
        %1226 = vrot.lane.b32.xlu0 %v1223, 125
        %v1227 = vpop.permute.xlu0 %1226
        %v1230 = vadd.f32 %v1209, %v1225
        %v1231 = vadd.f32 %v1210, %v1227
        %s1232 = sld [smem:[#allocation5 + $0x30]]
        %v1233 = vstv %s1232
        %v1234 = vmul.f32 %v1233, %v331
        %v1235 = vmul.f32 %v1233, %v332
        %v1236 = vmul.f32 %v1233, %v333
        %v1240 = vrot.slane %v1234, 4
        %v1241 = vrot.slane %v1235, 4
        %v1242 = vsel %vm1079, %v1240, %v1241
        %v1243 = vrot.slane %v1236, 4
        %v1244 = vsel %vm1079, %v1241, %v1243
        %1245 = vrot.lane.b32.xlu0 %v1242, 124
        %v1246 = vpop.permute.xlu0 %1245
        %1247 = vrot.lane.b32.xlu0 %v1244, 124
        %v1248 = vpop.permute.xlu0 %1247
        %v1251 = vadd.f32 %v1230, %v1246
        %v1252 = vadd.f32 %v1231, %v1248
        %s1253 = sld [smem:[#allocation5 + $0x31]]
        %v1254 = vstv %s1253
        %v1255 = vmul.f32 %v1254, %v335
        %v1256 = vmul.f32 %v1254, %v336
        %v1257 = vmul.f32 %v1254, %v337
        %v1261 = vrot.slane %v1255, 4
        %v1262 = vrot.slane %v1256, 4
        %v1263 = vsel %vm1079, %v1261, %v1262
        %v1264 = vrot.slane %v1257, 4
        %v1265 = vsel %vm1079, %v1262, %v1264
        %1266 = vrot.lane.b32.xlu0 %v1263, 124
        %v1267 = vpop.permute.xlu0 %1266
        %1268 = vrot.lane.b32.xlu0 %v1265, 124
        %v1269 = vpop.permute.xlu0 %1268
        %v1272 = vadd.f32 %v1251, %v1267
        %v1273 = vadd.f32 %v1252, %v1269
        %s1274 = sld [smem:[#allocation5 + $0x32]]
        %v1275 = vstv %s1274
        %v1276 = vadd.f32 %v1272, %v1275
        %v1277 = vadd.f32 %v1273, %v1275
        %v1278 = vmax.f32 %v1276, 0.0
        %v1279 = vmax.f32 %v1277, 0.0
        %vm1280 = vcmask 130048
        %1281 = vst.msk [vmem:[#allocation2] sm:$0xff] %vm1280, %v1278
        %1282 = vst.msk [vmem:[#allocation2 + $0x8] sm:$0xff] %vm1280, %v1279
        %v1283 = vlaneseq
        %v1284 = vshrl.u32 %v1283, 7
        %v1285 = vsub.s32 0, %v1284
        %v1286 = vrot.slane %v1278, %v1285
        %1288 = vbcast.lane.b32.xlu0 %v1286, 256
        %v1289 = vpop.permute.xlu0 %1288
        %s1291 = sor.u32 256, 8
        %1292 = vbcast.lane.b32.xlu0 %v1286, %s1291
        %v1293 = vpop.permute.xlu0 %1292
        %v1294 = vlaneseq
        %v1295 = vshrl.u32 %v1294, 7
        %v1296 = vsub.s32 1, %v1295
        %v1297 = vrot.slane %v1278, %v1296
        %1299 = vbcast.lane.b32.xlu0 %v1297, 256
        %v1300 = vpop.permute.xlu0 %1299
        %s1302 = sor.u32 256, 8
        %1303 = vbcast.lane.b32.xlu0 %v1297, %s1302
        %v1304 = vpop.permute.xlu0 %1303
        %v1305 = vlaneseq
        %v1306 = vshrl.u32 %v1305, 7
        %v1307 = vsub.s32 2, %v1306
        %v1308 = vrot.slane %v1278, %v1307
        %1310 = vbcast.lane.b32.xlu0 %v1308, 256
        %v1311 = vpop.permute.xlu0 %1310
        %s1313 = sor.u32 256, 8
        %1314 = vbcast.lane.b32.xlu0 %v1308, %s1313
        %v1315 = vpop.permute.xlu0 %1314
        %v1316 = vlaneseq
        %v1317 = vshrl.u32 %v1316, 7
        %v1318 = vsub.s32 3, %v1317
        %v1319 = vrot.slane %v1278, %v1318
        %1321 = vbcast.lane.b32.xlu0 %v1319, 256
        %v1322 = vpop.permute.xlu0 %1321
        %s1324 = sor.u32 256, 8
        %1325 = vbcast.lane.b32.xlu0 %v1319, %s1324
        %v1326 = vpop.permute.xlu0 %1325
        %v1327 = vlaneseq
        %v1328 = vshrl.u32 %v1327, 7
        %v1329 = vsub.s32 4, %v1328
        %v1330 = vrot.slane %v1278, %v1329
        %1332 = vbcast.lane.b32.xlu0 %v1330, 256
        %v1333 = vpop.permute.xlu0 %1332
        %s1335 = sor.u32 256, 8
        %1336 = vbcast.lane.b32.xlu0 %v1330, %s1335
        %v1337 = vpop.permute.xlu0 %1336
        %v1338 = vlaneseq
        %v1339 = vshrl.u32 %v1338, 7
        %v1340 = vsub.s32 5, %v1339
        %v1341 = vrot.slane %v1278, %v1340
        %1343 = vbcast.lane.b32.xlu0 %v1341, 256
        %v1344 = vpop.permute.xlu0 %1343
        %s1346 = sor.u32 256, 8
        %1347 = vbcast.lane.b32.xlu0 %v1341, %s1346
        %v1348 = vpop.permute.xlu0 %1347
        %v1349 = vlaneseq
        %v1350 = vshrl.u32 %v1349, 7
        %v1351 = vsub.s32 6, %v1350
        %v1352 = vrot.slane %v1278, %v1351
        %1354 = vbcast.lane.b32.xlu0 %v1352, 256
        %v1355 = vpop.permute.xlu0 %1354
        %s1357 = sor.u32 256, 8
        %1358 = vbcast.lane.b32.xlu0 %v1352, %s1357
        %v1359 = vpop.permute.xlu0 %1358
        %v1360 = vlaneseq
        %v1361 = vshrl.u32 %v1360, 7
        %v1362 = vsub.s32 7, %v1361
        %v1363 = vrot.slane %v1278, %v1362
        %1365 = vbcast.lane.b32.xlu0 %v1363, 256
        %v1366 = vpop.permute.xlu0 %1365
        %s1368 = sor.u32 256, 8
        %1369 = vbcast.lane.b32.xlu0 %v1363, %s1368
        %v1370 = vpop.permute.xlu0 %1369
        %v1371 = vlaneseq
        %v1372 = vshrl.u32 %v1371, 7
        %v1373 = vsub.s32 0, %v1372
        %v1374 = vrot.slane %v1279, %v1373
        %1376 = vbcast.lane.b32.xlu0 %v1374, 256
        %v1377 = vpop.permute.xlu0 %1376
        %s1379 = sor.u32 256, 8
        %1380 = vbcast.lane.b32.xlu0 %v1374, %s1379
        %v1381 = vpop.permute.xlu0 %1380
        %v1382 = vlaneseq
        %v1383 = vshrl.u32 %v1382, 7
        %v1384 = vsub.s32 1, %v1383
        %v1385 = vrot.slane %v1279, %v1384
        %1387 = vbcast.lane.b32.xlu0 %v1385, 256
        %v1388 = vpop.permute.xlu0 %1387
        %s1390 = sor.u32 256, 8
        %1391 = vbcast.lane.b32.xlu0 %v1385, %s1390
        %v1392 = vpop.permute.xlu0 %1391
        %v1393 = vlaneseq
        %v1394 = vshrl.u32 %v1393, 7
        %v1395 = vsub.s32 2, %v1394
        %v1396 = vrot.slane %v1279, %v1395
        %1398 = vbcast.lane.b32.xlu0 %v1396, 256
        %v1399 = vpop.permute.xlu0 %1398
        %s1401 = sor.u32 256, 8
        %1402 = vbcast.lane.b32.xlu0 %v1396, %s1401
        %v1403 = vpop.permute.xlu0 %1402
        %v1404 = vlaneseq
        %v1405 = vshrl.u32 %v1404, 7
        %v1406 = vsub.s32 3, %v1405
        %v1407 = vrot.slane %v1279, %v1406
        %1409 = vbcast.lane.b32.xlu0 %v1407, 256
        %v1410 = vpop.permute.xlu0 %1409
        %s1412 = sor.u32 256, 8
        %1413 = vbcast.lane.b32.xlu0 %v1407, %s1412
        %v1414 = vpop.permute.xlu0 %1413
        %v1415 = vlaneseq
        %v1416 = vshrl.u32 %v1415, 7
        %v1417 = vsub.s32 4, %v1416
        %v1418 = vrot.slane %v1279, %v1417
        %1420 = vbcast.lane.b32.xlu0 %v1418, 256
        %v1421 = vpop.permute.xlu0 %1420
        %s1423 = sor.u32 256, 8
        %1424 = vbcast.lane.b32.xlu0 %v1418, %s1423
        %v1425 = vpop.permute.xlu0 %1424
        %v1426 = vlaneseq
        %v1427 = vshrl.u32 %v1426, 7
        %v1428 = vsub.s32 5, %v1427
        %v1429 = vrot.slane %v1279, %v1428
        %1431 = vbcast.lane.b32.xlu0 %v1429, 256
        %v1432 = vpop.permute.xlu0 %1431
        %s1434 = sor.u32 256, 8
        %1435 = vbcast.lane.b32.xlu0 %v1429, %s1434
        %v1436 = vpop.permute.xlu0 %1435
        %v1437 = vlaneseq
        %v1438 = vshrl.u32 %v1437, 7
        %v1439 = vsub.s32 6, %v1438
        %v1440 = vrot.slane %v1279, %v1439
        %1442 = vbcast.lane.b32.xlu0 %v1440, 256
        %v1443 = vpop.permute.xlu0 %1442
        %s1445 = sor.u32 256, 8
        %1446 = vbcast.lane.b32.xlu0 %v1440, %s1445
        %v1447 = vpop.permute.xlu0 %1446
        %v1448 = vlaneseq
        %v1449 = vshrl.u32 %v1448, 7
        %v1450 = vsub.s32 7, %v1449
        %v1451 = vrot.slane %v1279, %v1450
        %1453 = vbcast.lane.b32.xlu0 %v1451, 256
        %v1454 = vpop.permute.xlu0 %1453
        %s1456 = sor.u32 256, 8
        %1457 = vbcast.lane.b32.xlu0 %v1451, %s1456
        %v1458 = vpop.permute.xlu0 %1457
        %1459 = vst [vmem:[%s252 + $0x2] sm:$0xff] %v1289
        %1460 = vst [vmem:[%s252 + $0xa] sm:$0xff] %v1293
        %1461 = vst [vmem:[%s252 + $0x1a] sm:$0xff] %v1300
        %1462 = vst [vmem:[%s252 + $0x22] sm:$0xff] %v1304
        %1463 = vst [vmem:[%s252 + $0x32] sm:$0xff] %v1311
        %1464 = vst [vmem:[%s252 + $0x3a] sm:$0xff] %v1315
        %1465 = vst [vmem:[%s252 + $0x4a] sm:$0xff] %v1322
        %1466 = vst [vmem:[%s252 + $0x52] sm:$0xff] %v1326
        %1467 = vst [vmem:[%s252 + $0x62] sm:$0xff] %v1333
        %1468 = vst [vmem:[%s252 + $0x6a] sm:$0xff] %v1337
        %1469 = vst [vmem:[%s252 + $0x7a] sm:$0xff] %v1344
        %1470 = vst [vmem:[%s252 + $0x82] sm:$0xff] %v1348
        %1471 = vst [vmem:[%s252 + $0x92] sm:$0xff] %v1355
        %1472 = vst [vmem:[%s252 + $0x9a] sm:$0xff] %v1359
        %1473 = vst [vmem:[%s252 + $0xaa] sm:$0xff] %v1366
        %1474 = vst [vmem:[%s252 + $0xb2] sm:$0xff] %v1370
        %1475 = vst [vmem:[%s252 + $0xc2] sm:$0xff] %v1377
        %1476 = vst [vmem:[%s252 + $0xca] sm:$0xff] %v1381
        %1477 = vst [vmem:[%s252 + $0xda] sm:$0xff] %v1388
        %1478 = vst [vmem:[%s252 + $0xe2] sm:$0xff] %v1392
        %1479 = vst [vmem:[%s252 + $0xf2] sm:$0xff] %v1399
        %1480 = vst [vmem:[%s252 + $0xfa] sm:$0xff] %v1403
        %1481 = vst [vmem:[%s252 + $0x10a] sm:$0xff] %v1410
        %1482 = vst [vmem:[%s252 + $0x112] sm:$0xff] %v1414
        %1483 = vst [vmem:[%s252 + $0x122] sm:$0xff] %v1421
        %1484 = vst [vmem:[%s252 + $0x12a] sm:$0xff] %v1425
        %1485 = vst [vmem:[%s252 + $0x13a] sm:$0xff] %v1432
        %1486 = vst [vmem:[%s252 + $0x142] sm:$0xff] %v1436
        %1487 = vst [vmem:[%s252 + $0x152] sm:$0xff] %v1443
        %1488 = vst [vmem:[%s252 + $0x15a] sm:$0xff] %v1447
        %1489 = vst [vmem:[%s252 + $0x16a] sm:$0xff] %v1454
        %1490 = vst [vmem:[%s252 + $0x172] sm:$0xff] %v1458
        loop: start=0, step=1, limit=2
        $region45: #{conv_filter_forward.1} parent=39 // loop_pre_header
          _
        $region46: #{conv_filter_forward.1} parent=39 // loop_header
          %s1492 = sphi 0, %s1496
          %p1493 = scmp.ge.s32.totalorder %s1492, 2
        $region47: #{conv_filter_forward.1} parent=39 // loop_header_branch
          %1495 = sbr.rel (%p1493) target = $region51
        $region48: #{conv_filter_forward.1} parent=39 // loop_body
          %s1497 = smul.u32 %s1492, 8
          %s1498 = smul.u32 %s1497, 24
          %s1499 = scalar_lea.vmem [#allocation3], %s1498
          %v1500 = vld [vmem:[%s1499] sm:$0xff]
          %v1501 = vld [vmem:[%s1499 + $0x8] sm:$0xff]
          %v1502 = vld [vmem:[%s1499 + $0x18] sm:$0xff]
          %v1503 = vld [vmem:[%s1499 + $0x20] sm:$0xff]
          %v1504 = vld [vmem:[%s1499 + $0x30] sm:$0xff]
          %v1505 = vld [vmem:[%s1499 + $0x38] sm:$0xff]
          %v1506 = vld [vmem:[%s1499 + $0x48] sm:$0xff]
          %v1507 = vld [vmem:[%s1499 + $0x50] sm:$0xff]
          %v1508 = vld [vmem:[%s1499 + $0x60] sm:$0xff]
          %v1509 = vld [vmem:[%s1499 + $0x68] sm:$0xff]
          %v1510 = vld [vmem:[%s1499 + $0x78] sm:$0xff]
          %v1511 = vld [vmem:[%s1499 + $0x80] sm:$0xff]
          %v1512 = vld [vmem:[%s1499 + $0x90] sm:$0xff]
          %v1513 = vld [vmem:[%s1499 + $0x98] sm:$0xff]
          %v1514 = vld [vmem:[%s1499 + $0xa8] sm:$0xff]
          %v1515 = vld [vmem:[%s1499 + $0xb0] sm:$0xff]
          %v1516 = vld [vmem:[%s2] sm:$0x1]
          %v1517 = vlaneseq
          %v1518 = vshrl.u32 %v1517, 7
          %v1519 = vsub.s32 0, %v1518
          %v1520 = vrot.slane %v1516, %v1519
          %v1521 = vmul.f32 %v1500, %v1520
          %v1522 = vmul.f32 %v1501, %v1520
          %v1523 = vmul.f32 %v1502, %v1520
          %v1524 = vmul.f32 %v1503, %v1520
          %v1525 = vmul.f32 %v1504, %v1520
          %v1526 = vmul.f32 %v1505, %v1520
          %v1527 = vmul.f32 %v1506, %v1520
          %v1528 = vmul.f32 %v1507, %v1520
          %v1529 = vmul.f32 %v1508, %v1520
          %v1530 = vmul.f32 %v1509, %v1520
          %v1531 = vmul.f32 %v1510, %v1520
          %v1532 = vmul.f32 %v1511, %v1520
          %v1533 = vmul.f32 %v1512, %v1520
          %v1534 = vmul.f32 %v1513, %v1520
          %v1535 = vmul.f32 %v1514, %v1520
          %v1536 = vmul.f32 %v1515, %v1520
          %v1537 = vadd.f32 %v1521, 0.0
          %v1538 = vadd.f32 %v1522, 0.0
          %v1539 = vadd.f32 %v1523, 0.0
          %v1540 = vadd.f32 %v1524, 0.0
          %v1541 = vadd.f32 %v1525, 0.0
          %v1542 = vadd.f32 %v1526, 0.0
          %v1543 = vadd.f32 %v1527, 0.0
          %v1544 = vadd.f32 %v1528, 0.0
          %v1545 = vadd.f32 %v1529, 0.0
          %v1546 = vadd.f32 %v1530, 0.0
          %v1547 = vadd.f32 %v1531, 0.0
          %v1548 = vadd.f32 %v1532, 0.0
          %v1549 = vadd.f32 %v1533, 0.0
          %v1550 = vadd.f32 %v1534, 0.0
          %v1551 = vadd.f32 %v1535, 0.0
          %v1552 = vadd.f32 %v1536, 0.0
          %v1553 = vld [vmem:[%s1499 + $0x1] sm:$0xff]
          %v1554 = vld [vmem:[%s1499 + $0x9] sm:$0xff]
          %v1555 = vld [vmem:[%s1499 + $0x19] sm:$0xff]
          %v1556 = vld [vmem:[%s1499 + $0x21] sm:$0xff]
          %v1557 = vld [vmem:[%s1499 + $0x31] sm:$0xff]
          %v1558 = vld [vmem:[%s1499 + $0x39] sm:$0xff]
          %v1559 = vld [vmem:[%s1499 + $0x49] sm:$0xff]
          %v1560 = vld [vmem:[%s1499 + $0x51] sm:$0xff]
          %v1561 = vld [vmem:[%s1499 + $0x61] sm:$0xff]
          %v1562 = vld [vmem:[%s1499 + $0x69] sm:$0xff]
          %v1563 = vld [vmem:[%s1499 + $0x79] sm:$0xff]
          %v1564 = vld [vmem:[%s1499 + $0x81] sm:$0xff]
          %v1565 = vld [vmem:[%s1499 + $0x91] sm:$0xff]
          %v1566 = vld [vmem:[%s1499 + $0x99] sm:$0xff]
          %v1567 = vld [vmem:[%s1499 + $0xa9] sm:$0xff]
          %v1568 = vld [vmem:[%s1499 + $0xb1] sm:$0xff]
          %v1569 = vld [vmem:[%s2 + $0x1] sm:$0x1]
          %v1570 = vlaneseq
          %v1571 = vshrl.u32 %v1570, 7
          %v1572 = vsub.s32 0, %v1571
          %v1573 = vrot.slane %v1569, %v1572
          %v1574 = vmul.f32 %v1553, %v1573
          %v1575 = vmul.f32 %v1554, %v1573
          %v1576 = vmul.f32 %v1555, %v1573
          %v1577 = vmul.f32 %v1556, %v1573
          %v1578 = vmul.f32 %v1557, %v1573
          %v1579 = vmul.f32 %v1558, %v1573
          %v1580 = vmul.f32 %v1559, %v1573
          %v1581 = vmul.f32 %v1560, %v1573
          %v1582 = vmul.f32 %v1561, %v1573
          %v1583 = vmul.f32 %v1562, %v1573
          %v1584 = vmul.f32 %v1563, %v1573
          %v1585 = vmul.f32 %v1564, %v1573
          %v1586 = vmul.f32 %v1565, %v1573
          %v1587 = vmul.f32 %v1566, %v1573
          %v1588 = vmul.f32 %v1567, %v1573
          %v1589 = vmul.f32 %v1568, %v1573
          %v1590 = vadd.f32 %v1537, %v1574
          %v1591 = vadd.f32 %v1538, %v1575
          %v1592 = vadd.f32 %v1539, %v1576
          %v1593 = vadd.f32 %v1540, %v1577
          %v1594 = vadd.f32 %v1541, %v1578
          %v1595 = vadd.f32 %v1542, %v1579
          %v1596 = vadd.f32 %v1543, %v1580
          %v1597 = vadd.f32 %v1544, %v1581
          %v1598 = vadd.f32 %v1545, %v1582
          %v1599 = vadd.f32 %v1546, %v1583
          %v1600 = vadd.f32 %v1547, %v1584
          %v1601 = vadd.f32 %v1548, %v1585
          %v1602 = vadd.f32 %v1549, %v1586
          %v1603 = vadd.f32 %v1550, %v1587
          %v1604 = vadd.f32 %v1551, %v1588
          %v1605 = vadd.f32 %v1552, %v1589
          %v1606 = vld [vmem:[%s1499 + $0x2] sm:$0xff]
          %v1607 = vld [vmem:[%s1499 + $0xa] sm:$0xff]
          %v1608 = vld [vmem:[%s1499 + $0x1a] sm:$0xff]
          %v1609 = vld [vmem:[%s1499 + $0x22] sm:$0xff]
          %v1610 = vld [vmem:[%s1499 + $0x32] sm:$0xff]
          %v1611 = vld [vmem:[%s1499 + $0x3a] sm:$0xff]
          %v1612 = vld [vmem:[%s1499 + $0x4a] sm:$0xff]
          %v1613 = vld [vmem:[%s1499 + $0x52] sm:$0xff]
          %v1614 = vld [vmem:[%s1499 + $0x62] sm:$0xff]
          %v1615 = vld [vmem:[%s1499 + $0x6a] sm:$0xff]
          %v1616 = vld [vmem:[%s1499 + $0x7a] sm:$0xff]
          %v1617 = vld [vmem:[%s1499 + $0x82] sm:$0xff]
          %v1618 = vld [vmem:[%s1499 + $0x92] sm:$0xff]
          %v1619 = vld [vmem:[%s1499 + $0x9a] sm:$0xff]
          %v1620 = vld [vmem:[%s1499 + $0xaa] sm:$0xff]
          %v1621 = vld [vmem:[%s1499 + $0xb2] sm:$0xff]
          %v1622 = vld [vmem:[%s2 + $0x2] sm:$0x1]
          %v1623 = vlaneseq
          %v1624 = vshrl.u32 %v1623, 7
          %v1625 = vsub.s32 0, %v1624
          %v1626 = vrot.slane %v1622, %v1625
          %v1627 = vmul.f32 %v1606, %v1626
          %v1628 = vmul.f32 %v1607, %v1626
          %v1629 = vmul.f32 %v1608, %v1626
          %v1630 = vmul.f32 %v1609, %v1626
          %v1631 = vmul.f32 %v1610, %v1626
          %v1632 = vmul.f32 %v1611, %v1626
          %v1633 = vmul.f32 %v1612, %v1626
          %v1634 = vmul.f32 %v1613, %v1626
          %v1635 = vmul.f32 %v1614, %v1626
          %v1636 = vmul.f32 %v1615, %v1626
          %v1637 = vmul.f32 %v1616, %v1626
          %v1638 = vmul.f32 %v1617, %v1626
          %v1639 = vmul.f32 %v1618, %v1626
          %v1640 = vmul.f32 %v1619, %v1626
          %v1641 = vmul.f32 %v1620, %v1626
          %v1642 = vmul.f32 %v1621, %v1626
          %v1643 = vadd.f32 %v1590, %v1627
          %v1644 = vadd.f32 %v1591, %v1628
          %v1645 = vadd.f32 %v1592, %v1629
          %v1646 = vadd.f32 %v1593, %v1630
          %v1647 = vadd.f32 %v1594, %v1631
          %v1648 = vadd.f32 %v1595, %v1632
          %v1649 = vadd.f32 %v1596, %v1633
          %v1650 = vadd.f32 %v1597, %v1634
          %v1651 = vadd.f32 %v1598, %v1635
          %v1652 = vadd.f32 %v1599, %v1636
          %v1653 = vadd.f32 %v1600, %v1637
          %v1654 = vadd.f32 %v1601, %v1638
          %v1655 = vadd.f32 %v1602, %v1639
          %v1656 = vadd.f32 %v1603, %v1640
          %v1657 = vadd.f32 %v1604, %v1641
          %v1658 = vadd.f32 %v1605, %v1642
          %v1659 = vld [vmem:[%s1499 + $0x3] sm:$0xff]
          %v1660 = vld [vmem:[%s1499 + $0xb] sm:$0xff]
          %v1661 = vld [vmem:[%s1499 + $0x1b] sm:$0xff]
          %v1662 = vld [vmem:[%s1499 + $0x23] sm:$0xff]
          %v1663 = vld [vmem:[%s1499 + $0x33] sm:$0xff]
          %v1664 = vld [vmem:[%s1499 + $0x3b] sm:$0xff]
          %v1665 = vld [vmem:[%s1499 + $0x4b] sm:$0xff]
          %v1666 = vld [vmem:[%s1499 + $0x53] sm:$0xff]
          %v1667 = vld [vmem:[%s1499 + $0x63] sm:$0xff]
          %v1668 = vld [vmem:[%s1499 + $0x6b] sm:$0xff]
          %v1669 = vld [vmem:[%s1499 + $0x7b] sm:$0xff]
          %v1670 = vld [vmem:[%s1499 + $0x83] sm:$0xff]
          %v1671 = vld [vmem:[%s1499 + $0x93] sm:$0xff]
          %v1672 = vld [vmem:[%s1499 + $0x9b] sm:$0xff]
          %v1673 = vld [vmem:[%s1499 + $0xab] sm:$0xff]
          %v1674 = vld [vmem:[%s1499 + $0xb3] sm:$0xff]
          %v1675 = vld [vmem:[%s2 + $0x3] sm:$0x1]
          %v1676 = vlaneseq
          %v1677 = vshrl.u32 %v1676, 7
          %v1678 = vsub.s32 0, %v1677
          %v1679 = vrot.slane %v1675, %v1678
          %v1680 = vmul.f32 %v1659, %v1679
          %v1681 = vmul.f32 %v1660, %v1679
          %v1682 = vmul.f32 %v1661, %v1679
          %v1683 = vmul.f32 %v1662, %v1679
          %v1684 = vmul.f32 %v1663, %v1679
          %v1685 = vmul.f32 %v1664, %v1679
          %v1686 = vmul.f32 %v1665, %v1679
          %v1687 = vmul.f32 %v1666, %v1679
          %v1688 = vmul.f32 %v1667, %v1679
          %v1689 = vmul.f32 %v1668, %v1679
          %v1690 = vmul.f32 %v1669, %v1679
          %v1691 = vmul.f32 %v1670, %v1679
          %v1692 = vmul.f32 %v1671, %v1679
          %v1693 = vmul.f32 %v1672, %v1679
          %v1694 = vmul.f32 %v1673, %v1679
          %v1695 = vmul.f32 %v1674, %v1679
          %v1696 = vadd.f32 %v1643, %v1680
          %v1697 = vadd.f32 %v1644, %v1681
          %v1698 = vadd.f32 %v1645, %v1682
          %v1699 = vadd.f32 %v1646, %v1683
          %v1700 = vadd.f32 %v1647, %v1684
          %v1701 = vadd.f32 %v1648, %v1685
          %v1702 = vadd.f32 %v1649, %v1686
          %v1703 = vadd.f32 %v1650, %v1687
          %v1704 = vadd.f32 %v1651, %v1688
          %v1705 = vadd.f32 %v1652, %v1689
          %v1706 = vadd.f32 %v1653, %v1690
          %v1707 = vadd.f32 %v1654, %v1691
          %v1708 = vadd.f32 %v1655, %v1692
          %v1709 = vadd.f32 %v1656, %v1693
          %v1710 = vadd.f32 %v1657, %v1694
          %v1711 = vadd.f32 %v1658, %v1695
          %v1712 = vld [vmem:[%s1499 + $0x4] sm:$0xff]
          %v1713 = vld [vmem:[%s1499 + $0xc] sm:$0xff]
          %v1714 = vld [vmem:[%s1499 + $0x1c] sm:$0xff]
          %v1715 = vld [vmem:[%s1499 + $0x24] sm:$0xff]
          %v1716 = vld [vmem:[%s1499 + $0x34] sm:$0xff]
          %v1717 = vld [vmem:[%s1499 + $0x3c] sm:$0xff]
          %v1718 = vld [vmem:[%s1499 + $0x4c] sm:$0xff]
          %v1719 = vld [vmem:[%s1499 + $0x54] sm:$0xff]
          %v1720 = vld [vmem:[%s1499 + $0x64] sm:$0xff]
          %v1721 = vld [vmem:[%s1499 + $0x6c] sm:$0xff]
          %v1722 = vld [vmem:[%s1499 + $0x7c] sm:$0xff]
          %v1723 = vld [vmem:[%s1499 + $0x84] sm:$0xff]
          %v1724 = vld [vmem:[%s1499 + $0x94] sm:$0xff]
          %v1725 = vld [vmem:[%s1499 + $0x9c] sm:$0xff]
          %v1726 = vld [vmem:[%s1499 + $0xac] sm:$0xff]
          %v1727 = vld [vmem:[%s1499 + $0xb4] sm:$0xff]
          %v1728 = vld [vmem:[%s2 + $0x4] sm:$0x1]
          %v1729 = vlaneseq
          %v1730 = vshrl.u32 %v1729, 7
          %v1731 = vsub.s32 0, %v1730
          %v1732 = vrot.slane %v1728, %v1731
          %v1733 = vmul.f32 %v1712, %v1732
          %v1734 = vmul.f32 %v1713, %v1732
          %v1735 = vmul.f32 %v1714, %v1732
          %v1736 = vmul.f32 %v1715, %v1732
          %v1737 = vmul.f32 %v1716, %v1732
          %v1738 = vmul.f32 %v1717, %v1732
          %v1739 = vmul.f32 %v1718, %v1732
          %v1740 = vmul.f32 %v1719, %v1732
          %v1741 = vmul.f32 %v1720, %v1732
          %v1742 = vmul.f32 %v1721, %v1732
          %v1743 = vmul.f32 %v1722, %v1732
          %v1744 = vmul.f32 %v1723, %v1732
          %v1745 = vmul.f32 %v1724, %v1732
          %v1746 = vmul.f32 %v1725, %v1732
          %v1747 = vmul.f32 %v1726, %v1732
          %v1748 = vmul.f32 %v1727, %v1732
          %v1749 = vadd.f32 %v1696, %v1733
          %v1750 = vadd.f32 %v1697, %v1734
          %v1751 = vadd.f32 %v1698, %v1735
          %v1752 = vadd.f32 %v1699, %v1736
          %v1753 = vadd.f32 %v1700, %v1737
          %v1754 = vadd.f32 %v1701, %v1738
          %v1755 = vadd.f32 %v1702, %v1739
          %v1756 = vadd.f32 %v1703, %v1740
          %v1757 = vadd.f32 %v1704, %v1741
          %v1758 = vadd.f32 %v1705, %v1742
          %v1759 = vadd.f32 %v1706, %v1743
          %v1760 = vadd.f32 %v1707, %v1744
          %v1761 = vadd.f32 %v1708, %v1745
          %v1762 = vadd.f32 %v1709, %v1746
          %v1763 = vadd.f32 %v1710, %v1747
          %v1764 = vadd.f32 %v1711, %v1748
          %s1765 = sadd.s32 %s1497, 1
          %s1766 = smul.u32 %s1765, 24
          %s1767 = scalar_lea.vmem [#allocation3], %s1766
          %v1768 = vld [vmem:[%s1767] sm:$0xff]
          %v1769 = vld [vmem:[%s1767 + $0x8] sm:$0xff]
          %v1770 = vld [vmem:[%s1767 + $0x18] sm:$0xff]
          %v1771 = vld [vmem:[%s1767 + $0x20] sm:$0xff]
          %v1772 = vld [vmem:[%s1767 + $0x30] sm:$0xff]
          %v1773 = vld [vmem:[%s1767 + $0x38] sm:$0xff]
          %v1774 = vld [vmem:[%s1767 + $0x48] sm:$0xff]
          %v1775 = vld [vmem:[%s1767 + $0x50] sm:$0xff]
          %v1776 = vld [vmem:[%s1767 + $0x60] sm:$0xff]
          %v1777 = vld [vmem:[%s1767 + $0x68] sm:$0xff]
          %v1778 = vld [vmem:[%s1767 + $0x78] sm:$0xff]
          %v1779 = vld [vmem:[%s1767 + $0x80] sm:$0xff]
          %v1780 = vld [vmem:[%s1767 + $0x90] sm:$0xff]
          %v1781 = vld [vmem:[%s1767 + $0x98] sm:$0xff]
          %v1782 = vld [vmem:[%s1767 + $0xa8] sm:$0xff]
          %v1783 = vld [vmem:[%s1767 + $0xb0] sm:$0xff]
          %v1784 = vld [vmem:[%s2 + $0x5] sm:$0x1]
          %v1785 = vlaneseq
          %v1786 = vshrl.u32 %v1785, 7
          %v1787 = vsub.s32 0, %v1786
          %v1788 = vrot.slane %v1784, %v1787
          %v1789 = vmul.f32 %v1768, %v1788
          %v1790 = vmul.f32 %v1769, %v1788
          %v1791 = vmul.f32 %v1770, %v1788
          %v1792 = vmul.f32 %v1771, %v1788
          %v1793 = vmul.f32 %v1772, %v1788
          %v1794 = vmul.f32 %v1773, %v1788
          %v1795 = vmul.f32 %v1774, %v1788
          %v1796 = vmul.f32 %v1775, %v1788
          %v1797 = vmul.f32 %v1776, %v1788
          %v1798 = vmul.f32 %v1777, %v1788
          %v1799 = vmul.f32 %v1778, %v1788
          %v1800 = vmul.f32 %v1779, %v1788
          %v1801 = vmul.f32 %v1780, %v1788
          %v1802 = vmul.f32 %v1781, %v1788
          %v1803 = vmul.f32 %v1782, %v1788
          %v1804 = vmul.f32 %v1783, %v1788
          %v1805 = vadd.f32 %v1749, %v1789
          %v1806 = vadd.f32 %v1750, %v1790
          %v1807 = vadd.f32 %v1751, %v1791
          %v1808 = vadd.f32 %v1752, %v1792
          %v1809 = vadd.f32 %v1753, %v1793
          %v1810 = vadd.f32 %v1754, %v1794
          %v1811 = vadd.f32 %v1755, %v1795
          %v1812 = vadd.f32 %v1756, %v1796
          %v1813 = vadd.f32 %v1757, %v1797
          %v1814 = vadd.f32 %v1758, %v1798
          %v1815 = vadd.f32 %v1759, %v1799
          %v1816 = vadd.f32 %v1760, %v1800
          %v1817 = vadd.f32 %v1761, %v1801
          %v1818 = vadd.f32 %v1762, %v1802
          %v1819 = vadd.f32 %v1763, %v1803
          %v1820 = vadd.f32 %v1764, %v1804
          %v1821 = vld [vmem:[%s1767 + $0x1] sm:$0xff]
          %v1822 = vld [vmem:[%s1767 + $0x9] sm:$0xff]
          %v1823 = vld [vmem:[%s1767 + $0x19] sm:$0xff]
          %v1824 = vld [vmem:[%s1767 + $0x21] sm:$0xff]
          %v1825 = vld [vmem:[%s1767 + $0x31] sm:$0xff]
          %v1826 = vld [vmem:[%s1767 + $0x39] sm:$0xff]
          %v1827 = vld [vmem:[%s1767 + $0x49] sm:$0xff]
          %v1828 = vld [vmem:[%s1767 + $0x51] sm:$0xff]
          %v1829 = vld [vmem:[%s1767 + $0x61] sm:$0xff]
          %v1830 = vld [vmem:[%s1767 + $0x69] sm:$0xff]
          %v1831 = vld [vmem:[%s1767 + $0x79] sm:$0xff]
          %v1832 = vld [vmem:[%s1767 + $0x81] sm:$0xff]
          %v1833 = vld [vmem:[%s1767 + $0x91] sm:$0xff]
          %v1834 = vld [vmem:[%s1767 + $0x99] sm:$0xff]
          %v1835 = vld [vmem:[%s1767 + $0xa9] sm:$0xff]
          %v1836 = vld [vmem:[%s1767 + $0xb1] sm:$0xff]
          %v1837 = vld [vmem:[%s2 + $0x6] sm:$0x1]
          %v1838 = vlaneseq
          %v1839 = vshrl.u32 %v1838, 7
          %v1840 = vsub.s32 0, %v1839
          %v1841 = vrot.slane %v1837, %v1840
          %v1842 = vmul.f32 %v1821, %v1841
          %v1843 = vmul.f32 %v1822, %v1841
          %v1844 = vmul.f32 %v1823, %v1841
          %v1845 = vmul.f32 %v1824, %v1841
          %v1846 = vmul.f32 %v1825, %v1841
          %v1847 = vmul.f32 %v1826, %v1841
          %v1848 = vmul.f32 %v1827, %v1841
          %v1849 = vmul.f32 %v1828, %v1841
          %v1850 = vmul.f32 %v1829, %v1841
          %v1851 = vmul.f32 %v1830, %v1841
          %v1852 = vmul.f32 %v1831, %v1841
          %v1853 = vmul.f32 %v1832, %v1841
          %v1854 = vmul.f32 %v1833, %v1841
          %v1855 = vmul.f32 %v1834, %v1841
          %v1856 = vmul.f32 %v1835, %v1841
          %v1857 = vmul.f32 %v1836, %v1841
          %v1858 = vadd.f32 %v1805, %v1842
          %v1859 = vadd.f32 %v1806, %v1843
          %v1860 = vadd.f32 %v1807, %v1844
          %v1861 = vadd.f32 %v1808, %v1845
          %v1862 = vadd.f32 %v1809, %v1846
          %v1863 = vadd.f32 %v1810, %v1847
          %v1864 = vadd.f32 %v1811, %v1848
          %v1865 = vadd.f32 %v1812, %v1849
          %v1866 = vadd.f32 %v1813, %v1850
          %v1867 = vadd.f32 %v1814, %v1851
          %v1868 = vadd.f32 %v1815, %v1852
          %v1869 = vadd.f32 %v1816, %v1853
          %v1870 = vadd.f32 %v1817, %v1854
          %v1871 = vadd.f32 %v1818, %v1855
          %v1872 = vadd.f32 %v1819, %v1856
          %v1873 = vadd.f32 %v1820, %v1857
          %v1874 = vld [vmem:[%s1767 + $0x2] sm:$0xff]
          %v1875 = vld [vmem:[%s1767 + $0xa] sm:$0xff]
          %v1876 = vld [vmem:[%s1767 + $0x1a] sm:$0xff]
          %v1877 = vld [vmem:[%s1767 + $0x22] sm:$0xff]
          %v1878 = vld [vmem:[%s1767 + $0x32] sm:$0xff]
          %v1879 = vld [vmem:[%s1767 + $0x3a] sm:$0xff]
          %v1880 = vld [vmem:[%s1767 + $0x4a] sm:$0xff]
          %v1881 = vld [vmem:[%s1767 + $0x52] sm:$0xff]
          %v1882 = vld [vmem:[%s1767 + $0x62] sm:$0xff]
          %v1883 = vld [vmem:[%s1767 + $0x6a] sm:$0xff]
          %v1884 = vld [vmem:[%s1767 + $0x7a] sm:$0xff]
          %v1885 = vld [vmem:[%s1767 + $0x82] sm:$0xff]
          %v1886 = vld [vmem:[%s1767 + $0x92] sm:$0xff]
          %v1887 = vld [vmem:[%s1767 + $0x9a] sm:$0xff]
          %v1888 = vld [vmem:[%s1767 + $0xaa] sm:$0xff]
          %v1889 = vld [vmem:[%s1767 + $0xb2] sm:$0xff]
          %v1890 = vld [vmem:[%s2 + $0x7] sm:$0x1]
          %v1891 = vlaneseq
          %v1892 = vshrl.u32 %v1891, 7
          %v1893 = vsub.s32 0, %v1892
          %v1894 = vrot.slane %v1890, %v1893
          %v1895 = vmul.f32 %v1874, %v1894
          %v1896 = vmul.f32 %v1875, %v1894
          %v1897 = vmul.f32 %v1876, %v1894
          %v1898 = vmul.f32 %v1877, %v1894
          %v1899 = vmul.f32 %v1878, %v1894
          %v1900 = vmul.f32 %v1879, %v1894
          %v1901 = vmul.f32 %v1880, %v1894
          %v1902 = vmul.f32 %v1881, %v1894
          %v1903 = vmul.f32 %v1882, %v1894
          %v1904 = vmul.f32 %v1883, %v1894
          %v1905 = vmul.f32 %v1884, %v1894
          %v1906 = vmul.f32 %v1885, %v1894
          %v1907 = vmul.f32 %v1886, %v1894
          %v1908 = vmul.f32 %v1887, %v1894
          %v1909 = vmul.f32 %v1888, %v1894
          %v1910 = vmul.f32 %v1889, %v1894
          %v1911 = vadd.f32 %v1858, %v1895
          %v1912 = vadd.f32 %v1859, %v1896
          %v1913 = vadd.f32 %v1860, %v1897
          %v1914 = vadd.f32 %v1861, %v1898
          %v1915 = vadd.f32 %v1862, %v1899
          %v1916 = vadd.f32 %v1863, %v1900
          %v1917 = vadd.f32 %v1864, %v1901
          %v1918 = vadd.f32 %v1865, %v1902
          %v1919 = vadd.f32 %v1866, %v1903
          %v1920 = vadd.f32 %v1867, %v1904
          %v1921 = vadd.f32 %v1868, %v1905
          %v1922 = vadd.f32 %v1869, %v1906
          %v1923 = vadd.f32 %v1870, %v1907
          %v1924 = vadd.f32 %v1871, %v1908
          %v1925 = vadd.f32 %v1872, %v1909
          %v1926 = vadd.f32 %v1873, %v1910
          %v1927 = vld [vmem:[%s1767 + $0x3] sm:$0xff]
          %v1928 = vld [vmem:[%s1767 + $0xb] sm:$0xff]
          %v1929 = vld [vmem:[%s1767 + $0x1b] sm:$0xff]
          %v1930 = vld [vmem:[%s1767 + $0x23] sm:$0xff]
          %v1931 = vld [vmem:[%s1767 + $0x33] sm:$0xff]
          %v1932 = vld [vmem:[%s1767 + $0x3b] sm:$0xff]
          %v1933 = vld [vmem:[%s1767 + $0x4b] sm:$0xff]
          %v1934 = vld [vmem:[%s1767 + $0x53] sm:$0xff]
          %v1935 = vld [vmem:[%s1767 + $0x63] sm:$0xff]
          %v1936 = vld [vmem:[%s1767 + $0x6b] sm:$0xff]
          %v1937 = vld [vmem:[%s1767 + $0x7b] sm:$0xff]
          %v1938 = vld [vmem:[%s1767 + $0x83] sm:$0xff]
          %v1939 = vld [vmem:[%s1767 + $0x93] sm:$0xff]
          %v1940 = vld [vmem:[%s1767 + $0x9b] sm:$0xff]
          %v1941 = vld [vmem:[%s1767 + $0xab] sm:$0xff]
          %v1942 = vld [vmem:[%s1767 + $0xb3] sm:$0xff]
          %v1943 = vld [vmem:[%s2 + $0x8] sm:$0x1]
          %v1944 = vlaneseq
          %v1945 = vshrl.u32 %v1944, 7
          %v1946 = vsub.s32 0, %v1945
          %v1947 = vrot.slane %v1943, %v1946
          %v1948 = vmul.f32 %v1927, %v1947
          %v1949 = vmul.f32 %v1928, %v1947
          %v1950 = vmul.f32 %v1929, %v1947
          %v1951 = vmul.f32 %v1930, %v1947
          %v1952 = vmul.f32 %v1931, %v1947
          %v1953 = vmul.f32 %v1932, %v1947
          %v1954 = vmul.f32 %v1933, %v1947
          %v1955 = vmul.f32 %v1934, %v1947
          %v1956 = vmul.f32 %v1935, %v1947
          %v1957 = vmul.f32 %v1936, %v1947
          %v1958 = vmul.f32 %v1937, %v1947
          %v1959 = vmul.f32 %v1938, %v1947
          %v1960 = vmul.f32 %v1939, %v1947
          %v1961 = vmul.f32 %v1940, %v1947
          %v1962 = vmul.f32 %v1941, %v1947
          %v1963 = vmul.f32 %v1942, %v1947
          %v1964 = vadd.f32 %v1911, %v1948
          %v1965 = vadd.f32 %v1912, %v1949
          %v1966 = vadd.f32 %v1913, %v1950
          %v1967 = vadd.f32 %v1914, %v1951
          %v1968 = vadd.f32 %v1915, %v1952
          %v1969 = vadd.f32 %v1916, %v1953
          %v1970 = vadd.f32 %v1917, %v1954
          %v1971 = vadd.f32 %v1918, %v1955
          %v1972 = vadd.f32 %v1919, %v1956
          %v1973 = vadd.f32 %v1920, %v1957
          %v1974 = vadd.f32 %v1921, %v1958
          %v1975 = vadd.f32 %v1922, %v1959
          %v1976 = vadd.f32 %v1923, %v1960
          %v1977 = vadd.f32 %v1924, %v1961
          %v1978 = vadd.f32 %v1925, %v1962
          %v1979 = vadd.f32 %v1926, %v1963
          %v1980 = vld [vmem:[%s1767 + $0x4] sm:$0xff]
          %v1981 = vld [vmem:[%s1767 + $0xc] sm:$0xff]
          %v1982 = vld [vmem:[%s1767 + $0x1c] sm:$0xff]
          %v1983 = vld [vmem:[%s1767 + $0x24] sm:$0xff]
          %v1984 = vld [vmem:[%s1767 + $0x34] sm:$0xff]
          %v1985 = vld [vmem:[%s1767 + $0x3c] sm:$0xff]
          %v1986 = vld [vmem:[%s1767 + $0x4c] sm:$0xff]
          %v1987 = vld [vmem:[%s1767 + $0x54] sm:$0xff]
          %v1988 = vld [vmem:[%s1767 + $0x64] sm:$0xff]
          %v1989 = vld [vmem:[%s1767 + $0x6c] sm:$0xff]
          %v1990 = vld [vmem:[%s1767 + $0x7c] sm:$0xff]
          %v1991 = vld [vmem:[%s1767 + $0x84] sm:$0xff]
          %v1992 = vld [vmem:[%s1767 + $0x94] sm:$0xff]
          %v1993 = vld [vmem:[%s1767 + $0x9c] sm:$0xff]
          %v1994 = vld [vmem:[%s1767 + $0xac] sm:$0xff]
          %v1995 = vld [vmem:[%s1767 + $0xb4] sm:$0xff]
          %v1996 = vld [vmem:[%s2 + $0x9] sm:$0x1]
          %v1997 = vlaneseq
          %v1998 = vshrl.u32 %v1997, 7
          %v1999 = vsub.s32 0, %v1998
          %v2000 = vrot.slane %v1996, %v1999
          %v2001 = vmul.f32 %v1980, %v2000
          %v2002 = vmul.f32 %v1981, %v2000
          %v2003 = vmul.f32 %v1982, %v2000
          %v2004 = vmul.f32 %v1983, %v2000
          %v2005 = vmul.f32 %v1984, %v2000
          %v2006 = vmul.f32 %v1985, %v2000
          %v2007 = vmul.f32 %v1986, %v2000
          %v2008 = vmul.f32 %v1987, %v2000
          %v2009 = vmul.f32 %v1988, %v2000
          %v2010 = vmul.f32 %v1989, %v2000
          %v2011 = vmul.f32 %v1990, %v2000
          %v2012 = vmul.f32 %v1991, %v2000
          %v2013 = vmul.f32 %v1992, %v2000
          %v2014 = vmul.f32 %v1993, %v2000
          %v2015 = vmul.f32 %v1994, %v2000
          %v2016 = vmul.f32 %v1995, %v2000
          %v2017 = vadd.f32 %v1964, %v2001
          %v2018 = vadd.f32 %v1965, %v2002
          %v2019 = vadd.f32 %v1966, %v2003
          %v2020 = vadd.f32 %v1967, %v2004
          %v2021 = vadd.f32 %v1968, %v2005
          %v2022 = vadd.f32 %v1969, %v2006
          %v2023 = vadd.f32 %v1970, %v2007
          %v2024 = vadd.f32 %v1971, %v2008
          %v2025 = vadd.f32 %v1972, %v2009
          %v2026 = vadd.f32 %v1973, %v2010
          %v2027 = vadd.f32 %v1974, %v2011
          %v2028 = vadd.f32 %v1975, %v2012
          %v2029 = vadd.f32 %v1976, %v2013
          %v2030 = vadd.f32 %v1977, %v2014
          %v2031 = vadd.f32 %v1978, %v2015
          %v2032 = vadd.f32 %v1979, %v2016
          %s2033 = sadd.s32 %s1497, 2
          %s2034 = smul.u32 %s2033, 24
          %s2035 = scalar_lea.vmem [#allocation3], %s2034
          %v2036 = vld [vmem:[%s2035] sm:$0xff]
          %v2037 = vld [vmem:[%s2035 + $0x8] sm:$0xff]
          %v2038 = vld [vmem:[%s2035 + $0x18] sm:$0xff]
          %v2039 = vld [vmem:[%s2035 + $0x20] sm:$0xff]
          %v2040 = vld [vmem:[%s2035 + $0x30] sm:$0xff]
          %v2041 = vld [vmem:[%s2035 + $0x38] sm:$0xff]
          %v2042 = vld [vmem:[%s2035 + $0x48] sm:$0xff]
          %v2043 = vld [vmem:[%s2035 + $0x50] sm:$0xff]
          %v2044 = vld [vmem:[%s2035 + $0x60] sm:$0xff]
          %v2045 = vld [vmem:[%s2035 + $0x68] sm:$0xff]
          %v2046 = vld [vmem:[%s2035 + $0x78] sm:$0xff]
          %v2047 = vld [vmem:[%s2035 + $0x80] sm:$0xff]
          %v2048 = vld [vmem:[%s2035 + $0x90] sm:$0xff]
          %v2049 = vld [vmem:[%s2035 + $0x98] sm:$0xff]
          %v2050 = vld [vmem:[%s2035 + $0xa8] sm:$0xff]
          %v2051 = vld [vmem:[%s2035 + $0xb0] sm:$0xff]
          %v2052 = vld [vmem:[%s2 + $0xa] sm:$0x1]
          %v2053 = vlaneseq
          %v2054 = vshrl.u32 %v2053, 7
          %v2055 = vsub.s32 0, %v2054
          %v2056 = vrot.slane %v2052, %v2055
          %v2057 = vmul.f32 %v2036, %v2056
          %v2058 = vmul.f32 %v2037, %v2056
          %v2059 = vmul.f32 %v2038, %v2056
          %v2060 = vmul.f32 %v2039, %v2056
          %v2061 = vmul.f32 %v2040, %v2056
          %v2062 = vmul.f32 %v2041, %v2056
          %v2063 = vmul.f32 %v2042, %v2056
          %v2064 = vmul.f32 %v2043, %v2056
          %v2065 = vmul.f32 %v2044, %v2056
          %v2066 = vmul.f32 %v2045, %v2056
          %v2067 = vmul.f32 %v2046, %v2056
          %v2068 = vmul.f32 %v2047, %v2056
          %v2069 = vmul.f32 %v2048, %v2056
          %v2070 = vmul.f32 %v2049, %v2056
          %v2071 = vmul.f32 %v2050, %v2056
          %v2072 = vmul.f32 %v2051, %v2056
          %v2073 = vadd.f32 %v2017, %v2057
          %v2074 = vadd.f32 %v2018, %v2058
          %v2075 = vadd.f32 %v2019, %v2059
          %v2076 = vadd.f32 %v2020, %v2060
          %v2077 = vadd.f32 %v2021, %v2061
          %v2078 = vadd.f32 %v2022, %v2062
          %v2079 = vadd.f32 %v2023, %v2063
          %v2080 = vadd.f32 %v2024, %v2064
          %v2081 = vadd.f32 %v2025, %v2065
          %v2082 = vadd.f32 %v2026, %v2066
          %v2083 = vadd.f32 %v2027, %v2067
          %v2084 = vadd.f32 %v2028, %v2068
          %v2085 = vadd.f32 %v2029, %v2069
          %v2086 = vadd.f32 %v2030, %v2070
          %v2087 = vadd.f32 %v2031, %v2071
          %v2088 = vadd.f32 %v2032, %v2072
          %v2089 = vld [vmem:[%s2035 + $0x1] sm:$0xff]
          %v2090 = vld [vmem:[%s2035 + $0x9] sm:$0xff]
          %v2091 = vld [vmem:[%s2035 + $0x19] sm:$0xff]
          %v2092 = vld [vmem:[%s2035 + $0x21] sm:$0xff]
          %v2093 = vld [vmem:[%s2035 + $0x31] sm:$0xff]
          %v2094 = vld [vmem:[%s2035 + $0x39] sm:$0xff]
          %v2095 = vld [vmem:[%s2035 + $0x49] sm:$0xff]
          %v2096 = vld [vmem:[%s2035 + $0x51] sm:$0xff]
          %v2097 = vld [vmem:[%s2035 + $0x61] sm:$0xff]
          %v2098 = vld [vmem:[%s2035 + $0x69] sm:$0xff]
          %v2099 = vld [vmem:[%s2035 + $0x79] sm:$0xff]
          %v2100 = vld [vmem:[%s2035 + $0x81] sm:$0xff]
          %v2101 = vld [vmem:[%s2035 + $0x91] sm:$0xff]
          %v2102 = vld [vmem:[%s2035 + $0x99] sm:$0xff]
          %v2103 = vld [vmem:[%s2035 + $0xa9] sm:$0xff]
          %v2104 = vld [vmem:[%s2035 + $0xb1] sm:$0xff]
          %v2105 = vld [vmem:[%s2 + $0xb] sm:$0x1]
          %v2106 = vlaneseq
          %v2107 = vshrl.u32 %v2106, 7
          %v2108 = vsub.s32 0, %v2107
          %v2109 = vrot.slane %v2105, %v2108
          %v2110 = vmul.f32 %v2089, %v2109
          %v2111 = vmul.f32 %v2090, %v2109
          %v2112 = vmul.f32 %v2091, %v2109
          %v2113 = vmul.f32 %v2092, %v2109
          %v2114 = vmul.f32 %v2093, %v2109
          %v2115 = vmul.f32 %v2094, %v2109
          %v2116 = vmul.f32 %v2095, %v2109
          %v2117 = vmul.f32 %v2096, %v2109
          %v2118 = vmul.f32 %v2097, %v2109
          %v2119 = vmul.f32 %v2098, %v2109
          %v2120 = vmul.f32 %v2099, %v2109
          %v2121 = vmul.f32 %v2100, %v2109
          %v2122 = vmul.f32 %v2101, %v2109
          %v2123 = vmul.f32 %v2102, %v2109
          %v2124 = vmul.f32 %v2103, %v2109
          %v2125 = vmul.f32 %v2104, %v2109
          %v2126 = vadd.f32 %v2073, %v2110
          %v2127 = vadd.f32 %v2074, %v2111
          %v2128 = vadd.f32 %v2075, %v2112
          %v2129 = vadd.f32 %v2076, %v2113
          %v2130 = vadd.f32 %v2077, %v2114
          %v2131 = vadd.f32 %v2078, %v2115
          %v2132 = vadd.f32 %v2079, %v2116
          %v2133 = vadd.f32 %v2080, %v2117
          %v2134 = vadd.f32 %v2081, %v2118
          %v2135 = vadd.f32 %v2082, %v2119
          %v2136 = vadd.f32 %v2083, %v2120
          %v2137 = vadd.f32 %v2084, %v2121
          %v2138 = vadd.f32 %v2085, %v2122
          %v2139 = vadd.f32 %v2086, %v2123
          %v2140 = vadd.f32 %v2087, %v2124
          %v2141 = vadd.f32 %v2088, %v2125
          %v2142 = vld [vmem:[%s2035 + $0x2] sm:$0xff]
          %v2143 = vld [vmem:[%s2035 + $0xa] sm:$0xff]
          %v2144 = vld [vmem:[%s2035 + $0x1a] sm:$0xff]
          %v2145 = vld [vmem:[%s2035 + $0x22] sm:$0xff]
          %v2146 = vld [vmem:[%s2035 + $0x32] sm:$0xff]
          %v2147 = vld [vmem:[%s2035 + $0x3a] sm:$0xff]
          %v2148 = vld [vmem:[%s2035 + $0x4a] sm:$0xff]
          %v2149 = vld [vmem:[%s2035 + $0x52] sm:$0xff]
          %v2150 = vld [vmem:[%s2035 + $0x62] sm:$0xff]
          %v2151 = vld [vmem:[%s2035 + $0x6a] sm:$0xff]
          %v2152 = vld [vmem:[%s2035 + $0x7a] sm:$0xff]
          %v2153 = vld [vmem:[%s2035 + $0x82] sm:$0xff]
          %v2154 = vld [vmem:[%s2035 + $0x92] sm:$0xff]
          %v2155 = vld [vmem:[%s2035 + $0x9a] sm:$0xff]
          %v2156 = vld [vmem:[%s2035 + $0xaa] sm:$0xff]
          %v2157 = vld [vmem:[%s2035 + $0xb2] sm:$0xff]
          %v2158 = vld [vmem:[%s2 + $0xc] sm:$0x1]
          %v2159 = vlaneseq
          %v2160 = vshrl.u32 %v2159, 7
          %v2161 = vsub.s32 0, %v2160
          %v2162 = vrot.slane %v2158, %v2161
          %v2163 = vmul.f32 %v2142, %v2162
          %v2164 = vmul.f32 %v2143, %v2162
          %v2165 = vmul.f32 %v2144, %v2162
          %v2166 = vmul.f32 %v2145, %v2162
          %v2167 = vmul.f32 %v2146, %v2162
          %v2168 = vmul.f32 %v2147, %v2162
          %v2169 = vmul.f32 %v2148, %v2162
          %v2170 = vmul.f32 %v2149, %v2162
          %v2171 = vmul.f32 %v2150, %v2162
          %v2172 = vmul.f32 %v2151, %v2162
          %v2173 = vmul.f32 %v2152, %v2162
          %v2174 = vmul.f32 %v2153, %v2162
          %v2175 = vmul.f32 %v2154, %v2162
          %v2176 = vmul.f32 %v2155, %v2162
          %v2177 = vmul.f32 %v2156, %v2162
          %v2178 = vmul.f32 %v2157, %v2162
          %v2179 = vadd.f32 %v2126, %v2163
          %v2180 = vadd.f32 %v2127, %v2164
          %v2181 = vadd.f32 %v2128, %v2165
          %v2182 = vadd.f32 %v2129, %v2166
          %v2183 = vadd.f32 %v2130, %v2167
          %v2184 = vadd.f32 %v2131, %v2168
          %v2185 = vadd.f32 %v2132, %v2169
          %v2186 = vadd.f32 %v2133, %v2170
          %v2187 = vadd.f32 %v2134, %v2171
          %v2188 = vadd.f32 %v2135, %v2172
          %v2189 = vadd.f32 %v2136, %v2173
          %v2190 = vadd.f32 %v2137, %v2174
          %v2191 = vadd.f32 %v2138, %v2175
          %v2192 = vadd.f32 %v2139, %v2176
          %v2193 = vadd.f32 %v2140, %v2177
          %v2194 = vadd.f32 %v2141, %v2178
          %v2195 = vld [vmem:[%s2035 + $0x3] sm:$0xff]
          %v2196 = vld [vmem:[%s2035 + $0xb] sm:$0xff]
          %v2197 = vld [vmem:[%s2035 + $0x1b] sm:$0xff]
          %v2198 = vld [vmem:[%s2035 + $0x23] sm:$0xff]
          %v2199 = vld [vmem:[%s2035 + $0x33] sm:$0xff]
          %v2200 = vld [vmem:[%s2035 + $0x3b] sm:$0xff]
          %v2201 = vld [vmem:[%s2035 + $0x4b] sm:$0xff]
          %v2202 = vld [vmem:[%s2035 + $0x53] sm:$0xff]
          %v2203 = vld [vmem:[%s2035 + $0x63] sm:$0xff]
          %v2204 = vld [vmem:[%s2035 + $0x6b] sm:$0xff]
          %v2205 = vld [vmem:[%s2035 + $0x7b] sm:$0xff]
          %v2206 = vld [vmem:[%s2035 + $0x83] sm:$0xff]
          %v2207 = vld [vmem:[%s2035 + $0x93] sm:$0xff]
          %v2208 = vld [vmem:[%s2035 + $0x9b] sm:$0xff]
          %v2209 = vld [vmem:[%s2035 + $0xab] sm:$0xff]
          %v2210 = vld [vmem:[%s2035 + $0xb3] sm:$0xff]
          %v2211 = vld [vmem:[%s2 + $0xd] sm:$0x1]
          %v2212 = vlaneseq
          %v2213 = vshrl.u32 %v2212, 7
          %v2214 = vsub.s32 0, %v2213
          %v2215 = vrot.slane %v2211, %v2214
          %v2216 = vmul.f32 %v2195, %v2215
          %v2217 = vmul.f32 %v2196, %v2215
          %v2218 = vmul.f32 %v2197, %v2215
          %v2219 = vmul.f32 %v2198, %v2215
          %v2220 = vmul.f32 %v2199, %v2215
          %v2221 = vmul.f32 %v2200, %v2215
          %v2222 = vmul.f32 %v2201, %v2215
          %v2223 = vmul.f32 %v2202, %v2215
          %v2224 = vmul.f32 %v2203, %v2215
          %v2225 = vmul.f32 %v2204, %v2215
          %v2226 = vmul.f32 %v2205, %v2215
          %v2227 = vmul.f32 %v2206, %v2215
          %v2228 = vmul.f32 %v2207, %v2215
          %v2229 = vmul.f32 %v2208, %v2215
          %v2230 = vmul.f32 %v2209, %v2215
          %v2231 = vmul.f32 %v2210, %v2215
          %v2232 = vadd.f32 %v2179, %v2216
          %v2233 = vadd.f32 %v2180, %v2217
          %v2234 = vadd.f32 %v2181, %v2218
          %v2235 = vadd.f32 %v2182, %v2219
          %v2236 = vadd.f32 %v2183, %v2220
          %v2237 = vadd.f32 %v2184, %v2221
          %v2238 = vadd.f32 %v2185, %v2222
          %v2239 = vadd.f32 %v2186, %v2223
          %v2240 = vadd.f32 %v2187, %v2224
          %v2241 = vadd.f32 %v2188, %v2225
          %v2242 = vadd.f32 %v2189, %v2226
          %v2243 = vadd.f32 %v2190, %v2227
          %v2244 = vadd.f32 %v2191, %v2228
          %v2245 = vadd.f32 %v2192, %v2229
          %v2246 = vadd.f32 %v2193, %v2230
          %v2247 = vadd.f32 %v2194, %v2231
          %v2248 = vld [vmem:[%s2035 + $0x4] sm:$0xff]
          %v2249 = vld [vmem:[%s2035 + $0xc] sm:$0xff]
          %v2250 = vld [vmem:[%s2035 + $0x1c] sm:$0xff]
          %v2251 = vld [vmem:[%s2035 + $0x24] sm:$0xff]
          %v2252 = vld [vmem:[%s2035 + $0x34] sm:$0xff]
          %v2253 = vld [vmem:[%s2035 + $0x3c] sm:$0xff]
          %v2254 = vld [vmem:[%s2035 + $0x4c] sm:$0xff]
          %v2255 = vld [vmem:[%s2035 + $0x54] sm:$0xff]
          %v2256 = vld [vmem:[%s2035 + $0x64] sm:$0xff]
          %v2257 = vld [vmem:[%s2035 + $0x6c] sm:$0xff]
          %v2258 = vld [vmem:[%s2035 + $0x7c] sm:$0xff]
          %v2259 = vld [vmem:[%s2035 + $0x84] sm:$0xff]
          %v2260 = vld [vmem:[%s2035 + $0x94] sm:$0xff]
          %v2261 = vld [vmem:[%s2035 + $0x9c] sm:$0xff]
          %v2262 = vld [vmem:[%s2035 + $0xac] sm:$0xff]
          %v2263 = vld [vmem:[%s2035 + $0xb4] sm:$0xff]
          %v2264 = vld [vmem:[%s2 + $0xe] sm:$0x1]
          %v2265 = vlaneseq
          %v2266 = vshrl.u32 %v2265, 7
          %v2267 = vsub.s32 0, %v2266
          %v2268 = vrot.slane %v2264, %v2267
          %v2269 = vmul.f32 %v2248, %v2268
          %v2270 = vmul.f32 %v2249, %v2268
          %v2271 = vmul.f32 %v2250, %v2268
          %v2272 = vmul.f32 %v2251, %v2268
          %v2273 = vmul.f32 %v2252, %v2268
          %v2274 = vmul.f32 %v2253, %v2268
          %v2275 = vmul.f32 %v2254, %v2268
          %v2276 = vmul.f32 %v2255, %v2268
          %v2277 = vmul.f32 %v2256, %v2268
          %v2278 = vmul.f32 %v2257, %v2268
          %v2279 = vmul.f32 %v2258, %v2268
          %v2280 = vmul.f32 %v2259, %v2268
          %v2281 = vmul.f32 %v2260, %v2268
          %v2282 = vmul.f32 %v2261, %v2268
          %v2283 = vmul.f32 %v2262, %v2268
          %v2284 = vmul.f32 %v2263, %v2268
          %v2285 = vadd.f32 %v2232, %v2269
          %v2286 = vadd.f32 %v2233, %v2270
          %v2287 = vadd.f32 %v2234, %v2271
          %v2288 = vadd.f32 %v2235, %v2272
          %v2289 = vadd.f32 %v2236, %v2273
          %v2290 = vadd.f32 %v2237, %v2274
          %v2291 = vadd.f32 %v2238, %v2275
          %v2292 = vadd.f32 %v2239, %v2276
          %v2293 = vadd.f32 %v2240, %v2277
          %v2294 = vadd.f32 %v2241, %v2278
          %v2295 = vadd.f32 %v2242, %v2279
          %v2296 = vadd.f32 %v2243, %v2280
          %v2297 = vadd.f32 %v2244, %v2281
          %v2298 = vadd.f32 %v2245, %v2282
          %v2299 = vadd.f32 %v2246, %v2283
          %v2300 = vadd.f32 %v2247, %v2284
          %s2301 = sadd.s32 %s1497, 3
          %s2302 = smul.u32 %s2301, 24
          %s2303 = scalar_lea.vmem [#allocation3], %s2302
          %v2304 = vld [vmem:[%s2303] sm:$0xff]
          %v2305 = vld [vmem:[%s2303 + $0x8] sm:$0xff]
          %v2306 = vld [vmem:[%s2303 + $0x18] sm:$0xff]
          %v2307 = vld [vmem:[%s2303 + $0x20] sm:$0xff]
          %v2308 = vld [vmem:[%s2303 + $0x30] sm:$0xff]
          %v2309 = vld [vmem:[%s2303 + $0x38] sm:$0xff]
          %v2310 = vld [vmem:[%s2303 + $0x48] sm:$0xff]
          %v2311 = vld [vmem:[%s2303 + $0x50] sm:$0xff]
          %v2312 = vld [vmem:[%s2303 + $0x60] sm:$0xff]
          %v2313 = vld [vmem:[%s2303 + $0x68] sm:$0xff]
          %v2314 = vld [vmem:[%s2303 + $0x78] sm:$0xff]
          %v2315 = vld [vmem:[%s2303 + $0x80] sm:$0xff]
          %v2316 = vld [vmem:[%s2303 + $0x90] sm:$0xff]
          %v2317 = vld [vmem:[%s2303 + $0x98] sm:$0xff]
          %v2318 = vld [vmem:[%s2303 + $0xa8] sm:$0xff]
          %v2319 = vld [vmem:[%s2303 + $0xb0] sm:$0xff]
          %v2320 = vld [vmem:[%s2 + $0xf] sm:$0x1]
          %v2321 = vlaneseq
          %v2322 = vshrl.u32 %v2321, 7
          %v2323 = vsub.s32 0, %v2322
          %v2324 = vrot.slane %v2320, %v2323
          %v2325 = vmul.f32 %v2304, %v2324
          %v2326 = vmul.f32 %v2305, %v2324
          %v2327 = vmul.f32 %v2306, %v2324
          %v2328 = vmul.f32 %v2307, %v2324
          %v2329 = vmul.f32 %v2308, %v2324
          %v2330 = vmul.f32 %v2309, %v2324
          %v2331 = vmul.f32 %v2310, %v2324
          %v2332 = vmul.f32 %v2311, %v2324
          %v2333 = vmul.f32 %v2312, %v2324
          %v2334 = vmul.f32 %v2313, %v2324
          %v2335 = vmul.f32 %v2314, %v2324
          %v2336 = vmul.f32 %v2315, %v2324
          %v2337 = vmul.f32 %v2316, %v2324
          %v2338 = vmul.f32 %v2317, %v2324
          %v2339 = vmul.f32 %v2318, %v2324
          %v2340 = vmul.f32 %v2319, %v2324
          %v2341 = vadd.f32 %v2285, %v2325
          %v2342 = vadd.f32 %v2286, %v2326
          %v2343 = vadd.f32 %v2287, %v2327
          %v2344 = vadd.f32 %v2288, %v2328
          %v2345 = vadd.f32 %v2289, %v2329
          %v2346 = vadd.f32 %v2290, %v2330
          %v2347 = vadd.f32 %v2291, %v2331
          %v2348 = vadd.f32 %v2292, %v2332
          %v2349 = vadd.f32 %v2293, %v2333
          %v2350 = vadd.f32 %v2294, %v2334
          %v2351 = vadd.f32 %v2295, %v2335
          %v2352 = vadd.f32 %v2296, %v2336
          %v2353 = vadd.f32 %v2297, %v2337
          %v2354 = vadd.f32 %v2298, %v2338
          %v2355 = vadd.f32 %v2299, %v2339
          %v2356 = vadd.f32 %v2300, %v2340
          %v2357 = vld [vmem:[%s2303 + $0x1] sm:$0xff]
          %v2358 = vld [vmem:[%s2303 + $0x9] sm:$0xff]
          %v2359 = vld [vmem:[%s2303 + $0x19] sm:$0xff]
          %v2360 = vld [vmem:[%s2303 + $0x21] sm:$0xff]
          %v2361 = vld [vmem:[%s2303 + $0x31] sm:$0xff]
          %v2362 = vld [vmem:[%s2303 + $0x39] sm:$0xff]
          %v2363 = vld [vmem:[%s2303 + $0x49] sm:$0xff]
          %v2364 = vld [vmem:[%s2303 + $0x51] sm:$0xff]
          %v2365 = vld [vmem:[%s2303 + $0x61] sm:$0xff]
          %v2366 = vld [vmem:[%s2303 + $0x69] sm:$0xff]
          %v2367 = vld [vmem:[%s2303 + $0x79] sm:$0xff]
          %v2368 = vld [vmem:[%s2303 + $0x81] sm:$0xff]
          %v2369 = vld [vmem:[%s2303 + $0x91] sm:$0xff]
          %v2370 = vld [vmem:[%s2303 + $0x99] sm:$0xff]
          %v2371 = vld [vmem:[%s2303 + $0xa9] sm:$0xff]
          %v2372 = vld [vmem:[%s2303 + $0xb1] sm:$0xff]
          %v2373 = vld [vmem:[%s2 + $0x10] sm:$0x1]
          %v2374 = vlaneseq
          %v2375 = vshrl.u32 %v2374, 7
          %v2376 = vsub.s32 0, %v2375
          %v2377 = vrot.slane %v2373, %v2376
          %v2378 = vmul.f32 %v2357, %v2377
          %v2379 = vmul.f32 %v2358, %v2377
          %v2380 = vmul.f32 %v2359, %v2377
          %v2381 = vmul.f32 %v2360, %v2377
          %v2382 = vmul.f32 %v2361, %v2377
          %v2383 = vmul.f32 %v2362, %v2377
          %v2384 = vmul.f32 %v2363, %v2377
          %v2385 = vmul.f32 %v2364, %v2377
          %v2386 = vmul.f32 %v2365, %v2377
          %v2387 = vmul.f32 %v2366, %v2377
          %v2388 = vmul.f32 %v2367, %v2377
          %v2389 = vmul.f32 %v2368, %v2377
          %v2390 = vmul.f32 %v2369, %v2377
          %v2391 = vmul.f32 %v2370, %v2377
          %v2392 = vmul.f32 %v2371, %v2377
          %v2393 = vmul.f32 %v2372, %v2377
          %v2394 = vadd.f32 %v2341, %v2378
          %v2395 = vadd.f32 %v2342, %v2379
          %v2396 = vadd.f32 %v2343, %v2380
          %v2397 = vadd.f32 %v2344, %v2381
          %v2398 = vadd.f32 %v2345, %v2382
          %v2399 = vadd.f32 %v2346, %v2383
          %v2400 = vadd.f32 %v2347, %v2384
          %v2401 = vadd.f32 %v2348, %v2385
          %v2402 = vadd.f32 %v2349, %v2386
          %v2403 = vadd.f32 %v2350, %v2387
          %v2404 = vadd.f32 %v2351, %v2388
          %v2405 = vadd.f32 %v2352, %v2389
          %v2406 = vadd.f32 %v2353, %v2390
          %v2407 = vadd.f32 %v2354, %v2391
          %v2408 = vadd.f32 %v2355, %v2392
          %v2409 = vadd.f32 %v2356, %v2393
          %v2410 = vld [vmem:[%s2303 + $0x2] sm:$0xff]
          %v2411 = vld [vmem:[%s2303 + $0xa] sm:$0xff]
          %v2412 = vld [vmem:[%s2303 + $0x1a] sm:$0xff]
          %v2413 = vld [vmem:[%s2303 + $0x22] sm:$0xff]
          %v2414 = vld [vmem:[%s2303 + $0x32] sm:$0xff]
          %v2415 = vld [vmem:[%s2303 + $0x3a] sm:$0xff]
          %v2416 = vld [vmem:[%s2303 + $0x4a] sm:$0xff]
          %v2417 = vld [vmem:[%s2303 + $0x52] sm:$0xff]
          %v2418 = vld [vmem:[%s2303 + $0x62] sm:$0xff]
          %v2419 = vld [vmem:[%s2303 + $0x6a] sm:$0xff]
          %v2420 = vld [vmem:[%s2303 + $0x7a] sm:$0xff]
          %v2421 = vld [vmem:[%s2303 + $0x82] sm:$0xff]
          %v2422 = vld [vmem:[%s2303 + $0x92] sm:$0xff]
          %v2423 = vld [vmem:[%s2303 + $0x9a] sm:$0xff]
          %v2424 = vld [vmem:[%s2303 + $0xaa] sm:$0xff]
          %v2425 = vld [vmem:[%s2303 + $0xb2] sm:$0xff]
          %v2426 = vld [vmem:[%s2 + $0x11] sm:$0x1]
          %v2427 = vlaneseq
          %v2428 = vshrl.u32 %v2427, 7
          %v2429 = vsub.s32 0, %v2428
          %v2430 = vrot.slane %v2426, %v2429
          %v2431 = vmul.f32 %v2410, %v2430
          %v2432 = vmul.f32 %v2411, %v2430
          %v2433 = vmul.f32 %v2412, %v2430
          %v2434 = vmul.f32 %v2413, %v2430
          %v2435 = vmul.f32 %v2414, %v2430
          %v2436 = vmul.f32 %v2415, %v2430
          %v2437 = vmul.f32 %v2416, %v2430
          %v2438 = vmul.f32 %v2417, %v2430
          %v2439 = vmul.f32 %v2418, %v2430
          %v2440 = vmul.f32 %v2419, %v2430
          %v2441 = vmul.f32 %v2420, %v2430
          %v2442 = vmul.f32 %v2421, %v2430
          %v2443 = vmul.f32 %v2422, %v2430
          %v2444 = vmul.f32 %v2423, %v2430
          %v2445 = vmul.f32 %v2424, %v2430
          %v2446 = vmul.f32 %v2425, %v2430
          %v2447 = vadd.f32 %v2394, %v2431
          %v2448 = vadd.f32 %v2395, %v2432
          %v2449 = vadd.f32 %v2396, %v2433
          %v2450 = vadd.f32 %v2397, %v2434
          %v2451 = vadd.f32 %v2398, %v2435
          %v2452 = vadd.f32 %v2399, %v2436
          %v2453 = vadd.f32 %v2400, %v2437
          %v2454 = vadd.f32 %v2401, %v2438
          %v2455 = vadd.f32 %v2402, %v2439
          %v2456 = vadd.f32 %v2403, %v2440
          %v2457 = vadd.f32 %v2404, %v2441
          %v2458 = vadd.f32 %v2405, %v2442
          %v2459 = vadd.f32 %v2406, %v2443
          %v2460 = vadd.f32 %v2407, %v2444
          %v2461 = vadd.f32 %v2408, %v2445
          %v2462 = vadd.f32 %v2409, %v2446
          %v2463 = vld [vmem:[%s2303 + $0x3] sm:$0xff]
          %v2464 = vld [vmem:[%s2303 + $0xb] sm:$0xff]
          %v2465 = vld [vmem:[%s2303 + $0x1b] sm:$0xff]
          %v2466 = vld [vmem:[%s2303 + $0x23] sm:$0xff]
          %v2467 = vld [vmem:[%s2303 + $0x33] sm:$0xff]
          %v2468 = vld [vmem:[%s2303 + $0x3b] sm:$0xff]
          %v2469 = vld [vmem:[%s2303 + $0x4b] sm:$0xff]
          %v2470 = vld [vmem:[%s2303 + $0x53] sm:$0xff]
          %v2471 = vld [vmem:[%s2303 + $0x63] sm:$0xff]
          %v2472 = vld [vmem:[%s2303 + $0x6b] sm:$0xff]
          %v2473 = vld [vmem:[%s2303 + $0x7b] sm:$0xff]
          %v2474 = vld [vmem:[%s2303 + $0x83] sm:$0xff]
          %v2475 = vld [vmem:[%s2303 + $0x93] sm:$0xff]
          %v2476 = vld [vmem:[%s2303 + $0x9b] sm:$0xff]
          %v2477 = vld [vmem:[%s2303 + $0xab] sm:$0xff]
          %v2478 = vld [vmem:[%s2303 + $0xb3] sm:$0xff]
          %v2479 = vld [vmem:[%s2 + $0x12] sm:$0x1]
          %v2480 = vlaneseq
          %v2481 = vshrl.u32 %v2480, 7
          %v2482 = vsub.s32 0, %v2481
          %v2483 = vrot.slane %v2479, %v2482
          %v2484 = vmul.f32 %v2463, %v2483
          %v2485 = vmul.f32 %v2464, %v2483
          %v2486 = vmul.f32 %v2465, %v2483
          %v2487 = vmul.f32 %v2466, %v2483
          %v2488 = vmul.f32 %v2467, %v2483
          %v2489 = vmul.f32 %v2468, %v2483
          %v2490 = vmul.f32 %v2469, %v2483
          %v2491 = vmul.f32 %v2470, %v2483
          %v2492 = vmul.f32 %v2471, %v2483
          %v2493 = vmul.f32 %v2472, %v2483
          %v2494 = vmul.f32 %v2473, %v2483
          %v2495 = vmul.f32 %v2474, %v2483
          %v2496 = vmul.f32 %v2475, %v2483
          %v2497 = vmul.f32 %v2476, %v2483
          %v2498 = vmul.f32 %v2477, %v2483
          %v2499 = vmul.f32 %v2478, %v2483
          %v2500 = vadd.f32 %v2447, %v2484
          %v2501 = vadd.f32 %v2448, %v2485
          %v2502 = vadd.f32 %v2449, %v2486
          %v2503 = vadd.f32 %v2450, %v2487
          %v2504 = vadd.f32 %v2451, %v2488
          %v2505 = vadd.f32 %v2452, %v2489
          %v2506 = vadd.f32 %v2453, %v2490
          %v2507 = vadd.f32 %v2454, %v2491
          %v2508 = vadd.f32 %v2455, %v2492
          %v2509 = vadd.f32 %v2456, %v2493
          %v2510 = vadd.f32 %v2457, %v2494
          %v2511 = vadd.f32 %v2458, %v2495
          %v2512 = vadd.f32 %v2459, %v2496
          %v2513 = vadd.f32 %v2460, %v2497
          %v2514 = vadd.f32 %v2461, %v2498
          %v2515 = vadd.f32 %v2462, %v2499
          %v2516 = vld [vmem:[%s2303 + $0x4] sm:$0xff]
          %v2517 = vld [vmem:[%s2303 + $0xc] sm:$0xff]
          %v2518 = vld [vmem:[%s2303 + $0x1c] sm:$0xff]
          %v2519 = vld [vmem:[%s2303 + $0x24] sm:$0xff]
          %v2520 = vld [vmem:[%s2303 + $0x34] sm:$0xff]
          %v2521 = vld [vmem:[%s2303 + $0x3c] sm:$0xff]
          %v2522 = vld [vmem:[%s2303 + $0x4c] sm:$0xff]
          %v2523 = vld [vmem:[%s2303 + $0x54] sm:$0xff]
          %v2524 = vld [vmem:[%s2303 + $0x64] sm:$0xff]
          %v2525 = vld [vmem:[%s2303 + $0x6c] sm:$0xff]
          %v2526 = vld [vmem:[%s2303 + $0x7c] sm:$0xff]
          %v2527 = vld [vmem:[%s2303 + $0x84] sm:$0xff]
          %v2528 = vld [vmem:[%s2303 + $0x94] sm:$0xff]
          %v2529 = vld [vmem:[%s2303 + $0x9c] sm:$0xff]
          %v2530 = vld [vmem:[%s2303 + $0xac] sm:$0xff]
          %v2531 = vld [vmem:[%s2303 + $0xb4] sm:$0xff]
          %v2532 = vld [vmem:[%s2 + $0x13] sm:$0x1]
          %v2533 = vlaneseq
          %v2534 = vshrl.u32 %v2533, 7
          %v2535 = vsub.s32 0, %v2534
          %v2536 = vrot.slane %v2532, %v2535
          %v2537 = vmul.f32 %v2516, %v2536
          %v2538 = vmul.f32 %v2517, %v2536
          %v2539 = vmul.f32 %v2518, %v2536
          %v2540 = vmul.f32 %v2519, %v2536
          %v2541 = vmul.f32 %v2520, %v2536
          %v2542 = vmul.f32 %v2521, %v2536
          %v2543 = vmul.f32 %v2522, %v2536
          %v2544 = vmul.f32 %v2523, %v2536
          %v2545 = vmul.f32 %v2524, %v2536
          %v2546 = vmul.f32 %v2525, %v2536
          %v2547 = vmul.f32 %v2526, %v2536
          %v2548 = vmul.f32 %v2527, %v2536
          %v2549 = vmul.f32 %v2528, %v2536
          %v2550 = vmul.f32 %v2529, %v2536
          %v2551 = vmul.f32 %v2530, %v2536
          %v2552 = vmul.f32 %v2531, %v2536
          %v2553 = vadd.f32 %v2500, %v2537
          %v2554 = vadd.f32 %v2501, %v2538
          %v2555 = vadd.f32 %v2502, %v2539
          %v2556 = vadd.f32 %v2503, %v2540
          %v2557 = vadd.f32 %v2504, %v2541
          %v2558 = vadd.f32 %v2505, %v2542
          %v2559 = vadd.f32 %v2506, %v2543
          %v2560 = vadd.f32 %v2507, %v2544
          %v2561 = vadd.f32 %v2508, %v2545
          %v2562 = vadd.f32 %v2509, %v2546
          %v2563 = vadd.f32 %v2510, %v2547
          %v2564 = vadd.f32 %v2511, %v2548
          %v2565 = vadd.f32 %v2512, %v2549
          %v2566 = vadd.f32 %v2513, %v2550
          %v2567 = vadd.f32 %v2514, %v2551
          %v2568 = vadd.f32 %v2515, %v2552
          %s2569 = sadd.s32 %s1497, 4
          %s2570 = smul.u32 %s2569, 24
          %s2571 = scalar_lea.vmem [#allocation3], %s2570
          %v2572 = vld [vmem:[%s2571] sm:$0xff]
          %v2573 = vld [vmem:[%s2571 + $0x8] sm:$0xff]
          %v2574 = vld [vmem:[%s2571 + $0x18] sm:$0xff]
          %v2575 = vld [vmem:[%s2571 + $0x20] sm:$0xff]
          %v2576 = vld [vmem:[%s2571 + $0x30] sm:$0xff]
          %v2577 = vld [vmem:[%s2571 + $0x38] sm:$0xff]
          %v2578 = vld [vmem:[%s2571 + $0x48] sm:$0xff]
          %v2579 = vld [vmem:[%s2571 + $0x50] sm:$0xff]
          %v2580 = vld [vmem:[%s2571 + $0x60] sm:$0xff]
          %v2581 = vld [vmem:[%s2571 + $0x68] sm:$0xff]
          %v2582 = vld [vmem:[%s2571 + $0x78] sm:$0xff]
          %v2583 = vld [vmem:[%s2571 + $0x80] sm:$0xff]
          %v2584 = vld [vmem:[%s2571 + $0x90] sm:$0xff]
          %v2585 = vld [vmem:[%s2571 + $0x98] sm:$0xff]
          %v2586 = vld [vmem:[%s2571 + $0xa8] sm:$0xff]
          %v2587 = vld [vmem:[%s2571 + $0xb0] sm:$0xff]
          %v2588 = vld [vmem:[%s2 + $0x14] sm:$0x1]
          %v2589 = vlaneseq
          %v2590 = vshrl.u32 %v2589, 7
          %v2591 = vsub.s32 0, %v2590
          %v2592 = vrot.slane %v2588, %v2591
          %v2593 = vmul.f32 %v2572, %v2592
          %v2594 = vmul.f32 %v2573, %v2592
          %v2595 = vmul.f32 %v2574, %v2592
          %v2596 = vmul.f32 %v2575, %v2592
          %v2597 = vmul.f32 %v2576, %v2592
          %v2598 = vmul.f32 %v2577, %v2592
          %v2599 = vmul.f32 %v2578, %v2592
          %v2600 = vmul.f32 %v2579, %v2592
          %v2601 = vmul.f32 %v2580, %v2592
          %v2602 = vmul.f32 %v2581, %v2592
          %v2603 = vmul.f32 %v2582, %v2592
          %v2604 = vmul.f32 %v2583, %v2592
          %v2605 = vmul.f32 %v2584, %v2592
          %v2606 = vmul.f32 %v2585, %v2592
          %v2607 = vmul.f32 %v2586, %v2592
          %v2608 = vmul.f32 %v2587, %v2592
          %v2609 = vadd.f32 %v2553, %v2593
          %v2610 = vadd.f32 %v2554, %v2594
          %v2611 = vadd.f32 %v2555, %v2595
          %v2612 = vadd.f32 %v2556, %v2596
          %v2613 = vadd.f32 %v2557, %v2597
          %v2614 = vadd.f32 %v2558, %v2598
          %v2615 = vadd.f32 %v2559, %v2599
          %v2616 = vadd.f32 %v2560, %v2600
          %v2617 = vadd.f32 %v2561, %v2601
          %v2618 = vadd.f32 %v2562, %v2602
          %v2619 = vadd.f32 %v2563, %v2603
          %v2620 = vadd.f32 %v2564, %v2604
          %v2621 = vadd.f32 %v2565, %v2605
          %v2622 = vadd.f32 %v2566, %v2606
          %v2623 = vadd.f32 %v2567, %v2607
          %v2624 = vadd.f32 %v2568, %v2608
          %v2625 = vld [vmem:[%s2571 + $0x1] sm:$0xff]
          %v2626 = vld [vmem:[%s2571 + $0x9] sm:$0xff]
          %v2627 = vld [vmem:[%s2571 + $0x19] sm:$0xff]
          %v2628 = vld [vmem:[%s2571 + $0x21] sm:$0xff]
          %v2629 = vld [vmem:[%s2571 + $0x31] sm:$0xff]
          %v2630 = vld [vmem:[%s2571 + $0x39] sm:$0xff]
          %v2631 = vld [vmem:[%s2571 + $0x49] sm:$0xff]
          %v2632 = vld [vmem:[%s2571 + $0x51] sm:$0xff]
          %v2633 = vld [vmem:[%s2571 + $0x61] sm:$0xff]
          %v2634 = vld [vmem:[%s2571 + $0x69] sm:$0xff]
          %v2635 = vld [vmem:[%s2571 + $0x79] sm:$0xff]
          %v2636 = vld [vmem:[%s2571 + $0x81] sm:$0xff]
          %v2637 = vld [vmem:[%s2571 + $0x91] sm:$0xff]
          %v2638 = vld [vmem:[%s2571 + $0x99] sm:$0xff]
          %v2639 = vld [vmem:[%s2571 + $0xa9] sm:$0xff]
          %v2640 = vld [vmem:[%s2571 + $0xb1] sm:$0xff]
          %v2641 = vld [vmem:[%s2 + $0x15] sm:$0x1]
          %v2642 = vlaneseq
          %v2643 = vshrl.u32 %v2642, 7
          %v2644 = vsub.s32 0, %v2643
          %v2645 = vrot.slane %v2641, %v2644
          %v2646 = vmul.f32 %v2625, %v2645
          %v2647 = vmul.f32 %v2626, %v2645
          %v2648 = vmul.f32 %v2627, %v2645
          %v2649 = vmul.f32 %v2628, %v2645
          %v2650 = vmul.f32 %v2629, %v2645
          %v2651 = vmul.f32 %v2630, %v2645
          %v2652 = vmul.f32 %v2631, %v2645
          %v2653 = vmul.f32 %v2632, %v2645
          %v2654 = vmul.f32 %v2633, %v2645
          %v2655 = vmul.f32 %v2634, %v2645
          %v2656 = vmul.f32 %v2635, %v2645
          %v2657 = vmul.f32 %v2636, %v2645
          %v2658 = vmul.f32 %v2637, %v2645
          %v2659 = vmul.f32 %v2638, %v2645
          %v2660 = vmul.f32 %v2639, %v2645
          %v2661 = vmul.f32 %v2640, %v2645
          %v2662 = vadd.f32 %v2609, %v2646
          %v2663 = vadd.f32 %v2610, %v2647
          %v2664 = vadd.f32 %v2611, %v2648
          %v2665 = vadd.f32 %v2612, %v2649
          %v2666 = vadd.f32 %v2613, %v2650
          %v2667 = vadd.f32 %v2614, %v2651
          %v2668 = vadd.f32 %v2615, %v2652
          %v2669 = vadd.f32 %v2616, %v2653
          %v2670 = vadd.f32 %v2617, %v2654
          %v2671 = vadd.f32 %v2618, %v2655
          %v2672 = vadd.f32 %v2619, %v2656
          %v2673 = vadd.f32 %v2620, %v2657
          %v2674 = vadd.f32 %v2621, %v2658
          %v2675 = vadd.f32 %v2622, %v2659
          %v2676 = vadd.f32 %v2623, %v2660
          %v2677 = vadd.f32 %v2624, %v2661
          %v2678 = vld [vmem:[%s2571 + $0x2] sm:$0xff]
          %v2679 = vld [vmem:[%s2571 + $0xa] sm:$0xff]
          %v2680 = vld [vmem:[%s2571 + $0x1a] sm:$0xff]
          %v2681 = vld [vmem:[%s2571 + $0x22] sm:$0xff]
          %v2682 = vld [vmem:[%s2571 + $0x32] sm:$0xff]
          %v2683 = vld [vmem:[%s2571 + $0x3a] sm:$0xff]
          %v2684 = vld [vmem:[%s2571 + $0x4a] sm:$0xff]
          %v2685 = vld [vmem:[%s2571 + $0x52] sm:$0xff]
          %v2686 = vld [vmem:[%s2571 + $0x62] sm:$0xff]
          %v2687 = vld [vmem:[%s2571 + $0x6a] sm:$0xff]
          %v2688 = vld [vmem:[%s2571 + $0x7a] sm:$0xff]
          %v2689 = vld [vmem:[%s2571 + $0x82] sm:$0xff]
          %v2690 = vld [vmem:[%s2571 + $0x92] sm:$0xff]
          %v2691 = vld [vmem:[%s2571 + $0x9a] sm:$0xff]
          %v2692 = vld [vmem:[%s2571 + $0xaa] sm:$0xff]
          %v2693 = vld [vmem:[%s2571 + $0xb2] sm:$0xff]
          %v2694 = vld [vmem:[%s2 + $0x16] sm:$0x1]
          %v2695 = vlaneseq
          %v2696 = vshrl.u32 %v2695, 7
          %v2697 = vsub.s32 0, %v2696
          %v2698 = vrot.slane %v2694, %v2697
          %v2699 = vmul.f32 %v2678, %v2698
          %v2700 = vmul.f32 %v2679, %v2698
          %v2701 = vmul.f32 %v2680, %v2698
          %v2702 = vmul.f32 %v2681, %v2698
          %v2703 = vmul.f32 %v2682, %v2698
          %v2704 = vmul.f32 %v2683, %v2698
          %v2705 = vmul.f32 %v2684, %v2698
          %v2706 = vmul.f32 %v2685, %v2698
          %v2707 = vmul.f32 %v2686, %v2698
          %v2708 = vmul.f32 %v2687, %v2698
          %v2709 = vmul.f32 %v2688, %v2698
          %v2710 = vmul.f32 %v2689, %v2698
          %v2711 = vmul.f32 %v2690, %v2698
          %v2712 = vmul.f32 %v2691, %v2698
          %v2713 = vmul.f32 %v2692, %v2698
          %v2714 = vmul.f32 %v2693, %v2698
          %v2715 = vadd.f32 %v2662, %v2699
          %v2716 = vadd.f32 %v2663, %v2700
          %v2717 = vadd.f32 %v2664, %v2701
          %v2718 = vadd.f32 %v2665, %v2702
          %v2719 = vadd.f32 %v2666, %v2703
          %v2720 = vadd.f32 %v2667, %v2704
          %v2721 = vadd.f32 %v2668, %v2705
          %v2722 = vadd.f32 %v2669, %v2706
          %v2723 = vadd.f32 %v2670, %v2707
          %v2724 = vadd.f32 %v2671, %v2708
          %v2725 = vadd.f32 %v2672, %v2709
          %v2726 = vadd.f32 %v2673, %v2710
          %v2727 = vadd.f32 %v2674, %v2711
          %v2728 = vadd.f32 %v2675, %v2712
          %v2729 = vadd.f32 %v2676, %v2713
          %v2730 = vadd.f32 %v2677, %v2714
          %v2731 = vld [vmem:[%s2571 + $0x3] sm:$0xff]
          %v2732 = vld [vmem:[%s2571 + $0xb] sm:$0xff]
          %v2733 = vld [vmem:[%s2571 + $0x1b] sm:$0xff]
          %v2734 = vld [vmem:[%s2571 + $0x23] sm:$0xff]
          %v2735 = vld [vmem:[%s2571 + $0x33] sm:$0xff]
          %v2736 = vld [vmem:[%s2571 + $0x3b] sm:$0xff]
          %v2737 = vld [vmem:[%s2571 + $0x4b] sm:$0xff]
          %v2738 = vld [vmem:[%s2571 + $0x53] sm:$0xff]
          %v2739 = vld [vmem:[%s2571 + $0x63] sm:$0xff]
          %v2740 = vld [vmem:[%s2571 + $0x6b] sm:$0xff]
          %v2741 = vld [vmem:[%s2571 + $0x7b] sm:$0xff]
          %v2742 = vld [vmem:[%s2571 + $0x83] sm:$0xff]
          %v2743 = vld [vmem:[%s2571 + $0x93] sm:$0xff]
          %v2744 = vld [vmem:[%s2571 + $0x9b] sm:$0xff]
          %v2745 = vld [vmem:[%s2571 + $0xab] sm:$0xff]
          %v2746 = vld [vmem:[%s2571 + $0xb3] sm:$0xff]
          %v2747 = vld [vmem:[%s2 + $0x17] sm:$0x1]
          %v2748 = vlaneseq
          %v2749 = vshrl.u32 %v2748, 7
          %v2750 = vsub.s32 0, %v2749
          %v2751 = vrot.slane %v2747, %v2750
          %v2752 = vmul.f32 %v2731, %v2751
          %v2753 = vmul.f32 %v2732, %v2751
          %v2754 = vmul.f32 %v2733, %v2751
          %v2755 = vmul.f32 %v2734, %v2751
          %v2756 = vmul.f32 %v2735, %v2751
          %v2757 = vmul.f32 %v2736, %v2751
          %v2758 = vmul.f32 %v2737, %v2751
          %v2759 = vmul.f32 %v2738, %v2751
          %v2760 = vmul.f32 %v2739, %v2751
          %v2761 = vmul.f32 %v2740, %v2751
          %v2762 = vmul.f32 %v2741, %v2751
          %v2763 = vmul.f32 %v2742, %v2751
          %v2764 = vmul.f32 %v2743, %v2751
          %v2765 = vmul.f32 %v2744, %v2751
          %v2766 = vmul.f32 %v2745, %v2751
          %v2767 = vmul.f32 %v2746, %v2751
          %v2768 = vadd.f32 %v2715, %v2752
          %v2769 = vadd.f32 %v2716, %v2753
          %v2770 = vadd.f32 %v2717, %v2754
          %v2771 = vadd.f32 %v2718, %v2755
          %v2772 = vadd.f32 %v2719, %v2756
          %v2773 = vadd.f32 %v2720, %v2757
          %v2774 = vadd.f32 %v2721, %v2758
          %v2775 = vadd.f32 %v2722, %v2759
          %v2776 = vadd.f32 %v2723, %v2760
          %v2777 = vadd.f32 %v2724, %v2761
          %v2778 = vadd.f32 %v2725, %v2762
          %v2779 = vadd.f32 %v2726, %v2763
          %v2780 = vadd.f32 %v2727, %v2764
          %v2781 = vadd.f32 %v2728, %v2765
          %v2782 = vadd.f32 %v2729, %v2766
          %v2783 = vadd.f32 %v2730, %v2767
          %v2784 = vld [vmem:[%s2571 + $0x4] sm:$0xff]
          %v2785 = vld [vmem:[%s2571 + $0xc] sm:$0xff]
          %v2786 = vld [vmem:[%s2571 + $0x1c] sm:$0xff]
          %v2787 = vld [vmem:[%s2571 + $0x24] sm:$0xff]
          %v2788 = vld [vmem:[%s2571 + $0x34] sm:$0xff]
          %v2789 = vld [vmem:[%s2571 + $0x3c] sm:$0xff]
          %v2790 = vld [vmem:[%s2571 + $0x4c] sm:$0xff]
          %v2791 = vld [vmem:[%s2571 + $0x54] sm:$0xff]
          %v2792 = vld [vmem:[%s2571 + $0x64] sm:$0xff]
          %v2793 = vld [vmem:[%s2571 + $0x6c] sm:$0xff]
          %v2794 = vld [vmem:[%s2571 + $0x7c] sm:$0xff]
          %v2795 = vld [vmem:[%s2571 + $0x84] sm:$0xff]
          %v2796 = vld [vmem:[%s2571 + $0x94] sm:$0xff]
          %v2797 = vld [vmem:[%s2571 + $0x9c] sm:$0xff]
          %v2798 = vld [vmem:[%s2571 + $0xac] sm:$0xff]
          %v2799 = vld [vmem:[%s2571 + $0xb4] sm:$0xff]
          %v2800 = vld [vmem:[%s2 + $0x18] sm:$0x1]
          %v2801 = vlaneseq
          %v2802 = vshrl.u32 %v2801, 7
          %v2803 = vsub.s32 0, %v2802
          %v2804 = vrot.slane %v2800, %v2803
          %v2805 = vmul.f32 %v2784, %v2804
          %v2806 = vmul.f32 %v2785, %v2804
          %v2807 = vmul.f32 %v2786, %v2804
          %v2808 = vmul.f32 %v2787, %v2804
          %v2809 = vmul.f32 %v2788, %v2804
          %v2810 = vmul.f32 %v2789, %v2804
          %v2811 = vmul.f32 %v2790, %v2804
          %v2812 = vmul.f32 %v2791, %v2804
          %v2813 = vmul.f32 %v2792, %v2804
          %v2814 = vmul.f32 %v2793, %v2804
          %v2815 = vmul.f32 %v2794, %v2804
          %v2816 = vmul.f32 %v2795, %v2804
          %v2817 = vmul.f32 %v2796, %v2804
          %v2818 = vmul.f32 %v2797, %v2804
          %v2819 = vmul.f32 %v2798, %v2804
          %v2820 = vmul.f32 %v2799, %v2804
          %v2821 = vadd.f32 %v2768, %v2805
          %v2822 = vadd.f32 %v2769, %v2806
          %v2823 = vadd.f32 %v2770, %v2807
          %v2824 = vadd.f32 %v2771, %v2808
          %v2825 = vadd.f32 %v2772, %v2809
          %v2826 = vadd.f32 %v2773, %v2810
          %v2827 = vadd.f32 %v2774, %v2811
          %v2828 = vadd.f32 %v2775, %v2812
          %v2829 = vadd.f32 %v2776, %v2813
          %v2830 = vadd.f32 %v2777, %v2814
          %v2831 = vadd.f32 %v2778, %v2815
          %v2832 = vadd.f32 %v2779, %v2816
          %v2833 = vadd.f32 %v2780, %v2817
          %v2834 = vadd.f32 %v2781, %v2818
          %v2835 = vadd.f32 %v2782, %v2819
          %v2836 = vadd.f32 %v2783, %v2820
          %v2837 = vld [vmem:[%s3] sm:$0x1]
          %v2839 = vlaneseq
          %v2840 = vshrl.u32 %v2839, 7
          %v2841 = vsub.s32 0, %v2840
          %v2842 = vrot.slane %v2837, %v2841
          %v2844 = vadd.f32 %v2821, %v2842
          %v2845 = vadd.f32 %v2822, %v2842
          %v2846 = vadd.f32 %v2823, %v2842
          %v2847 = vadd.f32 %v2824, %v2842
          %v2848 = vadd.f32 %v2825, %v2842
          %v2849 = vadd.f32 %v2826, %v2842
          %v2850 = vadd.f32 %v2827, %v2842
          %v2851 = vadd.f32 %v2828, %v2842
          %v2852 = vadd.f32 %v2829, %v2842
          %v2853 = vadd.f32 %v2830, %v2842
          %v2854 = vadd.f32 %v2831, %v2842
          %v2855 = vadd.f32 %v2832, %v2842
          %v2856 = vadd.f32 %v2833, %v2842
          %v2857 = vadd.f32 %v2834, %v2842
          %v2858 = vadd.f32 %v2835, %v2842
          %v2859 = vadd.f32 %v2836, %v2842
          %v2860 = vmax.f32 %v2844, 0.0
          %v2861 = vmax.f32 %v2845, 0.0
          %v2862 = vmax.f32 %v2846, 0.0
          %v2863 = vmax.f32 %v2847, 0.0
          %v2864 = vmax.f32 %v2848, 0.0
          %v2865 = vmax.f32 %v2849, 0.0
          %v2866 = vmax.f32 %v2850, 0.0
          %v2867 = vmax.f32 %v2851, 0.0
          %v2868 = vmax.f32 %v2852, 0.0
          %v2869 = vmax.f32 %v2853, 0.0
          %v2870 = vmax.f32 %v2854, 0.0
          %v2871 = vmax.f32 %v2855, 0.0
          %v2872 = vmax.f32 %v2856, 0.0
          %v2873 = vmax.f32 %v2857, 0.0
          %v2874 = vmax.f32 %v2858, 0.0
          %v2875 = vmax.f32 %v2859, 0.0
          %s2876 = scalar_lea.vmem [#allocation4], %s2034
          %2877 = vst [vmem:[%s2876 + $0x2] sm:$0xff] %v2860
          %2878 = vst [vmem:[%s2876 + $0xa] sm:$0xff] %v2861
          %2879 = vst [vmem:[%s2876 + $0x1a] sm:$0xff] %v2862
          %2880 = vst [vmem:[%s2876 + $0x22] sm:$0xff] %v2863
          %2881 = vst [vmem:[%s2876 + $0x32] sm:$0xff] %v2864
          %2882 = vst [vmem:[%s2876 + $0x3a] sm:$0xff] %v2865
          %2883 = vst [vmem:[%s2876 + $0x4a] sm:$0xff] %v2866
          %2884 = vst [vmem:[%s2876 + $0x52] sm:$0xff] %v2867
          %2885 = vst [vmem:[%s2876 + $0x62] sm:$0xff] %v2868
          %2886 = vst [vmem:[%s2876 + $0x6a] sm:$0xff] %v2869
          %2887 = vst [vmem:[%s2876 + $0x7a] sm:$0xff] %v2870
          %2888 = vst [vmem:[%s2876 + $0x82] sm:$0xff] %v2871
          %2889 = vst [vmem:[%s2876 + $0x92] sm:$0xff] %v2872
          %2890 = vst [vmem:[%s2876 + $0x9a] sm:$0xff] %v2873
          %2891 = vst [vmem:[%s2876 + $0xaa] sm:$0xff] %v2874
          %2892 = vst [vmem:[%s2876 + $0xb2] sm:$0xff] %v2875
        $region49: #{conv_filter_forward.1} parent=39 // loop_footer
          %s1496 = sadd.s32 1, %s1492
        $region50: #{conv_filter_forward.1} parent=39 // loop_footer_branch
          %1491 = sbr.rel target = $region46
        $region51: #{conv_filter_forward.1} parent=39 // loop_exit
          _
        loop: start=0, step=1, limit=2
        $region52: #{conv_filter_forward.1} parent=39 // loop_pre_header
          _
        $region53: #{conv_filter_forward.1} parent=39 // loop_header
          %s2894 = sphi 0, %s2898
          %p2895 = scmp.ge.s32.totalorder %s2894, 2
        $region54: #{conv_filter_forward.1} parent=39 // loop_header_branch
          %2897 = sbr.rel (%p2895) target = $region58
        $region55: #{conv_filter_forward.1} parent=39 // loop_body
          %s2899 = smul.u32 %s2894, 8
          %s2900 = smul.u32 %s2899, 24
          %s2901 = scalar_lea.vmem [#allocation4], %s2900
          %v2902 = vld [vmem:[%s2901] sm:$0xff]
          %v2903 = vld [vmem:[%s2901 + $0x8] sm:$0xff]
          %v2904 = vld [vmem:[%s2901 + $0x18] sm:$0xff]
          %v2905 = vld [vmem:[%s2901 + $0x20] sm:$0xff]
          %v2906 = vld [vmem:[%s2901 + $0x30] sm:$0xff]
          %v2907 = vld [vmem:[%s2901 + $0x38] sm:$0xff]
          %v2908 = vld [vmem:[%s2901 + $0x48] sm:$0xff]
          %v2909 = vld [vmem:[%s2901 + $0x50] sm:$0xff]
          %v2910 = vld [vmem:[%s2901 + $0x60] sm:$0xff]
          %v2911 = vld [vmem:[%s2901 + $0x68] sm:$0xff]
          %v2912 = vld [vmem:[%s2901 + $0x78] sm:$0xff]
          %v2913 = vld [vmem:[%s2901 + $0x80] sm:$0xff]
          %v2914 = vld [vmem:[%s2901 + $0x90] sm:$0xff]
          %v2915 = vld [vmem:[%s2901 + $0x98] sm:$0xff]
          %v2916 = vld [vmem:[%s2901 + $0xa8] sm:$0xff]
          %v2917 = vld [vmem:[%s2901 + $0xb0] sm:$0xff]
          %v2918 = vld [vmem:[%s4] sm:$0x1]
          %v2919 = vlaneseq
          %v2920 = vshrl.u32 %v2919, 7
          %v2921 = vsub.s32 0, %v2920
          %v2922 = vrot.slane %v2918, %v2921
          %v2923 = vmul.f32 %v2902, %v2922
          %v2924 = vmul.f32 %v2903, %v2922
          %v2925 = vmul.f32 %v2904, %v2922
          %v2926 = vmul.f32 %v2905, %v2922
          %v2927 = vmul.f32 %v2906, %v2922
          %v2928 = vmul.f32 %v2907, %v2922
          %v2929 = vmul.f32 %v2908, %v2922
          %v2930 = vmul.f32 %v2909, %v2922
          %v2931 = vmul.f32 %v2910, %v2922
          %v2932 = vmul.f32 %v2911, %v2922
          %v2933 = vmul.f32 %v2912, %v2922
          %v2934 = vmul.f32 %v2913, %v2922
          %v2935 = vmul.f32 %v2914, %v2922
          %v2936 = vmul.f32 %v2915, %v2922
          %v2937 = vmul.f32 %v2916, %v2922
          %v2938 = vmul.f32 %v2917, %v2922
          %v2939 = vadd.f32 %v2923, 0.0
          %v2940 = vadd.f32 %v2924, 0.0
          %v2941 = vadd.f32 %v2925, 0.0
          %v2942 = vadd.f32 %v2926, 0.0
          %v2943 = vadd.f32 %v2927, 0.0
          %v2944 = vadd.f32 %v2928, 0.0
          %v2945 = vadd.f32 %v2929, 0.0
          %v2946 = vadd.f32 %v2930, 0.0
          %v2947 = vadd.f32 %v2931, 0.0
          %v2948 = vadd.f32 %v2932, 0.0
          %v2949 = vadd.f32 %v2933, 0.0
          %v2950 = vadd.f32 %v2934, 0.0
          %v2951 = vadd.f32 %v2935, 0.0
          %v2952 = vadd.f32 %v2936, 0.0
          %v2953 = vadd.f32 %v2937, 0.0
          %v2954 = vadd.f32 %v2938, 0.0
          %v2955 = vld [vmem:[%s2901 + $0x1] sm:$0xff]
          %v2956 = vld [vmem:[%s2901 + $0x9] sm:$0xff]
          %v2957 = vld [vmem:[%s2901 + $0x19] sm:$0xff]
          %v2958 = vld [vmem:[%s2901 + $0x21] sm:$0xff]
          %v2959 = vld [vmem:[%s2901 + $0x31] sm:$0xff]
          %v2960 = vld [vmem:[%s2901 + $0x39] sm:$0xff]
          %v2961 = vld [vmem:[%s2901 + $0x49] sm:$0xff]
          %v2962 = vld [vmem:[%s2901 + $0x51] sm:$0xff]
          %v2963 = vld [vmem:[%s2901 + $0x61] sm:$0xff]
          %v2964 = vld [vmem:[%s2901 + $0x69] sm:$0xff]
          %v2965 = vld [vmem:[%s2901 + $0x79] sm:$0xff]
          %v2966 = vld [vmem:[%s2901 + $0x81] sm:$0xff]
          %v2967 = vld [vmem:[%s2901 + $0x91] sm:$0xff]
          %v2968 = vld [vmem:[%s2901 + $0x99] sm:$0xff]
          %v2969 = vld [vmem:[%s2901 + $0xa9] sm:$0xff]
          %v2970 = vld [vmem:[%s2901 + $0xb1] sm:$0xff]
          %v2971 = vld [vmem:[%s4 + $0x1] sm:$0x1]
          %v2972 = vlaneseq
          %v2973 = vshrl.u32 %v2972, 7
          %v2974 = vsub.s32 0, %v2973
          %v2975 = vrot.slane %v2971, %v2974
          %v2976 = vmul.f32 %v2955, %v2975
          %v2977 = vmul.f32 %v2956, %v2975
          %v2978 = vmul.f32 %v2957, %v2975
          %v2979 = vmul.f32 %v2958, %v2975
          %v2980 = vmul.f32 %v2959, %v2975
          %v2981 = vmul.f32 %v2960, %v2975
          %v2982 = vmul.f32 %v2961, %v2975
          %v2983 = vmul.f32 %v2962, %v2975
          %v2984 = vmul.f32 %v2963, %v2975
          %v2985 = vmul.f32 %v2964, %v2975
          %v2986 = vmul.f32 %v2965, %v2975
          %v2987 = vmul.f32 %v2966, %v2975
          %v2988 = vmul.f32 %v2967, %v2975
          %v2989 = vmul.f32 %v2968, %v2975
          %v2990 = vmul.f32 %v2969, %v2975
          %v2991 = vmul.f32 %v2970, %v2975
          %v2992 = vadd.f32 %v2939, %v2976
          %v2993 = vadd.f32 %v2940, %v2977
          %v2994 = vadd.f32 %v2941, %v2978
          %v2995 = vadd.f32 %v2942, %v2979
          %v2996 = vadd.f32 %v2943, %v2980
          %v2997 = vadd.f32 %v2944, %v2981
          %v2998 = vadd.f32 %v2945, %v2982
          %v2999 = vadd.f32 %v2946, %v2983
          %v3000 = vadd.f32 %v2947, %v2984
          %v3001 = vadd.f32 %v2948, %v2985
          %v3002 = vadd.f32 %v2949, %v2986
          %v3003 = vadd.f32 %v2950, %v2987
          %v3004 = vadd.f32 %v2951, %v2988
          %v3005 = vadd.f32 %v2952, %v2989
          %v3006 = vadd.f32 %v2953, %v2990
          %v3007 = vadd.f32 %v2954, %v2991
          %v3008 = vld [vmem:[%s2901 + $0x2] sm:$0xff]
          %v3009 = vld [vmem:[%s2901 + $0xa] sm:$0xff]
          %v3010 = vld [vmem:[%s2901 + $0x1a] sm:$0xff]
          %v3011 = vld [vmem:[%s2901 + $0x22] sm:$0xff]
          %v3012 = vld [vmem:[%s2901 + $0x32] sm:$0xff]
          %v3013 = vld [vmem:[%s2901 + $0x3a] sm:$0xff]
          %v3014 = vld [vmem:[%s2901 + $0x4a] sm:$0xff]
          %v3015 = vld [vmem:[%s2901 + $0x52] sm:$0xff]
          %v3016 = vld [vmem:[%s2901 + $0x62] sm:$0xff]
          %v3017 = vld [vmem:[%s2901 + $0x6a] sm:$0xff]
          %v3018 = vld [vmem:[%s2901 + $0x7a] sm:$0xff]
          %v3019 = vld [vmem:[%s2901 + $0x82] sm:$0xff]
          %v3020 = vld [vmem:[%s2901 + $0x92] sm:$0xff]
          %v3021 = vld [vmem:[%s2901 + $0x9a] sm:$0xff]
          %v3022 = vld [vmem:[%s2901 + $0xaa] sm:$0xff]
          %v3023 = vld [vmem:[%s2901 + $0xb2] sm:$0xff]
          %v3024 = vld [vmem:[%s4 + $0x2] sm:$0x1]
          %v3025 = vlaneseq
          %v3026 = vshrl.u32 %v3025, 7
          %v3027 = vsub.s32 0, %v3026
          %v3028 = vrot.slane %v3024, %v3027
          %v3029 = vmul.f32 %v3008, %v3028
          %v3030 = vmul.f32 %v3009, %v3028
          %v3031 = vmul.f32 %v3010, %v3028
          %v3032 = vmul.f32 %v3011, %v3028
          %v3033 = vmul.f32 %v3012, %v3028
          %v3034 = vmul.f32 %v3013, %v3028
          %v3035 = vmul.f32 %v3014, %v3028
          %v3036 = vmul.f32 %v3015, %v3028
          %v3037 = vmul.f32 %v3016, %v3028
          %v3038 = vmul.f32 %v3017, %v3028
          %v3039 = vmul.f32 %v3018, %v3028
          %v3040 = vmul.f32 %v3019, %v3028
          %v3041 = vmul.f32 %v3020, %v3028
          %v3042 = vmul.f32 %v3021, %v3028
          %v3043 = vmul.f32 %v3022, %v3028
          %v3044 = vmul.f32 %v3023, %v3028
          %v3045 = vadd.f32 %v2992, %v3029
          %v3046 = vadd.f32 %v2993, %v3030
          %v3047 = vadd.f32 %v2994, %v3031
          %v3048 = vadd.f32 %v2995, %v3032
          %v3049 = vadd.f32 %v2996, %v3033
          %v3050 = vadd.f32 %v2997, %v3034
          %v3051 = vadd.f32 %v2998, %v3035
          %v3052 = vadd.f32 %v2999, %v3036
          %v3053 = vadd.f32 %v3000, %v3037
          %v3054 = vadd.f32 %v3001, %v3038
          %v3055 = vadd.f32 %v3002, %v3039
          %v3056 = vadd.f32 %v3003, %v3040
          %v3057 = vadd.f32 %v3004, %v3041
          %v3058 = vadd.f32 %v3005, %v3042
          %v3059 = vadd.f32 %v3006, %v3043
          %v3060 = vadd.f32 %v3007, %v3044
          %v3061 = vld [vmem:[%s2901 + $0x3] sm:$0xff]
          %v3062 = vld [vmem:[%s2901 + $0xb] sm:$0xff]
          %v3063 = vld [vmem:[%s2901 + $0x1b] sm:$0xff]
          %v3064 = vld [vmem:[%s2901 + $0x23] sm:$0xff]
          %v3065 = vld [vmem:[%s2901 + $0x33] sm:$0xff]
          %v3066 = vld [vmem:[%s2901 + $0x3b] sm:$0xff]
          %v3067 = vld [vmem:[%s2901 + $0x4b] sm:$0xff]
          %v3068 = vld [vmem:[%s2901 + $0x53] sm:$0xff]
          %v3069 = vld [vmem:[%s2901 + $0x63] sm:$0xff]
          %v3070 = vld [vmem:[%s2901 + $0x6b] sm:$0xff]
          %v3071 = vld [vmem:[%s2901 + $0x7b] sm:$0xff]
          %v3072 = vld [vmem:[%s2901 + $0x83] sm:$0xff]
          %v3073 = vld [vmem:[%s2901 + $0x93] sm:$0xff]
          %v3074 = vld [vmem:[%s2901 + $0x9b] sm:$0xff]
          %v3075 = vld [vmem:[%s2901 + $0xab] sm:$0xff]
          %v3076 = vld [vmem:[%s2901 + $0xb3] sm:$0xff]
          %v3077 = vld [vmem:[%s4 + $0x3] sm:$0x1]
          %v3078 = vlaneseq
          %v3079 = vshrl.u32 %v3078, 7
          %v3080 = vsub.s32 0, %v3079
          %v3081 = vrot.slane %v3077, %v3080
          %v3082 = vmul.f32 %v3061, %v3081
          %v3083 = vmul.f32 %v3062, %v3081
          %v3084 = vmul.f32 %v3063, %v3081
          %v3085 = vmul.f32 %v3064, %v3081
          %v3086 = vmul.f32 %v3065, %v3081
          %v3087 = vmul.f32 %v3066, %v3081
          %v3088 = vmul.f32 %v3067, %v3081
          %v3089 = vmul.f32 %v3068, %v3081
          %v3090 = vmul.f32 %v3069, %v3081
          %v3091 = vmul.f32 %v3070, %v3081
          %v3092 = vmul.f32 %v3071, %v3081
          %v3093 = vmul.f32 %v3072, %v3081
          %v3094 = vmul.f32 %v3073, %v3081
          %v3095 = vmul.f32 %v3074, %v3081
          %v3096 = vmul.f32 %v3075, %v3081
          %v3097 = vmul.f32 %v3076, %v3081
          %v3098 = vadd.f32 %v3045, %v3082
          %v3099 = vadd.f32 %v3046, %v3083
          %v3100 = vadd.f32 %v3047, %v3084
          %v3101 = vadd.f32 %v3048, %v3085
          %v3102 = vadd.f32 %v3049, %v3086
          %v3103 = vadd.f32 %v3050, %v3087
          %v3104 = vadd.f32 %v3051, %v3088
          %v3105 = vadd.f32 %v3052, %v3089
          %v3106 = vadd.f32 %v3053, %v3090
          %v3107 = vadd.f32 %v3054, %v3091
          %v3108 = vadd.f32 %v3055, %v3092
          %v3109 = vadd.f32 %v3056, %v3093
          %v3110 = vadd.f32 %v3057, %v3094
          %v3111 = vadd.f32 %v3058, %v3095
          %v3112 = vadd.f32 %v3059, %v3096
          %v3113 = vadd.f32 %v3060, %v3097
          %v3114 = vld [vmem:[%s2901 + $0x4] sm:$0xff]
          %v3115 = vld [vmem:[%s2901 + $0xc] sm:$0xff]
          %v3116 = vld [vmem:[%s2901 + $0x1c] sm:$0xff]
          %v3117 = vld [vmem:[%s2901 + $0x24] sm:$0xff]
          %v3118 = vld [vmem:[%s2901 + $0x34] sm:$0xff]
          %v3119 = vld [vmem:[%s2901 + $0x3c] sm:$0xff]
          %v3120 = vld [vmem:[%s2901 + $0x4c] sm:$0xff]
          %v3121 = vld [vmem:[%s2901 + $0x54] sm:$0xff]
          %v3122 = vld [vmem:[%s2901 + $0x64] sm:$0xff]
          %v3123 = vld [vmem:[%s2901 + $0x6c] sm:$0xff]
          %v3124 = vld [vmem:[%s2901 + $0x7c] sm:$0xff]
          %v3125 = vld [vmem:[%s2901 + $0x84] sm:$0xff]
          %v3126 = vld [vmem:[%s2901 + $0x94] sm:$0xff]
          %v3127 = vld [vmem:[%s2901 + $0x9c] sm:$0xff]
          %v3128 = vld [vmem:[%s2901 + $0xac] sm:$0xff]
          %v3129 = vld [vmem:[%s2901 + $0xb4] sm:$0xff]
          %v3130 = vld [vmem:[%s4 + $0x4] sm:$0x1]
          %v3131 = vlaneseq
          %v3132 = vshrl.u32 %v3131, 7
          %v3133 = vsub.s32 0, %v3132
          %v3134 = vrot.slane %v3130, %v3133
          %v3135 = vmul.f32 %v3114, %v3134
          %v3136 = vmul.f32 %v3115, %v3134
          %v3137 = vmul.f32 %v3116, %v3134
          %v3138 = vmul.f32 %v3117, %v3134
          %v3139 = vmul.f32 %v3118, %v3134
          %v3140 = vmul.f32 %v3119, %v3134
          %v3141 = vmul.f32 %v3120, %v3134
          %v3142 = vmul.f32 %v3121, %v3134
          %v3143 = vmul.f32 %v3122, %v3134
          %v3144 = vmul.f32 %v3123, %v3134
          %v3145 = vmul.f32 %v3124, %v3134
          %v3146 = vmul.f32 %v3125, %v3134
          %v3147 = vmul.f32 %v3126, %v3134
          %v3148 = vmul.f32 %v3127, %v3134
          %v3149 = vmul.f32 %v3128, %v3134
          %v3150 = vmul.f32 %v3129, %v3134
          %v3151 = vadd.f32 %v3098, %v3135
          %v3152 = vadd.f32 %v3099, %v3136
          %v3153 = vadd.f32 %v3100, %v3137
          %v3154 = vadd.f32 %v3101, %v3138
          %v3155 = vadd.f32 %v3102, %v3139
          %v3156 = vadd.f32 %v3103, %v3140
          %v3157 = vadd.f32 %v3104, %v3141
          %v3158 = vadd.f32 %v3105, %v3142
          %v3159 = vadd.f32 %v3106, %v3143
          %v3160 = vadd.f32 %v3107, %v3144
          %v3161 = vadd.f32 %v3108, %v3145
          %v3162 = vadd.f32 %v3109, %v3146
          %v3163 = vadd.f32 %v3110, %v3147
          %v3164 = vadd.f32 %v3111, %v3148
          %v3165 = vadd.f32 %v3112, %v3149
          %v3166 = vadd.f32 %v3113, %v3150
          %s3167 = sadd.s32 %s2899, 1
          %s3168 = smul.u32 %s3167, 24
          %s3169 = scalar_lea.vmem [#allocation4], %s3168
          %v3170 = vld [vmem:[%s3169] sm:$0xff]
          %v3171 = vld [vmem:[%s3169 + $0x8] sm:$0xff]
          %v3172 = vld [vmem:[%s3169 + $0x18] sm:$0xff]
          %v3173 = vld [vmem:[%s3169 + $0x20] sm:$0xff]
          %v3174 = vld [vmem:[%s3169 + $0x30] sm:$0xff]
          %v3175 = vld [vmem:[%s3169 + $0x38] sm:$0xff]
          %v3176 = vld [vmem:[%s3169 + $0x48] sm:$0xff]
          %v3177 = vld [vmem:[%s3169 + $0x50] sm:$0xff]
          %v3178 = vld [vmem:[%s3169 + $0x60] sm:$0xff]
          %v3179 = vld [vmem:[%s3169 + $0x68] sm:$0xff]
          %v3180 = vld [vmem:[%s3169 + $0x78] sm:$0xff]
          %v3181 = vld [vmem:[%s3169 + $0x80] sm:$0xff]
          %v3182 = vld [vmem:[%s3169 + $0x90] sm:$0xff]
          %v3183 = vld [vmem:[%s3169 + $0x98] sm:$0xff]
          %v3184 = vld [vmem:[%s3169 + $0xa8] sm:$0xff]
          %v3185 = vld [vmem:[%s3169 + $0xb0] sm:$0xff]
          %v3186 = vld [vmem:[%s4 + $0x5] sm:$0x1]
          %v3187 = vlaneseq
          %v3188 = vshrl.u32 %v3187, 7
          %v3189 = vsub.s32 0, %v3188
          %v3190 = vrot.slane %v3186, %v3189
          %v3191 = vmul.f32 %v3170, %v3190
          %v3192 = vmul.f32 %v3171, %v3190
          %v3193 = vmul.f32 %v3172, %v3190
          %v3194 = vmul.f32 %v3173, %v3190
          %v3195 = vmul.f32 %v3174, %v3190
          %v3196 = vmul.f32 %v3175, %v3190
          %v3197 = vmul.f32 %v3176, %v3190
          %v3198 = vmul.f32 %v3177, %v3190
          %v3199 = vmul.f32 %v3178, %v3190
          %v3200 = vmul.f32 %v3179, %v3190
          %v3201 = vmul.f32 %v3180, %v3190
          %v3202 = vmul.f32 %v3181, %v3190
          %v3203 = vmul.f32 %v3182, %v3190
          %v3204 = vmul.f32 %v3183, %v3190
          %v3205 = vmul.f32 %v3184, %v3190
          %v3206 = vmul.f32 %v3185, %v3190
          %v3207 = vadd.f32 %v3151, %v3191
          %v3208 = vadd.f32 %v3152, %v3192
          %v3209 = vadd.f32 %v3153, %v3193
          %v3210 = vadd.f32 %v3154, %v3194
          %v3211 = vadd.f32 %v3155, %v3195
          %v3212 = vadd.f32 %v3156, %v3196
          %v3213 = vadd.f32 %v3157, %v3197
          %v3214 = vadd.f32 %v3158, %v3198
          %v3215 = vadd.f32 %v3159, %v3199
          %v3216 = vadd.f32 %v3160, %v3200
          %v3217 = vadd.f32 %v3161, %v3201
          %v3218 = vadd.f32 %v3162, %v3202
          %v3219 = vadd.f32 %v3163, %v3203
          %v3220 = vadd.f32 %v3164, %v3204
          %v3221 = vadd.f32 %v3165, %v3205
          %v3222 = vadd.f32 %v3166, %v3206
          %v3223 = vld [vmem:[%s3169 + $0x1] sm:$0xff]
          %v3224 = vld [vmem:[%s3169 + $0x9] sm:$0xff]
          %v3225 = vld [vmem:[%s3169 + $0x19] sm:$0xff]
          %v3226 = vld [vmem:[%s3169 + $0x21] sm:$0xff]
          %v3227 = vld [vmem:[%s3169 + $0x31] sm:$0xff]
          %v3228 = vld [vmem:[%s3169 + $0x39] sm:$0xff]
          %v3229 = vld [vmem:[%s3169 + $0x49] sm:$0xff]
          %v3230 = vld [vmem:[%s3169 + $0x51] sm:$0xff]
          %v3231 = vld [vmem:[%s3169 + $0x61] sm:$0xff]
          %v3232 = vld [vmem:[%s3169 + $0x69] sm:$0xff]
          %v3233 = vld [vmem:[%s3169 + $0x79] sm:$0xff]
          %v3234 = vld [vmem:[%s3169 + $0x81] sm:$0xff]
          %v3235 = vld [vmem:[%s3169 + $0x91] sm:$0xff]
          %v3236 = vld [vmem:[%s3169 + $0x99] sm:$0xff]
          %v3237 = vld [vmem:[%s3169 + $0xa9] sm:$0xff]
          %v3238 = vld [vmem:[%s3169 + $0xb1] sm:$0xff]
          %v3239 = vld [vmem:[%s4 + $0x6] sm:$0x1]
          %v3240 = vlaneseq
          %v3241 = vshrl.u32 %v3240, 7
          %v3242 = vsub.s32 0, %v3241
          %v3243 = vrot.slane %v3239, %v3242
          %v3244 = vmul.f32 %v3223, %v3243
          %v3245 = vmul.f32 %v3224, %v3243
          %v3246 = vmul.f32 %v3225, %v3243
          %v3247 = vmul.f32 %v3226, %v3243
          %v3248 = vmul.f32 %v3227, %v3243
          %v3249 = vmul.f32 %v3228, %v3243
          %v3250 = vmul.f32 %v3229, %v3243
          %v3251 = vmul.f32 %v3230, %v3243
          %v3252 = vmul.f32 %v3231, %v3243
          %v3253 = vmul.f32 %v3232, %v3243
          %v3254 = vmul.f32 %v3233, %v3243
          %v3255 = vmul.f32 %v3234, %v3243
          %v3256 = vmul.f32 %v3235, %v3243
          %v3257 = vmul.f32 %v3236, %v3243
          %v3258 = vmul.f32 %v3237, %v3243
          %v3259 = vmul.f32 %v3238, %v3243
          %v3260 = vadd.f32 %v3207, %v3244
          %v3261 = vadd.f32 %v3208, %v3245
          %v3262 = vadd.f32 %v3209, %v3246
          %v3263 = vadd.f32 %v3210, %v3247
          %v3264 = vadd.f32 %v3211, %v3248
          %v3265 = vadd.f32 %v3212, %v3249
          %v3266 = vadd.f32 %v3213, %v3250
          %v3267 = vadd.f32 %v3214, %v3251
          %v3268 = vadd.f32 %v3215, %v3252
          %v3269 = vadd.f32 %v3216, %v3253
          %v3270 = vadd.f32 %v3217, %v3254
          %v3271 = vadd.f32 %v3218, %v3255
          %v3272 = vadd.f32 %v3219, %v3256
          %v3273 = vadd.f32 %v3220, %v3257
          %v3274 = vadd.f32 %v3221, %v3258
          %v3275 = vadd.f32 %v3222, %v3259
          %v3276 = vld [vmem:[%s3169 + $0x2] sm:$0xff]
          %v3277 = vld [vmem:[%s3169 + $0xa] sm:$0xff]
          %v3278 = vld [vmem:[%s3169 + $0x1a] sm:$0xff]
          %v3279 = vld [vmem:[%s3169 + $0x22] sm:$0xff]
          %v3280 = vld [vmem:[%s3169 + $0x32] sm:$0xff]
          %v3281 = vld [vmem:[%s3169 + $0x3a] sm:$0xff]
          %v3282 = vld [vmem:[%s3169 + $0x4a] sm:$0xff]
          %v3283 = vld [vmem:[%s3169 + $0x52] sm:$0xff]
          %v3284 = vld [vmem:[%s3169 + $0x62] sm:$0xff]
          %v3285 = vld [vmem:[%s3169 + $0x6a] sm:$0xff]
          %v3286 = vld [vmem:[%s3169 + $0x7a] sm:$0xff]
          %v3287 = vld [vmem:[%s3169 + $0x82] sm:$0xff]
          %v3288 = vld [vmem:[%s3169 + $0x92] sm:$0xff]
          %v3289 = vld [vmem:[%s3169 + $0x9a] sm:$0xff]
          %v3290 = vld [vmem:[%s3169 + $0xaa] sm:$0xff]
          %v3291 = vld [vmem:[%s3169 + $0xb2] sm:$0xff]
          %v3292 = vld [vmem:[%s4 + $0x7] sm:$0x1]
          %v3293 = vlaneseq
          %v3294 = vshrl.u32 %v3293, 7
          %v3295 = vsub.s32 0, %v3294
          %v3296 = vrot.slane %v3292, %v3295
          %v3297 = vmul.f32 %v3276, %v3296
          %v3298 = vmul.f32 %v3277, %v3296
          %v3299 = vmul.f32 %v3278, %v3296
          %v3300 = vmul.f32 %v3279, %v3296
          %v3301 = vmul.f32 %v3280, %v3296
          %v3302 = vmul.f32 %v3281, %v3296
          %v3303 = vmul.f32 %v3282, %v3296
          %v3304 = vmul.f32 %v3283, %v3296
          %v3305 = vmul.f32 %v3284, %v3296
          %v3306 = vmul.f32 %v3285, %v3296
          %v3307 = vmul.f32 %v3286, %v3296
          %v3308 = vmul.f32 %v3287, %v3296
          %v3309 = vmul.f32 %v3288, %v3296
          %v3310 = vmul.f32 %v3289, %v3296
          %v3311 = vmul.f32 %v3290, %v3296
          %v3312 = vmul.f32 %v3291, %v3296
          %v3313 = vadd.f32 %v3260, %v3297
          %v3314 = vadd.f32 %v3261, %v3298
          %v3315 = vadd.f32 %v3262, %v3299
          %v3316 = vadd.f32 %v3263, %v3300
          %v3317 = vadd.f32 %v3264, %v3301
          %v3318 = vadd.f32 %v3265, %v3302
          %v3319 = vadd.f32 %v3266, %v3303
          %v3320 = vadd.f32 %v3267, %v3304
          %v3321 = vadd.f32 %v3268, %v3305
          %v3322 = vadd.f32 %v3269, %v3306
          %v3323 = vadd.f32 %v3270, %v3307
          %v3324 = vadd.f32 %v3271, %v3308
          %v3325 = vadd.f32 %v3272, %v3309
          %v3326 = vadd.f32 %v3273, %v3310
          %v3327 = vadd.f32 %v3274, %v3311
          %v3328 = vadd.f32 %v3275, %v3312
          %v3329 = vld [vmem:[%s3169 + $0x3] sm:$0xff]
          %v3330 = vld [vmem:[%s3169 + $0xb] sm:$0xff]
          %v3331 = vld [vmem:[%s3169 + $0x1b] sm:$0xff]
          %v3332 = vld [vmem:[%s3169 + $0x23] sm:$0xff]
          %v3333 = vld [vmem:[%s3169 + $0x33] sm:$0xff]
          %v3334 = vld [vmem:[%s3169 + $0x3b] sm:$0xff]
          %v3335 = vld [vmem:[%s3169 + $0x4b] sm:$0xff]
          %v3336 = vld [vmem:[%s3169 + $0x53] sm:$0xff]
          %v3337 = vld [vmem:[%s3169 + $0x63] sm:$0xff]
          %v3338 = vld [vmem:[%s3169 + $0x6b] sm:$0xff]
          %v3339 = vld [vmem:[%s3169 + $0x7b] sm:$0xff]
          %v3340 = vld [vmem:[%s3169 + $0x83] sm:$0xff]
          %v3341 = vld [vmem:[%s3169 + $0x93] sm:$0xff]
          %v3342 = vld [vmem:[%s3169 + $0x9b] sm:$0xff]
          %v3343 = vld [vmem:[%s3169 + $0xab] sm:$0xff]
          %v3344 = vld [vmem:[%s3169 + $0xb3] sm:$0xff]
          %v3345 = vld [vmem:[%s4 + $0x8] sm:$0x1]
          %v3346 = vlaneseq
          %v3347 = vshrl.u32 %v3346, 7
          %v3348 = vsub.s32 0, %v3347
          %v3349 = vrot.slane %v3345, %v3348
          %v3350 = vmul.f32 %v3329, %v3349
          %v3351 = vmul.f32 %v3330, %v3349
          %v3352 = vmul.f32 %v3331, %v3349
          %v3353 = vmul.f32 %v3332, %v3349
          %v3354 = vmul.f32 %v3333, %v3349
          %v3355 = vmul.f32 %v3334, %v3349
          %v3356 = vmul.f32 %v3335, %v3349
          %v3357 = vmul.f32 %v3336, %v3349
          %v3358 = vmul.f32 %v3337, %v3349
          %v3359 = vmul.f32 %v3338, %v3349
          %v3360 = vmul.f32 %v3339, %v3349
          %v3361 = vmul.f32 %v3340, %v3349
          %v3362 = vmul.f32 %v3341, %v3349
          %v3363 = vmul.f32 %v3342, %v3349
          %v3364 = vmul.f32 %v3343, %v3349
          %v3365 = vmul.f32 %v3344, %v3349
          %v3366 = vadd.f32 %v3313, %v3350
          %v3367 = vadd.f32 %v3314, %v3351
          %v3368 = vadd.f32 %v3315, %v3352
          %v3369 = vadd.f32 %v3316, %v3353
          %v3370 = vadd.f32 %v3317, %v3354
          %v3371 = vadd.f32 %v3318, %v3355
          %v3372 = vadd.f32 %v3319, %v3356
          %v3373 = vadd.f32 %v3320, %v3357
          %v3374 = vadd.f32 %v3321, %v3358
          %v3375 = vadd.f32 %v3322, %v3359
          %v3376 = vadd.f32 %v3323, %v3360
          %v3377 = vadd.f32 %v3324, %v3361
          %v3378 = vadd.f32 %v3325, %v3362
          %v3379 = vadd.f32 %v3326, %v3363
          %v3380 = vadd.f32 %v3327, %v3364
          %v3381 = vadd.f32 %v3328, %v3365
          %v3382 = vld [vmem:[%s3169 + $0x4] sm:$0xff]
          %v3383 = vld [vmem:[%s3169 + $0xc] sm:$0xff]
          %v3384 = vld [vmem:[%s3169 + $0x1c] sm:$0xff]
          %v3385 = vld [vmem:[%s3169 + $0x24] sm:$0xff]
          %v3386 = vld [vmem:[%s3169 + $0x34] sm:$0xff]
          %v3387 = vld [vmem:[%s3169 + $0x3c] sm:$0xff]
          %v3388 = vld [vmem:[%s3169 + $0x4c] sm:$0xff]
          %v3389 = vld [vmem:[%s3169 + $0x54] sm:$0xff]
          %v3390 = vld [vmem:[%s3169 + $0x64] sm:$0xff]
          %v3391 = vld [vmem:[%s3169 + $0x6c] sm:$0xff]
          %v3392 = vld [vmem:[%s3169 + $0x7c] sm:$0xff]
          %v3393 = vld [vmem:[%s3169 + $0x84] sm:$0xff]
          %v3394 = vld [vmem:[%s3169 + $0x94] sm:$0xff]
          %v3395 = vld [vmem:[%s3169 + $0x9c] sm:$0xff]
          %v3396 = vld [vmem:[%s3169 + $0xac] sm:$0xff]
          %v3397 = vld [vmem:[%s3169 + $0xb4] sm:$0xff]
          %v3398 = vld [vmem:[%s4 + $0x9] sm:$0x1]
          %v3399 = vlaneseq
          %v3400 = vshrl.u32 %v3399, 7
          %v3401 = vsub.s32 0, %v3400
          %v3402 = vrot.slane %v3398, %v3401
          %v3403 = vmul.f32 %v3382, %v3402
          %v3404 = vmul.f32 %v3383, %v3402
          %v3405 = vmul.f32 %v3384, %v3402
          %v3406 = vmul.f32 %v3385, %v3402
          %v3407 = vmul.f32 %v3386, %v3402
          %v3408 = vmul.f32 %v3387, %v3402
          %v3409 = vmul.f32 %v3388, %v3402
          %v3410 = vmul.f32 %v3389, %v3402
          %v3411 = vmul.f32 %v3390, %v3402
          %v3412 = vmul.f32 %v3391, %v3402
          %v3413 = vmul.f32 %v3392, %v3402
          %v3414 = vmul.f32 %v3393, %v3402
          %v3415 = vmul.f32 %v3394, %v3402
          %v3416 = vmul.f32 %v3395, %v3402
          %v3417 = vmul.f32 %v3396, %v3402
          %v3418 = vmul.f32 %v3397, %v3402
          %v3419 = vadd.f32 %v3366, %v3403
          %v3420 = vadd.f32 %v3367, %v3404
          %v3421 = vadd.f32 %v3368, %v3405
          %v3422 = vadd.f32 %v3369, %v3406
          %v3423 = vadd.f32 %v3370, %v3407
          %v3424 = vadd.f32 %v3371, %v3408
          %v3425 = vadd.f32 %v3372, %v3409
          %v3426 = vadd.f32 %v3373, %v3410
          %v3427 = vadd.f32 %v3374, %v3411
          %v3428 = vadd.f32 %v3375, %v3412
          %v3429 = vadd.f32 %v3376, %v3413
          %v3430 = vadd.f32 %v3377, %v3414
          %v3431 = vadd.f32 %v3378, %v3415
          %v3432 = vadd.f32 %v3379, %v3416
          %v3433 = vadd.f32 %v3380, %v3417
          %v3434 = vadd.f32 %v3381, %v3418
          %s3435 = sadd.s32 %s2899, 2
          %s3436 = smul.u32 %s3435, 24
          %s3437 = scalar_lea.vmem [#allocation4], %s3436
          %v3438 = vld [vmem:[%s3437] sm:$0xff]
          %v3439 = vld [vmem:[%s3437 + $0x8] sm:$0xff]
          %v3440 = vld [vmem:[%s3437 + $0x18] sm:$0xff]
          %v3441 = vld [vmem:[%s3437 + $0x20] sm:$0xff]
          %v3442 = vld [vmem:[%s3437 + $0x30] sm:$0xff]
          %v3443 = vld [vmem:[%s3437 + $0x38] sm:$0xff]
          %v3444 = vld [vmem:[%s3437 + $0x48] sm:$0xff]
          %v3445 = vld [vmem:[%s3437 + $0x50] sm:$0xff]
          %v3446 = vld [vmem:[%s3437 + $0x60] sm:$0xff]
          %v3447 = vld [vmem:[%s3437 + $0x68] sm:$0xff]
          %v3448 = vld [vmem:[%s3437 + $0x78] sm:$0xff]
          %v3449 = vld [vmem:[%s3437 + $0x80] sm:$0xff]
          %v3450 = vld [vmem:[%s3437 + $0x90] sm:$0xff]
          %v3451 = vld [vmem:[%s3437 + $0x98] sm:$0xff]
          %v3452 = vld [vmem:[%s3437 + $0xa8] sm:$0xff]
          %v3453 = vld [vmem:[%s3437 + $0xb0] sm:$0xff]
          %v3454 = vld [vmem:[%s4 + $0xa] sm:$0x1]
          %v3455 = vlaneseq
          %v3456 = vshrl.u32 %v3455, 7
          %v3457 = vsub.s32 0, %v3456
          %v3458 = vrot.slane %v3454, %v3457
          %v3459 = vmul.f32 %v3438, %v3458
          %v3460 = vmul.f32 %v3439, %v3458
          %v3461 = vmul.f32 %v3440, %v3458
          %v3462 = vmul.f32 %v3441, %v3458
          %v3463 = vmul.f32 %v3442, %v3458
          %v3464 = vmul.f32 %v3443, %v3458
          %v3465 = vmul.f32 %v3444, %v3458
          %v3466 = vmul.f32 %v3445, %v3458
          %v3467 = vmul.f32 %v3446, %v3458
          %v3468 = vmul.f32 %v3447, %v3458
          %v3469 = vmul.f32 %v3448, %v3458
          %v3470 = vmul.f32 %v3449, %v3458
          %v3471 = vmul.f32 %v3450, %v3458
          %v3472 = vmul.f32 %v3451, %v3458
          %v3473 = vmul.f32 %v3452, %v3458
          %v3474 = vmul.f32 %v3453, %v3458
          %v3475 = vadd.f32 %v3419, %v3459
          %v3476 = vadd.f32 %v3420, %v3460
          %v3477 = vadd.f32 %v3421, %v3461
          %v3478 = vadd.f32 %v3422, %v3462
          %v3479 = vadd.f32 %v3423, %v3463
          %v3480 = vadd.f32 %v3424, %v3464
          %v3481 = vadd.f32 %v3425, %v3465
          %v3482 = vadd.f32 %v3426, %v3466
          %v3483 = vadd.f32 %v3427, %v3467
          %v3484 = vadd.f32 %v3428, %v3468
          %v3485 = vadd.f32 %v3429, %v3469
          %v3486 = vadd.f32 %v3430, %v3470
          %v3487 = vadd.f32 %v3431, %v3471
          %v3488 = vadd.f32 %v3432, %v3472
          %v3489 = vadd.f32 %v3433, %v3473
          %v3490 = vadd.f32 %v3434, %v3474
          %v3491 = vld [vmem:[%s3437 + $0x1] sm:$0xff]
          %v3492 = vld [vmem:[%s3437 + $0x9] sm:$0xff]
          %v3493 = vld [vmem:[%s3437 + $0x19] sm:$0xff]
          %v3494 = vld [vmem:[%s3437 + $0x21] sm:$0xff]
          %v3495 = vld [vmem:[%s3437 + $0x31] sm:$0xff]
          %v3496 = vld [vmem:[%s3437 + $0x39] sm:$0xff]
          %v3497 = vld [vmem:[%s3437 + $0x49] sm:$0xff]
          %v3498 = vld [vmem:[%s3437 + $0x51] sm:$0xff]
          %v3499 = vld [vmem:[%s3437 + $0x61] sm:$0xff]
          %v3500 = vld [vmem:[%s3437 + $0x69] sm:$0xff]
          %v3501 = vld [vmem:[%s3437 + $0x79] sm:$0xff]
          %v3502 = vld [vmem:[%s3437 + $0x81] sm:$0xff]
          %v3503 = vld [vmem:[%s3437 + $0x91] sm:$0xff]
          %v3504 = vld [vmem:[%s3437 + $0x99] sm:$0xff]
          %v3505 = vld [vmem:[%s3437 + $0xa9] sm:$0xff]
          %v3506 = vld [vmem:[%s3437 + $0xb1] sm:$0xff]
          %v3507 = vld [vmem:[%s4 + $0xb] sm:$0x1]
          %v3508 = vlaneseq
          %v3509 = vshrl.u32 %v3508, 7
          %v3510 = vsub.s32 0, %v3509
          %v3511 = vrot.slane %v3507, %v3510
          %v3512 = vmul.f32 %v3491, %v3511
          %v3513 = vmul.f32 %v3492, %v3511
          %v3514 = vmul.f32 %v3493, %v3511
          %v3515 = vmul.f32 %v3494, %v3511
          %v3516 = vmul.f32 %v3495, %v3511
          %v3517 = vmul.f32 %v3496, %v3511
          %v3518 = vmul.f32 %v3497, %v3511
          %v3519 = vmul.f32 %v3498, %v3511
          %v3520 = vmul.f32 %v3499, %v3511
          %v3521 = vmul.f32 %v3500, %v3511
          %v3522 = vmul.f32 %v3501, %v3511
          %v3523 = vmul.f32 %v3502, %v3511
          %v3524 = vmul.f32 %v3503, %v3511
          %v3525 = vmul.f32 %v3504, %v3511
          %v3526 = vmul.f32 %v3505, %v3511
          %v3527 = vmul.f32 %v3506, %v3511
          %v3528 = vadd.f32 %v3475, %v3512
          %v3529 = vadd.f32 %v3476, %v3513
          %v3530 = vadd.f32 %v3477, %v3514
          %v3531 = vadd.f32 %v3478, %v3515
          %v3532 = vadd.f32 %v3479, %v3516
          %v3533 = vadd.f32 %v3480, %v3517
          %v3534 = vadd.f32 %v3481, %v3518
          %v3535 = vadd.f32 %v3482, %v3519
          %v3536 = vadd.f32 %v3483, %v3520
          %v3537 = vadd.f32 %v3484, %v3521
          %v3538 = vadd.f32 %v3485, %v3522
          %v3539 = vadd.f32 %v3486, %v3523
          %v3540 = vadd.f32 %v3487, %v3524
          %v3541 = vadd.f32 %v3488, %v3525
          %v3542 = vadd.f32 %v3489, %v3526
          %v3543 = vadd.f32 %v3490, %v3527
          %v3544 = vld [vmem:[%s3437 + $0x2] sm:$0xff]
          %v3545 = vld [vmem:[%s3437 + $0xa] sm:$0xff]
          %v3546 = vld [vmem:[%s3437 + $0x1a] sm:$0xff]
          %v3547 = vld [vmem:[%s3437 + $0x22] sm:$0xff]
          %v3548 = vld [vmem:[%s3437 + $0x32] sm:$0xff]
          %v3549 = vld [vmem:[%s3437 + $0x3a] sm:$0xff]
          %v3550 = vld [vmem:[%s3437 + $0x4a] sm:$0xff]
          %v3551 = vld [vmem:[%s3437 + $0x52] sm:$0xff]
          %v3552 = vld [vmem:[%s3437 + $0x62] sm:$0xff]
          %v3553 = vld [vmem:[%s3437 + $0x6a] sm:$0xff]
          %v3554 = vld [vmem:[%s3437 + $0x7a] sm:$0xff]
          %v3555 = vld [vmem:[%s3437 + $0x82] sm:$0xff]
          %v3556 = vld [vmem:[%s3437 + $0x92] sm:$0xff]
          %v3557 = vld [vmem:[%s3437 + $0x9a] sm:$0xff]
          %v3558 = vld [vmem:[%s3437 + $0xaa] sm:$0xff]
          %v3559 = vld [vmem:[%s3437 + $0xb2] sm:$0xff]
          %v3560 = vld [vmem:[%s4 + $0xc] sm:$0x1]
          %v3561 = vlaneseq
          %v3562 = vshrl.u32 %v3561, 7
          %v3563 = vsub.s32 0, %v3562
          %v3564 = vrot.slane %v3560, %v3563
          %v3565 = vmul.f32 %v3544, %v3564
          %v3566 = vmul.f32 %v3545, %v3564
          %v3567 = vmul.f32 %v3546, %v3564
          %v3568 = vmul.f32 %v3547, %v3564
          %v3569 = vmul.f32 %v3548, %v3564
          %v3570 = vmul.f32 %v3549, %v3564
          %v3571 = vmul.f32 %v3550, %v3564
          %v3572 = vmul.f32 %v3551, %v3564
          %v3573 = vmul.f32 %v3552, %v3564
          %v3574 = vmul.f32 %v3553, %v3564
          %v3575 = vmul.f32 %v3554, %v3564
          %v3576 = vmul.f32 %v3555, %v3564
          %v3577 = vmul.f32 %v3556, %v3564
          %v3578 = vmul.f32 %v3557, %v3564
          %v3579 = vmul.f32 %v3558, %v3564
          %v3580 = vmul.f32 %v3559, %v3564
          %v3581 = vadd.f32 %v3528, %v3565
          %v3582 = vadd.f32 %v3529, %v3566
          %v3583 = vadd.f32 %v3530, %v3567
          %v3584 = vadd.f32 %v3531, %v3568
          %v3585 = vadd.f32 %v3532, %v3569
          %v3586 = vadd.f32 %v3533, %v3570
          %v3587 = vadd.f32 %v3534, %v3571
          %v3588 = vadd.f32 %v3535, %v3572
          %v3589 = vadd.f32 %v3536, %v3573
          %v3590 = vadd.f32 %v3537, %v3574
          %v3591 = vadd.f32 %v3538, %v3575
          %v3592 = vadd.f32 %v3539, %v3576
          %v3593 = vadd.f32 %v3540, %v3577
          %v3594 = vadd.f32 %v3541, %v3578
          %v3595 = vadd.f32 %v3542, %v3579
          %v3596 = vadd.f32 %v3543, %v3580
          %v3597 = vld [vmem:[%s3437 + $0x3] sm:$0xff]
          %v3598 = vld [vmem:[%s3437 + $0xb] sm:$0xff]
          %v3599 = vld [vmem:[%s3437 + $0x1b] sm:$0xff]
          %v3600 = vld [vmem:[%s3437 + $0x23] sm:$0xff]
          %v3601 = vld [vmem:[%s3437 + $0x33] sm:$0xff]
          %v3602 = vld [vmem:[%s3437 + $0x3b] sm:$0xff]
          %v3603 = vld [vmem:[%s3437 + $0x4b] sm:$0xff]
          %v3604 = vld [vmem:[%s3437 + $0x53] sm:$0xff]
          %v3605 = vld [vmem:[%s3437 + $0x63] sm:$0xff]
          %v3606 = vld [vmem:[%s3437 + $0x6b] sm:$0xff]
          %v3607 = vld [vmem:[%s3437 + $0x7b] sm:$0xff]
          %v3608 = vld [vmem:[%s3437 + $0x83] sm:$0xff]
          %v3609 = vld [vmem:[%s3437 + $0x93] sm:$0xff]
          %v3610 = vld [vmem:[%s3437 + $0x9b] sm:$0xff]
          %v3611 = vld [vmem:[%s3437 + $0xab] sm:$0xff]
          %v3612 = vld [vmem:[%s3437 + $0xb3] sm:$0xff]
          %v3613 = vld [vmem:[%s4 + $0xd] sm:$0x1]
          %v3614 = vlaneseq
          %v3615 = vshrl.u32 %v3614, 7
          %v3616 = vsub.s32 0, %v3615
          %v3617 = vrot.slane %v3613, %v3616
          %v3618 = vmul.f32 %v3597, %v3617
          %v3619 = vmul.f32 %v3598, %v3617
          %v3620 = vmul.f32 %v3599, %v3617
          %v3621 = vmul.f32 %v3600, %v3617
          %v3622 = vmul.f32 %v3601, %v3617
          %v3623 = vmul.f32 %v3602, %v3617
          %v3624 = vmul.f32 %v3603, %v3617
          %v3625 = vmul.f32 %v3604, %v3617
          %v3626 = vmul.f32 %v3605, %v3617
          %v3627 = vmul.f32 %v3606, %v3617
          %v3628 = vmul.f32 %v3607, %v3617
          %v3629 = vmul.f32 %v3608, %v3617
          %v3630 = vmul.f32 %v3609, %v3617
          %v3631 = vmul.f32 %v3610, %v3617
          %v3632 = vmul.f32 %v3611, %v3617
          %v3633 = vmul.f32 %v3612, %v3617
          %v3634 = vadd.f32 %v3581, %v3618
          %v3635 = vadd.f32 %v3582, %v3619
          %v3636 = vadd.f32 %v3583, %v3620
          %v3637 = vadd.f32 %v3584, %v3621
          %v3638 = vadd.f32 %v3585, %v3622
          %v3639 = vadd.f32 %v3586, %v3623
          %v3640 = vadd.f32 %v3587, %v3624
          %v3641 = vadd.f32 %v3588, %v3625
          %v3642 = vadd.f32 %v3589, %v3626
          %v3643 = vadd.f32 %v3590, %v3627
          %v3644 = vadd.f32 %v3591, %v3628
          %v3645 = vadd.f32 %v3592, %v3629
          %v3646 = vadd.f32 %v3593, %v3630
          %v3647 = vadd.f32 %v3594, %v3631
          %v3648 = vadd.f32 %v3595, %v3632
          %v3649 = vadd.f32 %v3596, %v3633
          %v3650 = vld [vmem:[%s3437 + $0x4] sm:$0xff]
          %v3651 = vld [vmem:[%s3437 + $0xc] sm:$0xff]
          %v3652 = vld [vmem:[%s3437 + $0x1c] sm:$0xff]
          %v3653 = vld [vmem:[%s3437 + $0x24] sm:$0xff]
          %v3654 = vld [vmem:[%s3437 + $0x34] sm:$0xff]
          %v3655 = vld [vmem:[%s3437 + $0x3c] sm:$0xff]
          %v3656 = vld [vmem:[%s3437 + $0x4c] sm:$0xff]
          %v3657 = vld [vmem:[%s3437 + $0x54] sm:$0xff]
          %v3658 = vld [vmem:[%s3437 + $0x64] sm:$0xff]
          %v3659 = vld [vmem:[%s3437 + $0x6c] sm:$0xff]
          %v3660 = vld [vmem:[%s3437 + $0x7c] sm:$0xff]
          %v3661 = vld [vmem:[%s3437 + $0x84] sm:$0xff]
          %v3662 = vld [vmem:[%s3437 + $0x94] sm:$0xff]
          %v3663 = vld [vmem:[%s3437 + $0x9c] sm:$0xff]
          %v3664 = vld [vmem:[%s3437 + $0xac] sm:$0xff]
          %v3665 = vld [vmem:[%s3437 + $0xb4] sm:$0xff]
          %v3666 = vld [vmem:[%s4 + $0xe] sm:$0x1]
          %v3667 = vlaneseq
          %v3668 = vshrl.u32 %v3667, 7
          %v3669 = vsub.s32 0, %v3668
          %v3670 = vrot.slane %v3666, %v3669
          %v3671 = vmul.f32 %v3650, %v3670
          %v3672 = vmul.f32 %v3651, %v3670
          %v3673 = vmul.f32 %v3652, %v3670
          %v3674 = vmul.f32 %v3653, %v3670
          %v3675 = vmul.f32 %v3654, %v3670
          %v3676 = vmul.f32 %v3655, %v3670
          %v3677 = vmul.f32 %v3656, %v3670
          %v3678 = vmul.f32 %v3657, %v3670
          %v3679 = vmul.f32 %v3658, %v3670
          %v3680 = vmul.f32 %v3659, %v3670
          %v3681 = vmul.f32 %v3660, %v3670
          %v3682 = vmul.f32 %v3661, %v3670
          %v3683 = vmul.f32 %v3662, %v3670
          %v3684 = vmul.f32 %v3663, %v3670
          %v3685 = vmul.f32 %v3664, %v3670
          %v3686 = vmul.f32 %v3665, %v3670
          %v3687 = vadd.f32 %v3634, %v3671
          %v3688 = vadd.f32 %v3635, %v3672
          %v3689 = vadd.f32 %v3636, %v3673
          %v3690 = vadd.f32 %v3637, %v3674
          %v3691 = vadd.f32 %v3638, %v3675
          %v3692 = vadd.f32 %v3639, %v3676
          %v3693 = vadd.f32 %v3640, %v3677
          %v3694 = vadd.f32 %v3641, %v3678
          %v3695 = vadd.f32 %v3642, %v3679
          %v3696 = vadd.f32 %v3643, %v3680
          %v3697 = vadd.f32 %v3644, %v3681
          %v3698 = vadd.f32 %v3645, %v3682
          %v3699 = vadd.f32 %v3646, %v3683
          %v3700 = vadd.f32 %v3647, %v3684
          %v3701 = vadd.f32 %v3648, %v3685
          %v3702 = vadd.f32 %v3649, %v3686
          %s3703 = sadd.s32 %s2899, 3
          %s3704 = smul.u32 %s3703, 24
          %s3705 = scalar_lea.vmem [#allocation4], %s3704
          %v3706 = vld [vmem:[%s3705] sm:$0xff]
          %v3707 = vld [vmem:[%s3705 + $0x8] sm:$0xff]
          %v3708 = vld [vmem:[%s3705 + $0x18] sm:$0xff]
          %v3709 = vld [vmem:[%s3705 + $0x20] sm:$0xff]
          %v3710 = vld [vmem:[%s3705 + $0x30] sm:$0xff]
          %v3711 = vld [vmem:[%s3705 + $0x38] sm:$0xff]
          %v3712 = vld [vmem:[%s3705 + $0x48] sm:$0xff]
          %v3713 = vld [vmem:[%s3705 + $0x50] sm:$0xff]
          %v3714 = vld [vmem:[%s3705 + $0x60] sm:$0xff]
          %v3715 = vld [vmem:[%s3705 + $0x68] sm:$0xff]
          %v3716 = vld [vmem:[%s3705 + $0x78] sm:$0xff]
          %v3717 = vld [vmem:[%s3705 + $0x80] sm:$0xff]
          %v3718 = vld [vmem:[%s3705 + $0x90] sm:$0xff]
          %v3719 = vld [vmem:[%s3705 + $0x98] sm:$0xff]
          %v3720 = vld [vmem:[%s3705 + $0xa8] sm:$0xff]
          %v3721 = vld [vmem:[%s3705 + $0xb0] sm:$0xff]
          %v3722 = vld [vmem:[%s4 + $0xf] sm:$0x1]
          %v3723 = vlaneseq
          %v3724 = vshrl.u32 %v3723, 7
          %v3725 = vsub.s32 0, %v3724
          %v3726 = vrot.slane %v3722, %v3725
          %v3727 = vmul.f32 %v3706, %v3726
          %v3728 = vmul.f32 %v3707, %v3726
          %v3729 = vmul.f32 %v3708, %v3726
          %v3730 = vmul.f32 %v3709, %v3726
          %v3731 = vmul.f32 %v3710, %v3726
          %v3732 = vmul.f32 %v3711, %v3726
          %v3733 = vmul.f32 %v3712, %v3726
          %v3734 = vmul.f32 %v3713, %v3726
          %v3735 = vmul.f32 %v3714, %v3726
          %v3736 = vmul.f32 %v3715, %v3726
          %v3737 = vmul.f32 %v3716, %v3726
          %v3738 = vmul.f32 %v3717, %v3726
          %v3739 = vmul.f32 %v3718, %v3726
          %v3740 = vmul.f32 %v3719, %v3726
          %v3741 = vmul.f32 %v3720, %v3726
          %v3742 = vmul.f32 %v3721, %v3726
          %v3743 = vadd.f32 %v3687, %v3727
          %v3744 = vadd.f32 %v3688, %v3728
          %v3745 = vadd.f32 %v3689, %v3729
          %v3746 = vadd.f32 %v3690, %v3730
          %v3747 = vadd.f32 %v3691, %v3731
          %v3748 = vadd.f32 %v3692, %v3732
          %v3749 = vadd.f32 %v3693, %v3733
          %v3750 = vadd.f32 %v3694, %v3734
          %v3751 = vadd.f32 %v3695, %v3735
          %v3752 = vadd.f32 %v3696, %v3736
          %v3753 = vadd.f32 %v3697, %v3737
          %v3754 = vadd.f32 %v3698, %v3738
          %v3755 = vadd.f32 %v3699, %v3739
          %v3756 = vadd.f32 %v3700, %v3740
          %v3757 = vadd.f32 %v3701, %v3741
          %v3758 = vadd.f32 %v3702, %v3742
          %v3759 = vld [vmem:[%s3705 + $0x1] sm:$0xff]
          %v3760 = vld [vmem:[%s3705 + $0x9] sm:$0xff]
          %v3761 = vld [vmem:[%s3705 + $0x19] sm:$0xff]
          %v3762 = vld [vmem:[%s3705 + $0x21] sm:$0xff]
          %v3763 = vld [vmem:[%s3705 + $0x31] sm:$0xff]
          %v3764 = vld [vmem:[%s3705 + $0x39] sm:$0xff]
          %v3765 = vld [vmem:[%s3705 + $0x49] sm:$0xff]
          %v3766 = vld [vmem:[%s3705 + $0x51] sm:$0xff]
          %v3767 = vld [vmem:[%s3705 + $0x61] sm:$0xff]
          %v3768 = vld [vmem:[%s3705 + $0x69] sm:$0xff]
          %v3769 = vld [vmem:[%s3705 + $0x79] sm:$0xff]
          %v3770 = vld [vmem:[%s3705 + $0x81] sm:$0xff]
          %v3771 = vld [vmem:[%s3705 + $0x91] sm:$0xff]
          %v3772 = vld [vmem:[%s3705 + $0x99] sm:$0xff]
          %v3773 = vld [vmem:[%s3705 + $0xa9] sm:$0xff]
          %v3774 = vld [vmem:[%s3705 + $0xb1] sm:$0xff]
          %v3775 = vld [vmem:[%s4 + $0x10] sm:$0x1]
          %v3776 = vlaneseq
          %v3777 = vshrl.u32 %v3776, 7
          %v3778 = vsub.s32 0, %v3777
          %v3779 = vrot.slane %v3775, %v3778
          %v3780 = vmul.f32 %v3759, %v3779
          %v3781 = vmul.f32 %v3760, %v3779
          %v3782 = vmul.f32 %v3761, %v3779
          %v3783 = vmul.f32 %v3762, %v3779
          %v3784 = vmul.f32 %v3763, %v3779
          %v3785 = vmul.f32 %v3764, %v3779
          %v3786 = vmul.f32 %v3765, %v3779
          %v3787 = vmul.f32 %v3766, %v3779
          %v3788 = vmul.f32 %v3767, %v3779
          %v3789 = vmul.f32 %v3768, %v3779
          %v3790 = vmul.f32 %v3769, %v3779
          %v3791 = vmul.f32 %v3770, %v3779
          %v3792 = vmul.f32 %v3771, %v3779
          %v3793 = vmul.f32 %v3772, %v3779
          %v3794 = vmul.f32 %v3773, %v3779
          %v3795 = vmul.f32 %v3774, %v3779
          %v3796 = vadd.f32 %v3743, %v3780
          %v3797 = vadd.f32 %v3744, %v3781
          %v3798 = vadd.f32 %v3745, %v3782
          %v3799 = vadd.f32 %v3746, %v3783
          %v3800 = vadd.f32 %v3747, %v3784
          %v3801 = vadd.f32 %v3748, %v3785
          %v3802 = vadd.f32 %v3749, %v3786
          %v3803 = vadd.f32 %v3750, %v3787
          %v3804 = vadd.f32 %v3751, %v3788
          %v3805 = vadd.f32 %v3752, %v3789
          %v3806 = vadd.f32 %v3753, %v3790
          %v3807 = vadd.f32 %v3754, %v3791
          %v3808 = vadd.f32 %v3755, %v3792
          %v3809 = vadd.f32 %v3756, %v3793
          %v3810 = vadd.f32 %v3757, %v3794
          %v3811 = vadd.f32 %v3758, %v3795
          %v3812 = vld [vmem:[%s3705 + $0x2] sm:$0xff]
          %v3813 = vld [vmem:[%s3705 + $0xa] sm:$0xff]
          %v3814 = vld [vmem:[%s3705 + $0x1a] sm:$0xff]
          %v3815 = vld [vmem:[%s3705 + $0x22] sm:$0xff]
          %v3816 = vld [vmem:[%s3705 + $0x32] sm:$0xff]
          %v3817 = vld [vmem:[%s3705 + $0x3a] sm:$0xff]
          %v3818 = vld [vmem:[%s3705 + $0x4a] sm:$0xff]
          %v3819 = vld [vmem:[%s3705 + $0x52] sm:$0xff]
          %v3820 = vld [vmem:[%s3705 + $0x62] sm:$0xff]
          %v3821 = vld [vmem:[%s3705 + $0x6a] sm:$0xff]
          %v3822 = vld [vmem:[%s3705 + $0x7a] sm:$0xff]
          %v3823 = vld [vmem:[%s3705 + $0x82] sm:$0xff]
          %v3824 = vld [vmem:[%s3705 + $0x92] sm:$0xff]
          %v3825 = vld [vmem:[%s3705 + $0x9a] sm:$0xff]
          %v3826 = vld [vmem:[%s3705 + $0xaa] sm:$0xff]
          %v3827 = vld [vmem:[%s3705 + $0xb2] sm:$0xff]
          %v3828 = vld [vmem:[%s4 + $0x11] sm:$0x1]
          %v3829 = vlaneseq
          %v3830 = vshrl.u32 %v3829, 7
          %v3831 = vsub.s32 0, %v3830
          %v3832 = vrot.slane %v3828, %v3831
          %v3833 = vmul.f32 %v3812, %v3832
          %v3834 = vmul.f32 %v3813, %v3832
          %v3835 = vmul.f32 %v3814, %v3832
          %v3836 = vmul.f32 %v3815, %v3832
          %v3837 = vmul.f32 %v3816, %v3832
          %v3838 = vmul.f32 %v3817, %v3832
          %v3839 = vmul.f32 %v3818, %v3832
          %v3840 = vmul.f32 %v3819, %v3832
          %v3841 = vmul.f32 %v3820, %v3832
          %v3842 = vmul.f32 %v3821, %v3832
          %v3843 = vmul.f32 %v3822, %v3832
          %v3844 = vmul.f32 %v3823, %v3832
          %v3845 = vmul.f32 %v3824, %v3832
          %v3846 = vmul.f32 %v3825, %v3832
          %v3847 = vmul.f32 %v3826, %v3832
          %v3848 = vmul.f32 %v3827, %v3832
          %v3849 = vadd.f32 %v3796, %v3833
          %v3850 = vadd.f32 %v3797, %v3834
          %v3851 = vadd.f32 %v3798, %v3835
          %v3852 = vadd.f32 %v3799, %v3836
          %v3853 = vadd.f32 %v3800, %v3837
          %v3854 = vadd.f32 %v3801, %v3838
          %v3855 = vadd.f32 %v3802, %v3839
          %v3856 = vadd.f32 %v3803, %v3840
          %v3857 = vadd.f32 %v3804, %v3841
          %v3858 = vadd.f32 %v3805, %v3842
          %v3859 = vadd.f32 %v3806, %v3843
          %v3860 = vadd.f32 %v3807, %v3844
          %v3861 = vadd.f32 %v3808, %v3845
          %v3862 = vadd.f32 %v3809, %v3846
          %v3863 = vadd.f32 %v3810, %v3847
          %v3864 = vadd.f32 %v3811, %v3848
          %v3865 = vld [vmem:[%s3705 + $0x3] sm:$0xff]
          %v3866 = vld [vmem:[%s3705 + $0xb] sm:$0xff]
          %v3867 = vld [vmem:[%s3705 + $0x1b] sm:$0xff]
          %v3868 = vld [vmem:[%s3705 + $0x23] sm:$0xff]
          %v3869 = vld [vmem:[%s3705 + $0x33] sm:$0xff]
          %v3870 = vld [vmem:[%s3705 + $0x3b] sm:$0xff]
          %v3871 = vld [vmem:[%s3705 + $0x4b] sm:$0xff]
          %v3872 = vld [vmem:[%s3705 + $0x53] sm:$0xff]
          %v3873 = vld [vmem:[%s3705 + $0x63] sm:$0xff]
          %v3874 = vld [vmem:[%s3705 + $0x6b] sm:$0xff]
          %v3875 = vld [vmem:[%s3705 + $0x7b] sm:$0xff]
          %v3876 = vld [vmem:[%s3705 + $0x83] sm:$0xff]
          %v3877 = vld [vmem:[%s3705 + $0x93] sm:$0xff]
          %v3878 = vld [vmem:[%s3705 + $0x9b] sm:$0xff]
          %v3879 = vld [vmem:[%s3705 + $0xab] sm:$0xff]
          %v3880 = vld [vmem:[%s3705 + $0xb3] sm:$0xff]
          %v3881 = vld [vmem:[%s4 + $0x12] sm:$0x1]
          %v3882 = vlaneseq
          %v3883 = vshrl.u32 %v3882, 7
          %v3884 = vsub.s32 0, %v3883
          %v3885 = vrot.slane %v3881, %v3884
          %v3886 = vmul.f32 %v3865, %v3885
          %v3887 = vmul.f32 %v3866, %v3885
          %v3888 = vmul.f32 %v3867, %v3885
          %v3889 = vmul.f32 %v3868, %v3885
          %v3890 = vmul.f32 %v3869, %v3885
          %v3891 = vmul.f32 %v3870, %v3885
          %v3892 = vmul.f32 %v3871, %v3885
          %v3893 = vmul.f32 %v3872, %v3885
          %v3894 = vmul.f32 %v3873, %v3885
          %v3895 = vmul.f32 %v3874, %v3885
          %v3896 = vmul.f32 %v3875, %v3885
          %v3897 = vmul.f32 %v3876, %v3885
          %v3898 = vmul.f32 %v3877, %v3885
          %v3899 = vmul.f32 %v3878, %v3885
          %v3900 = vmul.f32 %v3879, %v3885
          %v3901 = vmul.f32 %v3880, %v3885
          %v3902 = vadd.f32 %v3849, %v3886
          %v3903 = vadd.f32 %v3850, %v3887
          %v3904 = vadd.f32 %v3851, %v3888
          %v3905 = vadd.f32 %v3852, %v3889
          %v3906 = vadd.f32 %v3853, %v3890
          %v3907 = vadd.f32 %v3854, %v3891
          %v3908 = vadd.f32 %v3855, %v3892
          %v3909 = vadd.f32 %v3856, %v3893
          %v3910 = vadd.f32 %v3857, %v3894
          %v3911 = vadd.f32 %v3858, %v3895
          %v3912 = vadd.f32 %v3859, %v3896
          %v3913 = vadd.f32 %v3860, %v3897
          %v3914 = vadd.f32 %v3861, %v3898
          %v3915 = vadd.f32 %v3862, %v3899
          %v3916 = vadd.f32 %v3863, %v3900
          %v3917 = vadd.f32 %v3864, %v3901
          %v3918 = vld [vmem:[%s3705 + $0x4] sm:$0xff]
          %v3919 = vld [vmem:[%s3705 + $0xc] sm:$0xff]
          %v3920 = vld [vmem:[%s3705 + $0x1c] sm:$0xff]
          %v3921 = vld [vmem:[%s3705 + $0x24] sm:$0xff]
          %v3922 = vld [vmem:[%s3705 + $0x34] sm:$0xff]
          %v3923 = vld [vmem:[%s3705 + $0x3c] sm:$0xff]
          %v3924 = vld [vmem:[%s3705 + $0x4c] sm:$0xff]
          %v3925 = vld [vmem:[%s3705 + $0x54] sm:$0xff]
          %v3926 = vld [vmem:[%s3705 + $0x64] sm:$0xff]
          %v3927 = vld [vmem:[%s3705 + $0x6c] sm:$0xff]
          %v3928 = vld [vmem:[%s3705 + $0x7c] sm:$0xff]
          %v3929 = vld [vmem:[%s3705 + $0x84] sm:$0xff]
          %v3930 = vld [vmem:[%s3705 + $0x94] sm:$0xff]
          %v3931 = vld [vmem:[%s3705 + $0x9c] sm:$0xff]
          %v3932 = vld [vmem:[%s3705 + $0xac] sm:$0xff]
          %v3933 = vld [vmem:[%s3705 + $0xb4] sm:$0xff]
          %v3934 = vld [vmem:[%s4 + $0x13] sm:$0x1]
          %v3935 = vlaneseq
          %v3936 = vshrl.u32 %v3935, 7
          %v3937 = vsub.s32 0, %v3936
          %v3938 = vrot.slane %v3934, %v3937
          %v3939 = vmul.f32 %v3918, %v3938
          %v3940 = vmul.f32 %v3919, %v3938
          %v3941 = vmul.f32 %v3920, %v3938
          %v3942 = vmul.f32 %v3921, %v3938
          %v3943 = vmul.f32 %v3922, %v3938
          %v3944 = vmul.f32 %v3923, %v3938
          %v3945 = vmul.f32 %v3924, %v3938
          %v3946 = vmul.f32 %v3925, %v3938
          %v3947 = vmul.f32 %v3926, %v3938
          %v3948 = vmul.f32 %v3927, %v3938
          %v3949 = vmul.f32 %v3928, %v3938
          %v3950 = vmul.f32 %v3929, %v3938
          %v3951 = vmul.f32 %v3930, %v3938
          %v3952 = vmul.f32 %v3931, %v3938
          %v3953 = vmul.f32 %v3932, %v3938
          %v3954 = vmul.f32 %v3933, %v3938
          %v3955 = vadd.f32 %v3902, %v3939
          %v3956 = vadd.f32 %v3903, %v3940
          %v3957 = vadd.f32 %v3904, %v3941
          %v3958 = vadd.f32 %v3905, %v3942
          %v3959 = vadd.f32 %v3906, %v3943
          %v3960 = vadd.f32 %v3907, %v3944
          %v3961 = vadd.f32 %v3908, %v3945
          %v3962 = vadd.f32 %v3909, %v3946
          %v3963 = vadd.f32 %v3910, %v3947
          %v3964 = vadd.f32 %v3911, %v3948
          %v3965 = vadd.f32 %v3912, %v3949
          %v3966 = vadd.f32 %v3913, %v3950
          %v3967 = vadd.f32 %v3914, %v3951
          %v3968 = vadd.f32 %v3915, %v3952
          %v3969 = vadd.f32 %v3916, %v3953
          %v3970 = vadd.f32 %v3917, %v3954
          %s3971 = sadd.s32 %s2899, 4
          %s3972 = smul.u32 %s3971, 24
          %s3973 = scalar_lea.vmem [#allocation4], %s3972
          %v3974 = vld [vmem:[%s3973] sm:$0xff]
          %v3975 = vld [vmem:[%s3973 + $0x8] sm:$0xff]
          %v3976 = vld [vmem:[%s3973 + $0x18] sm:$0xff]
          %v3977 = vld [vmem:[%s3973 + $0x20] sm:$0xff]
          %v3978 = vld [vmem:[%s3973 + $0x30] sm:$0xff]
          %v3979 = vld [vmem:[%s3973 + $0x38] sm:$0xff]
          %v3980 = vld [vmem:[%s3973 + $0x48] sm:$0xff]
          %v3981 = vld [vmem:[%s3973 + $0x50] sm:$0xff]
          %v3982 = vld [vmem:[%s3973 + $0x60] sm:$0xff]
          %v3983 = vld [vmem:[%s3973 + $0x68] sm:$0xff]
          %v3984 = vld [vmem:[%s3973 + $0x78] sm:$0xff]
          %v3985 = vld [vmem:[%s3973 + $0x80] sm:$0xff]
          %v3986 = vld [vmem:[%s3973 + $0x90] sm:$0xff]
          %v3987 = vld [vmem:[%s3973 + $0x98] sm:$0xff]
          %v3988 = vld [vmem:[%s3973 + $0xa8] sm:$0xff]
          %v3989 = vld [vmem:[%s3973 + $0xb0] sm:$0xff]
          %v3990 = vld [vmem:[%s4 + $0x14] sm:$0x1]
          %v3991 = vlaneseq
          %v3992 = vshrl.u32 %v3991, 7
          %v3993 = vsub.s32 0, %v3992
          %v3994 = vrot.slane %v3990, %v3993
          %v3995 = vmul.f32 %v3974, %v3994
          %v3996 = vmul.f32 %v3975, %v3994
          %v3997 = vmul.f32 %v3976, %v3994
          %v3998 = vmul.f32 %v3977, %v3994
          %v3999 = vmul.f32 %v3978, %v3994
          %v4000 = vmul.f32 %v3979, %v3994
          %v4001 = vmul.f32 %v3980, %v3994
          %v4002 = vmul.f32 %v3981, %v3994
          %v4003 = vmul.f32 %v3982, %v3994
          %v4004 = vmul.f32 %v3983, %v3994
          %v4005 = vmul.f32 %v3984, %v3994
          %v4006 = vmul.f32 %v3985, %v3994
          %v4007 = vmul.f32 %v3986, %v3994
          %v4008 = vmul.f32 %v3987, %v3994
          %v4009 = vmul.f32 %v3988, %v3994
          %v4010 = vmul.f32 %v3989, %v3994
          %v4011 = vadd.f32 %v3955, %v3995
          %v4012 = vadd.f32 %v3956, %v3996
          %v4013 = vadd.f32 %v3957, %v3997
          %v4014 = vadd.f32 %v3958, %v3998
          %v4015 = vadd.f32 %v3959, %v3999
          %v4016 = vadd.f32 %v3960, %v4000
          %v4017 = vadd.f32 %v3961, %v4001
          %v4018 = vadd.f32 %v3962, %v4002
          %v4019 = vadd.f32 %v3963, %v4003
          %v4020 = vadd.f32 %v3964, %v4004
          %v4021 = vadd.f32 %v3965, %v4005
          %v4022 = vadd.f32 %v3966, %v4006
          %v4023 = vadd.f32 %v3967, %v4007
          %v4024 = vadd.f32 %v3968, %v4008
          %v4025 = vadd.f32 %v3969, %v4009
          %v4026 = vadd.f32 %v3970, %v4010
          %v4027 = vld [vmem:[%s3973 + $0x1] sm:$0xff]
          %v4028 = vld [vmem:[%s3973 + $0x9] sm:$0xff]
          %v4029 = vld [vmem:[%s3973 + $0x19] sm:$0xff]
          %v4030 = vld [vmem:[%s3973 + $0x21] sm:$0xff]
          %v4031 = vld [vmem:[%s3973 + $0x31] sm:$0xff]
          %v4032 = vld [vmem:[%s3973 + $0x39] sm:$0xff]
          %v4033 = vld [vmem:[%s3973 + $0x49] sm:$0xff]
          %v4034 = vld [vmem:[%s3973 + $0x51] sm:$0xff]
          %v4035 = vld [vmem:[%s3973 + $0x61] sm:$0xff]
          %v4036 = vld [vmem:[%s3973 + $0x69] sm:$0xff]
          %v4037 = vld [vmem:[%s3973 + $0x79] sm:$0xff]
          %v4038 = vld [vmem:[%s3973 + $0x81] sm:$0xff]
          %v4039 = vld [vmem:[%s3973 + $0x91] sm:$0xff]
          %v4040 = vld [vmem:[%s3973 + $0x99] sm:$0xff]
          %v4041 = vld [vmem:[%s3973 + $0xa9] sm:$0xff]
          %v4042 = vld [vmem:[%s3973 + $0xb1] sm:$0xff]
          %v4043 = vld [vmem:[%s4 + $0x15] sm:$0x1]
          %v4044 = vlaneseq
          %v4045 = vshrl.u32 %v4044, 7
          %v4046 = vsub.s32 0, %v4045
          %v4047 = vrot.slane %v4043, %v4046
          %v4048 = vmul.f32 %v4027, %v4047
          %v4049 = vmul.f32 %v4028, %v4047
          %v4050 = vmul.f32 %v4029, %v4047
          %v4051 = vmul.f32 %v4030, %v4047
          %v4052 = vmul.f32 %v4031, %v4047
          %v4053 = vmul.f32 %v4032, %v4047
          %v4054 = vmul.f32 %v4033, %v4047
          %v4055 = vmul.f32 %v4034, %v4047
          %v4056 = vmul.f32 %v4035, %v4047
          %v4057 = vmul.f32 %v4036, %v4047
          %v4058 = vmul.f32 %v4037, %v4047
          %v4059 = vmul.f32 %v4038, %v4047
          %v4060 = vmul.f32 %v4039, %v4047
          %v4061 = vmul.f32 %v4040, %v4047
          %v4062 = vmul.f32 %v4041, %v4047
          %v4063 = vmul.f32 %v4042, %v4047
          %v4064 = vadd.f32 %v4011, %v4048
          %v4065 = vadd.f32 %v4012, %v4049
          %v4066 = vadd.f32 %v4013, %v4050
          %v4067 = vadd.f32 %v4014, %v4051
          %v4068 = vadd.f32 %v4015, %v4052
          %v4069 = vadd.f32 %v4016, %v4053
          %v4070 = vadd.f32 %v4017, %v4054
          %v4071 = vadd.f32 %v4018, %v4055
          %v4072 = vadd.f32 %v4019, %v4056
          %v4073 = vadd.f32 %v4020, %v4057
          %v4074 = vadd.f32 %v4021, %v4058
          %v4075 = vadd.f32 %v4022, %v4059
          %v4076 = vadd.f32 %v4023, %v4060
          %v4077 = vadd.f32 %v4024, %v4061
          %v4078 = vadd.f32 %v4025, %v4062
          %v4079 = vadd.f32 %v4026, %v4063
          %v4080 = vld [vmem:[%s3973 + $0x2] sm:$0xff]
          %v4081 = vld [vmem:[%s3973 + $0xa] sm:$0xff]
          %v4082 = vld [vmem:[%s3973 + $0x1a] sm:$0xff]
          %v4083 = vld [vmem:[%s3973 + $0x22] sm:$0xff]
          %v4084 = vld [vmem:[%s3973 + $0x32] sm:$0xff]
          %v4085 = vld [vmem:[%s3973 + $0x3a] sm:$0xff]
          %v4086 = vld [vmem:[%s3973 + $0x4a] sm:$0xff]
          %v4087 = vld [vmem:[%s3973 + $0x52] sm:$0xff]
          %v4088 = vld [vmem:[%s3973 + $0x62] sm:$0xff]
          %v4089 = vld [vmem:[%s3973 + $0x6a] sm:$0xff]
          %v4090 = vld [vmem:[%s3973 + $0x7a] sm:$0xff]
          %v4091 = vld [vmem:[%s3973 + $0x82] sm:$0xff]
          %v4092 = vld [vmem:[%s3973 + $0x92] sm:$0xff]
          %v4093 = vld [vmem:[%s3973 + $0x9a] sm:$0xff]
          %v4094 = vld [vmem:[%s3973 + $0xaa] sm:$0xff]
          %v4095 = vld [vmem:[%s3973 + $0xb2] sm:$0xff]
          %v4096 = vld [vmem:[%s4 + $0x16] sm:$0x1]
          %v4097 = vlaneseq
          %v4098 = vshrl.u32 %v4097, 7
          %v4099 = vsub.s32 0, %v4098
          %v4100 = vrot.slane %v4096, %v4099
          %v4101 = vmul.f32 %v4080, %v4100
          %v4102 = vmul.f32 %v4081, %v4100
          %v4103 = vmul.f32 %v4082, %v4100
          %v4104 = vmul.f32 %v4083, %v4100
          %v4105 = vmul.f32 %v4084, %v4100
          %v4106 = vmul.f32 %v4085, %v4100
          %v4107 = vmul.f32 %v4086, %v4100
          %v4108 = vmul.f32 %v4087, %v4100
          %v4109 = vmul.f32 %v4088, %v4100
          %v4110 = vmul.f32 %v4089, %v4100
          %v4111 = vmul.f32 %v4090, %v4100
          %v4112 = vmul.f32 %v4091, %v4100
          %v4113 = vmul.f32 %v4092, %v4100
          %v4114 = vmul.f32 %v4093, %v4100
          %v4115 = vmul.f32 %v4094, %v4100
          %v4116 = vmul.f32 %v4095, %v4100
          %v4117 = vadd.f32 %v4064, %v4101
          %v4118 = vadd.f32 %v4065, %v4102
          %v4119 = vadd.f32 %v4066, %v4103
          %v4120 = vadd.f32 %v4067, %v4104
          %v4121 = vadd.f32 %v4068, %v4105
          %v4122 = vadd.f32 %v4069, %v4106
          %v4123 = vadd.f32 %v4070, %v4107
          %v4124 = vadd.f32 %v4071, %v4108
          %v4125 = vadd.f32 %v4072, %v4109
          %v4126 = vadd.f32 %v4073, %v4110
          %v4127 = vadd.f32 %v4074, %v4111
          %v4128 = vadd.f32 %v4075, %v4112
          %v4129 = vadd.f32 %v4076, %v4113
          %v4130 = vadd.f32 %v4077, %v4114
          %v4131 = vadd.f32 %v4078, %v4115
          %v4132 = vadd.f32 %v4079, %v4116
          %v4133 = vld [vmem:[%s3973 + $0x3] sm:$0xff]
          %v4134 = vld [vmem:[%s3973 + $0xb] sm:$0xff]
          %v4135 = vld [vmem:[%s3973 + $0x1b] sm:$0xff]
          %v4136 = vld [vmem:[%s3973 + $0x23] sm:$0xff]
          %v4137 = vld [vmem:[%s3973 + $0x33] sm:$0xff]
          %v4138 = vld [vmem:[%s3973 + $0x3b] sm:$0xff]
          %v4139 = vld [vmem:[%s3973 + $0x4b] sm:$0xff]
          %v4140 = vld [vmem:[%s3973 + $0x53] sm:$0xff]
          %v4141 = vld [vmem:[%s3973 + $0x63] sm:$0xff]
          %v4142 = vld [vmem:[%s3973 + $0x6b] sm:$0xff]
          %v4143 = vld [vmem:[%s3973 + $0x7b] sm:$0xff]
          %v4144 = vld [vmem:[%s3973 + $0x83] sm:$0xff]
          %v4145 = vld [vmem:[%s3973 + $0x93] sm:$0xff]
          %v4146 = vld [vmem:[%s3973 + $0x9b] sm:$0xff]
          %v4147 = vld [vmem:[%s3973 + $0xab] sm:$0xff]
          %v4148 = vld [vmem:[%s3973 + $0xb3] sm:$0xff]
          %v4149 = vld [vmem:[%s4 + $0x17] sm:$0x1]
          %v4150 = vlaneseq
          %v4151 = vshrl.u32 %v4150, 7
          %v4152 = vsub.s32 0, %v4151
          %v4153 = vrot.slane %v4149, %v4152
          %v4154 = vmul.f32 %v4133, %v4153
          %v4155 = vmul.f32 %v4134, %v4153
          %v4156 = vmul.f32 %v4135, %v4153
          %v4157 = vmul.f32 %v4136, %v4153
          %v4158 = vmul.f32 %v4137, %v4153
          %v4159 = vmul.f32 %v4138, %v4153
          %v4160 = vmul.f32 %v4139, %v4153
          %v4161 = vmul.f32 %v4140, %v4153
          %v4162 = vmul.f32 %v4141, %v4153
          %v4163 = vmul.f32 %v4142, %v4153
          %v4164 = vmul.f32 %v4143, %v4153
          %v4165 = vmul.f32 %v4144, %v4153
          %v4166 = vmul.f32 %v4145, %v4153
          %v4167 = vmul.f32 %v4146, %v4153
          %v4168 = vmul.f32 %v4147, %v4153
          %v4169 = vmul.f32 %v4148, %v4153
          %v4170 = vadd.f32 %v4117, %v4154
          %v4171 = vadd.f32 %v4118, %v4155
          %v4172 = vadd.f32 %v4119, %v4156
          %v4173 = vadd.f32 %v4120, %v4157
          %v4174 = vadd.f32 %v4121, %v4158
          %v4175 = vadd.f32 %v4122, %v4159
          %v4176 = vadd.f32 %v4123, %v4160
          %v4177 = vadd.f32 %v4124, %v4161
          %v4178 = vadd.f32 %v4125, %v4162
          %v4179 = vadd.f32 %v4126, %v4163
          %v4180 = vadd.f32 %v4127, %v4164
          %v4181 = vadd.f32 %v4128, %v4165
          %v4182 = vadd.f32 %v4129, %v4166
          %v4183 = vadd.f32 %v4130, %v4167
          %v4184 = vadd.f32 %v4131, %v4168
          %v4185 = vadd.f32 %v4132, %v4169
          %v4186 = vld [vmem:[%s3973 + $0x4] sm:$0xff]
          %v4187 = vld [vmem:[%s3973 + $0xc] sm:$0xff]
          %v4188 = vld [vmem:[%s3973 + $0x1c] sm:$0xff]
          %v4189 = vld [vmem:[%s3973 + $0x24] sm:$0xff]
          %v4190 = vld [vmem:[%s3973 + $0x34] sm:$0xff]
          %v4191 = vld [vmem:[%s3973 + $0x3c] sm:$0xff]
          %v4192 = vld [vmem:[%s3973 + $0x4c] sm:$0xff]
          %v4193 = vld [vmem:[%s3973 + $0x54] sm:$0xff]
          %v4194 = vld [vmem:[%s3973 + $0x64] sm:$0xff]
          %v4195 = vld [vmem:[%s3973 + $0x6c] sm:$0xff]
          %v4196 = vld [vmem:[%s3973 + $0x7c] sm:$0xff]
          %v4197 = vld [vmem:[%s3973 + $0x84] sm:$0xff]
          %v4198 = vld [vmem:[%s3973 + $0x94] sm:$0xff]
          %v4199 = vld [vmem:[%s3973 + $0x9c] sm:$0xff]
          %v4200 = vld [vmem:[%s3973 + $0xac] sm:$0xff]
          %v4201 = vld [vmem:[%s3973 + $0xb4] sm:$0xff]
          %v4202 = vld [vmem:[%s4 + $0x18] sm:$0x1]
          %v4203 = vlaneseq
          %v4204 = vshrl.u32 %v4203, 7
          %v4205 = vsub.s32 0, %v4204
          %v4206 = vrot.slane %v4202, %v4205
          %v4207 = vmul.f32 %v4186, %v4206
          %v4208 = vmul.f32 %v4187, %v4206
          %v4209 = vmul.f32 %v4188, %v4206
          %v4210 = vmul.f32 %v4189, %v4206
          %v4211 = vmul.f32 %v4190, %v4206
          %v4212 = vmul.f32 %v4191, %v4206
          %v4213 = vmul.f32 %v4192, %v4206
          %v4214 = vmul.f32 %v4193, %v4206
          %v4215 = vmul.f32 %v4194, %v4206
          %v4216 = vmul.f32 %v4195, %v4206
          %v4217 = vmul.f32 %v4196, %v4206
          %v4218 = vmul.f32 %v4197, %v4206
          %v4219 = vmul.f32 %v4198, %v4206
          %v4220 = vmul.f32 %v4199, %v4206
          %v4221 = vmul.f32 %v4200, %v4206
          %v4222 = vmul.f32 %v4201, %v4206
          %v4223 = vadd.f32 %v4170, %v4207
          %v4224 = vadd.f32 %v4171, %v4208
          %v4225 = vadd.f32 %v4172, %v4209
          %v4226 = vadd.f32 %v4173, %v4210
          %v4227 = vadd.f32 %v4174, %v4211
          %v4228 = vadd.f32 %v4175, %v4212
          %v4229 = vadd.f32 %v4176, %v4213
          %v4230 = vadd.f32 %v4177, %v4214
          %v4231 = vadd.f32 %v4178, %v4215
          %v4232 = vadd.f32 %v4179, %v4216
          %v4233 = vadd.f32 %v4180, %v4217
          %v4234 = vadd.f32 %v4181, %v4218
          %v4235 = vadd.f32 %v4182, %v4219
          %v4236 = vadd.f32 %v4183, %v4220
          %v4237 = vadd.f32 %v4184, %v4221
          %v4238 = vadd.f32 %v4185, %v4222
          %4239 = vadd.xlane.f32.xlu0 %v4223
          %v4240 = vpop.xlane.xlu0 %4239
          %4241 = vadd.xlane.f32.xlu0 %v4224
          %v4242 = vpop.xlane.xlu0 %4241
          %4243 = vadd.xlane.f32.xlu0 %v4225
          %v4244 = vpop.xlane.xlu0 %4243
          %4245 = vadd.xlane.f32.xlu0 %v4226
          %v4246 = vpop.xlane.xlu0 %4245
          %4247 = vadd.xlane.f32.xlu0 %v4227
          %v4248 = vpop.xlane.xlu0 %4247
          %4249 = vadd.xlane.f32.xlu0 %v4228
          %v4250 = vpop.xlane.xlu0 %4249
          %4251 = vadd.xlane.f32.xlu0 %v4229
          %v4252 = vpop.xlane.xlu0 %4251
          %4253 = vadd.xlane.f32.xlu0 %v4230
          %v4254 = vpop.xlane.xlu0 %4253
          %4255 = vadd.xlane.f32.xlu0 %v4231
          %v4256 = vpop.xlane.xlu0 %4255
          %4257 = vadd.xlane.f32.xlu0 %v4232
          %v4258 = vpop.xlane.xlu0 %4257
          %4259 = vadd.xlane.f32.xlu0 %v4233
          %v4260 = vpop.xlane.xlu0 %4259
          %4261 = vadd.xlane.f32.xlu0 %v4234
          %v4262 = vpop.xlane.xlu0 %4261
          %4263 = vadd.xlane.f32.xlu0 %v4235
          %v4264 = vpop.xlane.xlu0 %4263
          %4265 = vadd.xlane.f32.xlu0 %v4236
          %v4266 = vpop.xlane.xlu0 %4265
          %4267 = vadd.xlane.f32.xlu0 %v4237
          %v4268 = vpop.xlane.xlu0 %4267
          %4269 = vadd.xlane.f32.xlu0 %v4238
          %v4270 = vpop.xlane.xlu0 %4269
          %s4271 = sld [smem:[#allocation5 + $0x33]]
          %v4272 = vstv %s4271
          %v4273 = vadd.f32 %v4240, %v4272
          %v4274 = vadd.f32 %v4242, %v4272
          %v4275 = vadd.f32 %v4244, %v4272
          %v4276 = vadd.f32 %v4246, %v4272
          %v4277 = vadd.f32 %v4248, %v4272
          %v4278 = vadd.f32 %v4250, %v4272
          %v4279 = vadd.f32 %v4252, %v4272
          %v4280 = vadd.f32 %v4254, %v4272
          %v4281 = vadd.f32 %v4256, %v4272
          %v4282 = vadd.f32 %v4258, %v4272
          %v4283 = vadd.f32 %v4260, %v4272
          %v4284 = vadd.f32 %v4262, %v4272
          %v4285 = vadd.f32 %v4264, %v4272
          %v4286 = vadd.f32 %v4266, %v4272
          %v4287 = vadd.f32 %v4268, %v4272
          %v4288 = vadd.f32 %v4270, %v4272
          %v4289 = vmax.f32 %v4273, 0.0
          %v4290 = vmax.f32 %v4274, 0.0
          %v4291 = vmax.f32 %v4275, 0.0
          %v4292 = vmax.f32 %v4276, 0.0
          %v4293 = vmax.f32 %v4277, 0.0
          %v4294 = vmax.f32 %v4278, 0.0
          %v4295 = vmax.f32 %v4279, 0.0
          %v4296 = vmax.f32 %v4280, 0.0
          %v4297 = vmax.f32 %v4281, 0.0
          %v4298 = vmax.f32 %v4282, 0.0
          %v4299 = vmax.f32 %v4283, 0.0
          %v4300 = vmax.f32 %v4284, 0.0
          %v4301 = vmax.f32 %v4285, 0.0
          %v4302 = vmax.f32 %v4286, 0.0
          %v4303 = vmax.f32 %v4287, 0.0
          %v4304 = vmax.f32 %v4288, 0.0
          %s4305 = scalar_lea.vmem [#allocation2], %s2899
          %v4306 = vld [vmem:[%s4305] sm:$0xff]
          %v4308 = vlaneseq
          %v4309 = vshrl.u32 %v4308, 7
          %v4310 = vsub.s32 0, %v4309
          %v4311 = vrot.slane %v4306, %v4310
          %4313 = vbcast.lane.b32.xlu0 %v4311, 256
          %v4314 = vpop.permute.xlu0 %4313
          %s4316 = sor.u32 256, 8
          %4317 = vbcast.lane.b32.xlu0 %v4311, %s4316
          %v4318 = vpop.permute.xlu0 %4317
          %v4319 = vlaneseq
          %v4320 = vshrl.u32 %v4319, 7
          %v4321 = vsub.s32 1, %v4320
          %v4322 = vrot.slane %v4306, %v4321
          %4324 = vbcast.lane.b32.xlu0 %v4322, 256
          %v4325 = vpop.permute.xlu0 %4324
          %s4327 = sor.u32 256, 8
          %4328 = vbcast.lane.b32.xlu0 %v4322, %s4327
          %v4329 = vpop.permute.xlu0 %4328
          %v4330 = vlaneseq
          %v4331 = vshrl.u32 %v4330, 7
          %v4332 = vsub.s32 2, %v4331
          %v4333 = vrot.slane %v4306, %v4332
          %4335 = vbcast.lane.b32.xlu0 %v4333, 256
          %v4336 = vpop.permute.xlu0 %4335
          %s4338 = sor.u32 256, 8
          %4339 = vbcast.lane.b32.xlu0 %v4333, %s4338
          %v4340 = vpop.permute.xlu0 %4339
          %v4341 = vlaneseq
          %v4342 = vshrl.u32 %v4341, 7
          %v4343 = vsub.s32 3, %v4342
          %v4344 = vrot.slane %v4306, %v4343
          %4346 = vbcast.lane.b32.xlu0 %v4344, 256
          %v4347 = vpop.permute.xlu0 %4346
          %s4349 = sor.u32 256, 8
          %4350 = vbcast.lane.b32.xlu0 %v4344, %s4349
          %v4351 = vpop.permute.xlu0 %4350
          %v4352 = vlaneseq
          %v4353 = vshrl.u32 %v4352, 7
          %v4354 = vsub.s32 4, %v4353
          %v4355 = vrot.slane %v4306, %v4354
          %4357 = vbcast.lane.b32.xlu0 %v4355, 256
          %v4358 = vpop.permute.xlu0 %4357
          %s4360 = sor.u32 256, 8
          %4361 = vbcast.lane.b32.xlu0 %v4355, %s4360
          %v4362 = vpop.permute.xlu0 %4361
          %v4363 = vlaneseq
          %v4364 = vshrl.u32 %v4363, 7
          %v4365 = vsub.s32 5, %v4364
          %v4366 = vrot.slane %v4306, %v4365
          %4368 = vbcast.lane.b32.xlu0 %v4366, 256
          %v4369 = vpop.permute.xlu0 %4368
          %s4371 = sor.u32 256, 8
          %4372 = vbcast.lane.b32.xlu0 %v4366, %s4371
          %v4373 = vpop.permute.xlu0 %4372
          %v4374 = vlaneseq
          %v4375 = vshrl.u32 %v4374, 7
          %v4376 = vsub.s32 6, %v4375
          %v4377 = vrot.slane %v4306, %v4376
          %4379 = vbcast.lane.b32.xlu0 %v4377, 256
          %v4380 = vpop.permute.xlu0 %4379
          %s4382 = sor.u32 256, 8
          %4383 = vbcast.lane.b32.xlu0 %v4377, %s4382
          %v4384 = vpop.permute.xlu0 %4383
          %v4385 = vlaneseq
          %v4386 = vshrl.u32 %v4385, 7
          %v4387 = vsub.s32 7, %v4386
          %v4388 = vrot.slane %v4306, %v4387
          %4390 = vbcast.lane.b32.xlu0 %v4388, 256
          %v4391 = vpop.permute.xlu0 %4390
          %s4393 = sor.u32 256, 8
          %4394 = vbcast.lane.b32.xlu0 %v4388, %s4393
          %v4395 = vpop.permute.xlu0 %4394
          %v4412 = vadd.f32 %v4289, %v4314
          %v4413 = vadd.f32 %v4290, %v4318
          %v4414 = vadd.f32 %v4291, %v4325
          %v4415 = vadd.f32 %v4292, %v4329
          %v4416 = vadd.f32 %v4293, %v4336
          %v4417 = vadd.f32 %v4294, %v4340
          %v4418 = vadd.f32 %v4295, %v4347
          %v4419 = vadd.f32 %v4296, %v4351
          %v4420 = vadd.f32 %v4297, %v4358
          %v4421 = vadd.f32 %v4298, %v4362
          %v4422 = vadd.f32 %v4299, %v4369
          %v4423 = vadd.f32 %v4300, %v4373
          %v4424 = vadd.f32 %v4301, %v4380
          %v4425 = vadd.f32 %v4302, %v4384
          %v4426 = vadd.f32 %v4303, %v4391
          %v4427 = vadd.f32 %v4304, %v4395
          %4444 = vset.pattern.permute.xlu0 0
          %4445 = vperm.xlu0 %4444, %v4412
          %v4446 = vpop.permute.xlu0 %4445
          %4447 = vset.pattern.permute.xlu0 0
          %4448 = vperm.xlu0 %4447, %v4413
          %v4449 = vpop.permute.xlu0 %4448
          %4450 = vset.pattern.permute.xlu0 0
          %4451 = vperm.xlu0 %4450, %v4414
          %v4452 = vpop.permute.xlu0 %4451
          %4453 = vset.pattern.permute.xlu0 0
          %4454 = vperm.xlu0 %4453, %v4415
          %v4455 = vpop.permute.xlu0 %4454
          %4456 = vset.pattern.permute.xlu0 0
          %4457 = vperm.xlu0 %4456, %v4416
          %v4458 = vpop.permute.xlu0 %4457
          %4459 = vset.pattern.permute.xlu0 0
          %4460 = vperm.xlu0 %4459, %v4417
          %v4461 = vpop.permute.xlu0 %4460
          %4462 = vset.pattern.permute.xlu0 0
          %4463 = vperm.xlu0 %4462, %v4418
          %v4464 = vpop.permute.xlu0 %4463
          %4465 = vset.pattern.permute.xlu0 0
          %4466 = vperm.xlu0 %4465, %v4419
          %v4467 = vpop.permute.xlu0 %4466
          %4468 = vset.pattern.permute.xlu0 0
          %4469 = vperm.xlu0 %4468, %v4420
          %v4470 = vpop.permute.xlu0 %4469
          %4471 = vset.pattern.permute.xlu0 0
          %4472 = vperm.xlu0 %4471, %v4421
          %v4473 = vpop.permute.xlu0 %4472
          %4474 = vset.pattern.permute.xlu0 0
          %4475 = vperm.xlu0 %4474, %v4422
          %v4476 = vpop.permute.xlu0 %4475
          %4477 = vset.pattern.permute.xlu0 0
          %4478 = vperm.xlu0 %4477, %v4423
          %v4479 = vpop.permute.xlu0 %4478
          %4480 = vset.pattern.permute.xlu0 0
          %4481 = vperm.xlu0 %4480, %v4424
          %v4482 = vpop.permute.xlu0 %4481
          %4483 = vset.pattern.permute.xlu0 0
          %4484 = vperm.xlu0 %4483, %v4425
          %v4485 = vpop.permute.xlu0 %4484
          %4486 = vset.pattern.permute.xlu0 0
          %4487 = vperm.xlu0 %4486, %v4426
          %v4488 = vpop.permute.xlu0 %4487
          %4489 = vset.pattern.permute.xlu0 0
          %4490 = vperm.xlu0 %4489, %v4427
          %v4491 = vpop.permute.xlu0 %4490
          %v4492 = vlaneseq
          %v4493 = vand.u32 %v4492, 127
          %v4494 = vlaneseq
          %v4495 = vshrl.u32 %v4494, 7
          %v4496 = vsub.s32 %v4493, %v4495
          %v4497 = vrot.slane %v4446, %v4496
          %v4498 = vadd.s32 %v4493, 4294967288
          %v4499 = vlaneseq
          %v4500 = vshrl.u32 %v4499, 7
          %v4501 = vsub.s32 %v4498, %v4500
          %v4502 = vrot.slane %v4449, %v4501
          %vm4503 = vcmask 130112
          %v4504 = vsel %vm4503, %v4502, %v4497
          %v4505 = vlaneseq
          %v4506 = vshrl.u32 %v4505, 7
          %v4507 = vsub.s32 %v4493, %v4506
          %v4508 = vrot.slane %v4452, %v4507
          %v4509 = vlaneseq
          %v4510 = vshrl.u32 %v4509, 7
          %v4511 = vsub.s32 %v4498, %v4510
          %v4512 = vrot.slane %v4455, %v4511
          %v4513 = vsel %vm4503, %v4512, %v4508
          %v4514 = vlaneseq
          %v4515 = vshrl.u32 %v4514, 7
          %v4516 = vsub.s32 %v4493, %v4515
          %v4517 = vrot.slane %v4458, %v4516
          %v4518 = vlaneseq
          %v4519 = vshrl.u32 %v4518, 7
          %v4520 = vsub.s32 %v4498, %v4519
          %v4521 = vrot.slane %v4461, %v4520
          %v4522 = vsel %vm4503, %v4521, %v4517
          %v4523 = vlaneseq
          %v4524 = vshrl.u32 %v4523, 7
          %v4525 = vsub.s32 %v4493, %v4524
          %v4526 = vrot.slane %v4464, %v4525
          %v4527 = vlaneseq
          %v4528 = vshrl.u32 %v4527, 7
          %v4529 = vsub.s32 %v4498, %v4528
          %v4530 = vrot.slane %v4467, %v4529
          %v4531 = vsel %vm4503, %v4530, %v4526
          %v4532 = vlaneseq
          %v4533 = vshrl.u32 %v4532, 7
          %v4534 = vsub.s32 %v4493, %v4533
          %v4535 = vrot.slane %v4470, %v4534
          %v4536 = vlaneseq
          %v4537 = vshrl.u32 %v4536, 7
          %v4538 = vsub.s32 %v4498, %v4537
          %v4539 = vrot.slane %v4473, %v4538
          %v4540 = vsel %vm4503, %v4539, %v4535
          %v4541 = vlaneseq
          %v4542 = vshrl.u32 %v4541, 7
          %v4543 = vsub.s32 %v4493, %v4542
          %v4544 = vrot.slane %v4476, %v4543
          %v4545 = vlaneseq
          %v4546 = vshrl.u32 %v4545, 7
          %v4547 = vsub.s32 %v4498, %v4546
          %v4548 = vrot.slane %v4479, %v4547
          %v4549 = vsel %vm4503, %v4548, %v4544
          %v4550 = vlaneseq
          %v4551 = vshrl.u32 %v4550, 7
          %v4552 = vsub.s32 %v4493, %v4551
          %v4553 = vrot.slane %v4482, %v4552
          %v4554 = vlaneseq
          %v4555 = vshrl.u32 %v4554, 7
          %v4556 = vsub.s32 %v4498, %v4555
          %v4557 = vrot.slane %v4485, %v4556
          %v4558 = vsel %vm4503, %v4557, %v4553
          %v4559 = vlaneseq
          %v4560 = vshrl.u32 %v4559, 7
          %v4561 = vsub.s32 %v4493, %v4560
          %v4562 = vrot.slane %v4488, %v4561
          %v4563 = vlaneseq
          %v4564 = vshrl.u32 %v4563, 7
          %v4565 = vsub.s32 %v4498, %v4564
          %v4566 = vrot.slane %v4491, %v4565
          %v4567 = vsel %vm4503, %v4566, %v4562
          %vm4568 = vcmask 1041409
          %v4569 = vsel %vm4568, %v4513, %v4504
          %vm4570 = vcmask 1042434
          %v4571 = vsel %vm4570, %v4522, %v4569
          %vm4572 = vcmask 1043459
          %v4573 = vsel %vm4572, %v4531, %v4571
          %vm4574 = vcmask 1044484
          %v4575 = vsel %vm4574, %v4540, %v4573
          %vm4576 = vcmask 1045509
          %v4577 = vsel %vm4576, %v4549, %v4575
          %vm4578 = vcmask 1046534
          %v4579 = vsel %vm4578, %v4558, %v4577
          %vm4580 = vcmask 1047559
          %v4581 = vsel %vm4580, %v4567, %v4579
          %s4583 = scalar_lea.vmem %s238, %s2899
          %4584 = vst.msk [vmem:[%s4583] sm:$0xff] %vm1280, %v4581
        $region56: #{conv_filter_forward.1} parent=39 // loop_footer
          %s2898 = sadd.s32 1, %s2894
        $region57: #{conv_filter_forward.1} parent=39 // loop_footer_branch
          %2893 = sbr.rel target = $region53
        $region58: #{conv_filter_forward.1} parent=39 // loop_exit
          _
        %p4585 = scmp.lt.s32.totalorder %s17, 1
        %s4586 = scalar_select %p4585, %s17, 1
        %s4587 = smul.addr %s4586, 2
        %s4588 = smul.addr %s4587, 8
        %s4589 = scalar_lea.vmem %s5, %s4588
        // Predicated region
        $region59: #{conv_filter_forward.1} parent=39 // pred_check
          %p4590 = pneg %p145
        $region60: #{conv_filter_forward.1} parent=39 // pred_check_branch
          %4592 = sbr.rel (%p4590) target = $region62
        $region61: #{conv_filter_forward.1} parent=39 // pred_region
          _
        $region62: #{conv_filter_forward.1} parent=39 // pred_fallthru
          _
      $region40: #{conv_filter_forward.1} parent=5 // pred_fallthru
        _
      %p4593 = scmp.le.s32.totalorder 2, %s12
      // Predicated region
      $region63: #{conv_filter_forward.1} parent=5 // pred_check
        %p4594 = pneg %p4593
      $region64: #{conv_filter_forward.1} parent=5 // pred_check_branch
        %4596 = sbr.rel (%p4594) target = $region66
      $region65: #{conv_filter_forward.1} parent=5 // pred_region
        %s4597 = ssub.s32 %s12, 2
        // Predicated region
        $region67: #{conv_filter_forward.1} parent=65 // pred_check
          %p4598 = pneg %p151
        $region68: #{conv_filter_forward.1} parent=65 // pred_check_branch
          %4600 = sbr.rel (%p4598) target = $region70
        $region69: #{conv_filter_forward.1} parent=65 // pred_region
          %p4601 = scmp.lt.s32.totalorder %s18, 1
          %s4602 = scalar_select %p4601, %s18, 1
          %s4603 = smul.addr %s4602, 2
          %s4604 = smul.addr %s4603, 8
          %s4605 = scalar_lea.vmem %s5, %s4604
        $region70: #{conv_filter_forward.1} parent=65 // pred_fallthru
          _
      $region66: #{conv_filter_forward.1} parent=5 // pred_fallthru
        _
    $region6: #{conv_filter_forward.1} parent=1 // loop_footer
      %s16 = sadd.s32 1, %s12
    $region7: #{conv_filter_forward.1} parent=1 // loop_footer_branch
      %11 = sbr.rel target = $region3
    $region8: #{conv_filter_forward.1} parent=1 // loop_exit
      _
    %4606 = vsyncpa [#allocation6], 1
    %s4607 = scalar_lea.sflag [#allocation6], 1
    %4608 = vsyncpa %s4607, 1

</llo_original>
